<compile_context>
chip_gen: v6e
topology: v6e:2x2x1
jax: 0.10.0
libtpu: 0.0.40
codegen_flags: <defaults>
</compile_context>

<pallas_src>
import functools

import jax
import jax.numpy as jnp
from jax.experimental import pallas as pl
from jax.experimental.pallas import tpu as pltpu

# ----------------------------------------------------------------------------
# Model configuration (small but consistent with the module)
# ----------------------------------------------------------------------------
PATCH = (4, 4, 4)
EMBED_DIM = 32
HIDDEN_DIM = 32
DEPTHS = [2, 2]
IN_CHANS = 1
NUM_CLASSES = 2
FC_HIDDEN = 512

LANE = 128                       # lane-dense channel padding
_OUT_ROWS = 8                    # sublane-aligned output slab per batch elem
_VMEM_LIMIT = 32 * 1024 * 1024   # explicit, safe on v5e/v6e/v7x


# ----------------------------------------------------------------------------
# Small helpers
# ----------------------------------------------------------------------------
def _gelu_tanh(x):
    # tanh-approx GELU: the heavy op goes to the EUP (jnp.tanh), few VPU ops.
    # TODO(synk): ~1e-3 abs deviation from the exact erf-based nn.GELU().
    c = 0.7978845608028654  # sqrt(2/pi)
    return 0.5 * x * (1.0 + jnp.tanh(c * (x + 0.044715 * x * x * x)))


def _pad2(a, rows, cols):
    r, c = a.shape
    return jnp.pad(a, ((0, rows - r), (0, cols - c)))


def _bf16(a):
    return a.astype(jnp.bfloat16)


# ----------------------------------------------------------------------------
# The fused kernel: one batch element per grid step, everything in VMEM.
# ----------------------------------------------------------------------------
def _fused_forward_kernel(xp_ref, wp_ref, bp_ref,
                          s0B_ref, s0A_ref, s0C_ref,
                          wd_ref, bd_ref,
                          s1B_ref, s1A_ref, s1C_ref,
                          wn_ref, bn_ref,
                          w1_ref, b1_ref, w2_ref, b2_ref,
                          o_ref, *, depth0, depth1, ntok1):
    f32 = jnp.float32

    def ssm_block(x, B_w, A_w, C_w):
        # h = GELU(x @ B); h = GELU(h @ A); out = h @ C   (per-token)
        h = _gelu_tanh(jnp.dot(x.astype(jnp.bfloat16), B_w,
                               preferred_element_type=f32))
        h = _gelu_tanh(jnp.dot(h.astype(jnp.bfloat16), A_w,
                               preferred_element_type=f32))
        return jnp.dot(h.astype(jnp.bfloat16), C_w,
                       preferred_element_type=f32)

    # 1) patch-embed Conv3d (stride == kernel) == matmul on im2col'd tokens
    x = jnp.dot(xp_ref[0], wp_ref[...],
                preferred_element_type=f32) + bp_ref[...]

    # 2) stage-0 SSM stack (statically unrolled)
    for i in range(depth0):
        x = ssm_block(x, s0B_ref[i], s0A_ref[i], s0C_ref[i])

    # 3) 2x2x2 / stride-2 downsample conv.  Tokens were pre-ordered
    #    kernel-position-major in the wrapper, so kernel position p owns the
    #    contiguous (sublane-aligned) row slab [p*ntok1, (p+1)*ntok1) and the
    #    conv is 8 accumulated matmuls -- no gather / relayout in-kernel.
    y = jnp.zeros((ntok1, LANE), f32)
    for p in range(8):
        slab = x[p * ntok1:(p + 1) * ntok1, :].astype(jnp.bfloat16)
        y = y + jnp.dot(slab, wd_ref[p], preferred_element_type=f32)
    x = y + bd_ref[...]

    # 4) stage-1 SSM stack
    for i in range(depth1):
        x = ssm_block(x, s1B_ref[i], s1A_ref[i], s1C_ref[i])

    # 5) 1x1x1 bottleneck conv (per-token matmul)
    x = jnp.dot(x.astype(jnp.bfloat16), wn_ref[...],
                preferred_element_type=f32) + bn_ref[...]

    # 6) per-batch spatial mean: exact-f32 sublane reduction (no pool matmul)
    pooled = jnp.mean(x, axis=0, keepdims=True)               # (1, LANE)

    # 7) classifier head: fc1 + ReLU + fc2
    z = jnp.dot(pooled.astype(jnp.bfloat16), w1_ref[...],
                preferred_element_type=f32) + b1_ref[...]
    z = jnp.maximum(z, 0.0)
    z = jnp.dot(z.astype(jnp.bfloat16), w2_ref[...],
                preferred_element_type=f32) + b2_ref[...]

    # Lane-dense (8, 128) store; only row 0 / first NUM_CLASSES lanes are real.
    o_ref[0] = jnp.broadcast_to(z, (_OUT_ROWS, LANE)).astype(o_ref.dtype)


def fused_forward(xp, pk, *, depth0, depth1, ntok0, ntok1):
    """xp: (B, ntok0, K0) bf16 im2col'd + pre-permuted patch tokens."""
    B, _, K0 = xp.shape
    kernel = functools.partial(_fused_forward_kernel, depth0=depth0,
                               depth1=depth1, ntok1=ntok1)
    w2d = lambda b: (0, 0)          # resident weights: constant block index
    w3d = lambda b: (0, 0, 0)
    # NOTE: all weight specs have constant index maps; at this size default
    # double-buffering (<2 MB total) is harmless.  When scaling the model,
    # add pipeline_mode=pl.Buffered(1) to these specs to single-buffer them.
    in_specs = [
        pl.BlockSpec((1, ntok0, K0), lambda b: (b, 0, 0)),   # xp (per batch)
        pl.BlockSpec((K0, LANE), w2d),                       # patch-embed W
        pl.BlockSpec((1, LANE), w2d),                        # patch-embed b
        pl.BlockSpec((depth0, LANE, LANE), w3d),             # stage-0 B
        pl.BlockSpec((depth0, LANE, LANE), w3d),             # stage-0 A
        pl.BlockSpec((depth0, LANE, LANE), w3d),             # stage-0 C
        pl.BlockSpec((8, LANE, LANE), w3d),                  # downsample W[p]
        pl.BlockSpec((1, LANE), w2d),                        # downsample b
        pl.BlockSpec((depth1, LANE, LANE), w3d),             # stage-1 B
        pl.BlockSpec((depth1, LANE, LANE), w3d),             # stage-1 A
        pl.BlockSpec((depth1, LANE, LANE), w3d),             # stage-1 C
        pl.BlockSpec((LANE, LANE), w2d),                     # bottleneck W
        pl.BlockSpec((1, LANE), w2d),                        # bottleneck b
        pl.BlockSpec((LANE, FC_HIDDEN), w2d),                # fc1 W
        pl.BlockSpec((1, FC_HIDDEN), w2d),                   # fc1 b
        pl.BlockSpec((FC_HIDDEN, LANE), w2d),                # fc2 W
        pl.BlockSpec((1, LANE), w2d),                        # fc2 b
    ]
    return pl.pallas_call(
        kernel,
        out_shape=jax.ShapeDtypeStruct((B, _OUT_ROWS, LANE), jnp.float32),
        grid=(B,),
        in_specs=in_specs,
        out_specs=pl.BlockSpec((1, _OUT_ROWS, LANE), lambda b: (b, 0, 0)),
        compiler_params=pltpu.CompilerParams(
            dimension_semantics=("parallel",),   # 2 TCs on v7x; no-op on 1-TC
            vmem_limit_bytes=_VMEM_LIMIT),
    )(xp, pk["wp"], pk["bp"], pk["s0_B"], pk["s0_A"], pk["s0_C"],
      pk["wd"], pk["bd"], pk["s1_B"], pk["s1_A"], pk["s1_C"],
      pk["wn"], pk["bn"], pk["w1"], pk["b1"], pk["w2"], pk["b2"])


# ----------------------------------------------------------------------------
# Parameters: synthetic init in torch-like shapes, then pack (pad + bf16)
# ----------------------------------------------------------------------------
def init_params(key):
    keys = iter(jax.random.split(key, 64))

    def nrm(shape, scale):
        return (scale * jax.random.normal(next(keys), shape)).astype(jnp.float32)

    p = {}
    p["patch_embed_w"] = nrm((EMBED_DIM, IN_CHANS) + PATCH, 0.1)
    p["patch_embed_b"] = nrm((EMBED_DIM,), 0.1)
    dim = EMBED_DIM
    layers, downs = [], []
    for i_layer in range(len(DEPTHS)):
        blocks = []
        for _ in range(DEPTHS[i_layer]):
            blocks.append({"A": nrm((HIDDEN_DIM, HIDDEN_DIM), 0.1),
                           "B": nrm((dim, HIDDEN_DIM), 0.1),
                           "C": nrm((HIDDEN_DIM, dim), 0.1)})
        layers.append(blocks)
        if i_layer < len(DEPTHS) - 1:
            downs.append({"w": nrm((dim * 2, dim, 2, 2, 2), 0.1),
                          "b": nrm((dim * 2,), 0.1)})
            dim *= 2
    p["layers"] = layers
    p["downsamples"] = downs
    p["bottleneck_w"] = nrm((dim, dim, 1, 1, 1), 0.1)
    p["bottleneck_b"] = nrm((dim,), 0.1)
    p["fc1_w"] = nrm((dim, FC_HIDDEN), 0.05)
    p["fc1_b"] = nrm((FC_HIDDEN,), 0.05)
    p["fc2_w"] = nrm((FC_HIDDEN, NUM_CLASSES), 0.05)
    p["fc2_b"] = nrm((NUM_CLASSES,), 0.05)
    return p


def pack_params(p):
    """Reshape convs to matmuls, zero-pad channel dims to 128 lanes and
    pre-cast matmul operands to bf16 (biases stay f32).

    Zero padding is safe because GELU(0)=0, ReLU(0)=0 and all padded weight
    rows/cols and biases are zero, so padded lanes stay exactly zero."""
    K0 = IN_CHANS * PATCH[0] * PATCH[1] * PATCH[2]
    dim0, dim1 = EMBED_DIM, EMBED_DIM * 2
    pk = {}

    # patch embed (Cout, Cin, kD, kH, kW) -> (K0, 128); K kept unpadded at 64
    wp = p["patch_embed_w"].reshape(dim0, K0).T
    pk["wp"] = _bf16(_pad2(wp, K0, LANE))
    pk["bp"] = _pad2(p["patch_embed_b"][None, :], 1, LANE)

    def stack(blocks, name):
        return _bf16(jnp.stack([_pad2(b[name], LANE, LANE) for b in blocks]))

    pk["s0_B"] = stack(p["layers"][0], "B")
    pk["s0_A"] = stack(p["layers"][0], "A")
    pk["s0_C"] = stack(p["layers"][0], "C")
    pk["s1_B"] = stack(p["layers"][1], "B")
    pk["s1_A"] = stack(p["layers"][1], "A")
    pk["s1_C"] = stack(p["layers"][1], "C")

    # downsample (Cout, Cin, 2,2,2) -> per kernel position p: (Cin, Cout),
    # stacked (8, 128, 128) so the kernel accumulates 8 row-slab matmuls.
    wd = p["downsamples"][0]["w"].reshape(dim1, dim0, 8)     # (Cout, Cin, p)
    wd = jnp.transpose(wd, (2, 1, 0))                        # (p, Cin, Cout)
    pk["wd"] = _bf16(jnp.pad(wd, ((0, 0), (0, LANE - dim0), (0, LANE - dim1))))
    pk["bd"] = _pad2(p["downsamples"][0]["b"][None, :], 1, LANE)

    # 1x1x1 bottleneck
    wn = p["bottleneck_w"].reshape(dim1, dim1).T
    pk["wn"] = _bf16(_pad2(wn, LANE, LANE))
    pk["bn"] = _pad2(p["bottleneck_b"][None, :], 1, LANE)

    # classifier head
    pk["w1"] = _bf16(_pad2(p["fc1_w"], LANE, FC_HIDDEN))
    pk["b1"] = p["fc1_b"][None, :]
    pk["w2"] = _bf16(_pad2(p["fc2_w"], FC_HIDDEN, LANE))
    pk["b2"] = _pad2(p["fc2_b"][None, :], 1, LANE)
    return pk


# ----------------------------------------------------------------------------
# Forward pass (mirrors VisionMamba3D.forward)
# ----------------------------------------------------------------------------
def vision_mamba3d_forward(packed, x_ncdhw):
    B, Cin, D, H, W = x_ncdhw.shape
    kD, kH, kW = PATCH
    assert D % kD == 0 and H % kH == 0 and W % kW == 0
    nD, nH, nW = D // kD, H // kH, W // kW
    assert nD % 2 == 0 and nH % 2 == 0 and nW % 2 == 0
    oD, oH, oW = nD // 2, nH // 2, nW // 2
    ntok0 = nD * nH * nW
    ntok1 = oD * oH * oW

    # Patch im2col emitting tokens directly in the order the in-kernel 2x2x2
    # downsample consumes them (mirrors the torch permute(0,4,2,3,1) followed
    # by permute(0,4,1,2,3) before the downsample conv):
    #   token r = p * ntok1 + t
    #     p = kw*4 + kd*2 + kh      (downsample kernel position, conv-axis
    #                                order = original (W, D, H) patch axes)
    #     t = (w2*oD + d2)*oH + h2  (stage-1 token order after the permutes)
    # Columns stay in (Cin, kD, kH, kW) order, matching the conv weight.
    xp = x_ncdhw.reshape(B, Cin, oD, 2, kD, oH, 2, kH, oW, 2, kW)
    #      axes:          0   1   2  3   4   5  6   7   8  9  10
    xp = jnp.transpose(xp, (0, 9, 3, 6, 8, 2, 5, 1, 4, 7, 10))
    xp = xp.reshape(B, ntok0, Cin * kD * kH * kW)
    xp = _bf16(xp)          # K kept at 64 -> no padded HBM traffic (review)

    out = fused_forward(xp, packed, depth0=DEPTHS[0], depth1=DEPTHS[1],
                        ntok0=ntok0, ntok1=ntok1)
    return out[:, 0, :NUM_CLASSES]
    # TODO(synk): the torch module's print()/NaN-check debug statements are
    # intentionally omitted (no effect on computed values).


# ----------------------------------------------------------------------------
# Demo
# ----------------------------------------------------------------------------
if __name__ == "__main__":
    key = jax.random.PRNGKey(0)
    pkey, xkey = jax.random.split(key)
    raw_params = init_params(pkey)
    packed = pack_params(raw_params)

    # B=2, in_chans=1, 16^3 volume: patch 4 -> 64 tokens/batch, downsample -> 8.
    x = jax.random.normal(xkey, (2, IN_CHANS, 16, 16, 16), dtype=jnp.float32)

    fwd = jax.jit(vision_mamba3d_forward)
    out = jax.block_until_ready(fwd(packed, x))
    assert out.shape == (2, NUM_CLASSES)
    assert bool(jnp.all(jnp.isfinite(out)))
    print("KERNEL_OK")
</pallas_src>

<mosaic_0001>
module attributes {stable_mosaic.version = 11 : i64} {
  func.func @_fused_forward_kernel(%arg0: i32, %arg1: memref<1x64x64xbf16, #tpu.memory_space<vmem>>, %arg2: memref<64x128xbf16, #tpu.memory_space<vmem>>, %arg3: memref<1x128xf32, #tpu.memory_space<vmem>>, %arg4: memref<2x128x128xbf16, #tpu.memory_space<vmem>>, %arg5: memref<2x128x128xbf16, #tpu.memory_space<vmem>>, %arg6: memref<2x128x128xbf16, #tpu.memory_space<vmem>>, %arg7: memref<8x128x128xbf16, #tpu.memory_space<vmem>>, %arg8: memref<1x128xf32, #tpu.memory_space<vmem>>, %arg9: memref<2x128x128xbf16, #tpu.memory_space<vmem>>, %arg10: memref<2x128x128xbf16, #tpu.memory_space<vmem>>, %arg11: memref<2x128x128xbf16, #tpu.memory_space<vmem>>, %arg12: memref<128x128xbf16, #tpu.memory_space<vmem>>, %arg13: memref<1x128xf32, #tpu.memory_space<vmem>>, %arg14: memref<128x512xbf16, #tpu.memory_space<vmem>>, %arg15: memref<1x512xf32, #tpu.memory_space<vmem>>, %arg16: memref<512x128xbf16, #tpu.memory_space<vmem>>, %arg17: memref<1x128xf32, #tpu.memory_space<vmem>>, %arg18: memref<1x8x128xf32, #tpu.memory_space<vmem>>) attributes {dimension_semantics = [#tpu.dimension_semantics<parallel>], iteration_bounds = array<i64: 2>, scalar_prefetch = 0 : i64, scratch_operands = 0 : i64, tpu.core_type = #tpu.core_type<tc>, window_params = [{transform_indices = @transform_0, window_bounds = array<i64: 1, 64, 64>}, {pipeline_mode = #tpu.pipeline_mode<synchronous>, transform_indices = @transform_1, window_bounds = array<i64: 64, 128>}, {pipeline_mode = #tpu.pipeline_mode<synchronous>, transform_indices = @transform_2, window_bounds = array<i64: 1, 128>}, {pipeline_mode = #tpu.pipeline_mode<synchronous>, transform_indices = @transform_3, window_bounds = array<i64: 2, 128, 128>}, {pipeline_mode = #tpu.pipeline_mode<synchronous>, transform_indices = @transform_4, window_bounds = array<i64: 2, 128, 128>}, {pipeline_mode = #tpu.pipeline_mode<synchronous>, transform_indices = @transform_5, window_bounds = array<i64: 2, 128, 128>}, {pipeline_mode = #tpu.pipeline_mode<synchronous>, transform_indices = @transform_6, window_bounds = array<i64: 8, 128, 128>}, {pipeline_mode = #tpu.pipeline_mode<synchronous>, transform_indices = @transform_7, window_bounds = array<i64: 1, 128>}, {pipeline_mode = #tpu.pipeline_mode<synchronous>, transform_indices = @transform_8, window_bounds = array<i64: 2, 128, 128>}, {pipeline_mode = #tpu.pipeline_mode<synchronous>, transform_indices = @transform_9, window_bounds = array<i64: 2, 128, 128>}, {pipeline_mode = #tpu.pipeline_mode<synchronous>, transform_indices = @transform_10, window_bounds = array<i64: 2, 128, 128>}, {pipeline_mode = #tpu.pipeline_mode<synchronous>, transform_indices = @transform_11, window_bounds = array<i64: 128, 128>}, {pipeline_mode = #tpu.pipeline_mode<synchronous>, transform_indices = @transform_12, window_bounds = array<i64: 1, 128>}, {pipeline_mode = #tpu.pipeline_mode<synchronous>, transform_indices = @transform_13, window_bounds = array<i64: 128, 512>}, {pipeline_mode = #tpu.pipeline_mode<synchronous>, transform_indices = @transform_14, window_bounds = array<i64: 1, 512>}, {pipeline_mode = #tpu.pipeline_mode<synchronous>, transform_indices = @transform_15, window_bounds = array<i64: 512, 128>}, {pipeline_mode = #tpu.pipeline_mode<synchronous>, transform_indices = @transform_16, window_bounds = array<i64: 1, 128>}, {transform_indices = @transform_17, window_bounds = array<i64: 1, 8, 128>}]} {
    %c0 = arith.constant 0 : index
    %c0_0 = arith.constant 0 : index
    %c0_1 = arith.constant 0 : index
    %0 = vector.load %arg1[%c0, %c0_0, %c0_1] : memref<1x64x64xbf16, #tpu.memory_space<vmem>>, vector<1x64x64xbf16>
    %1 = vector.shape_cast %0 : vector<1x64x64xbf16> to vector<64x64xbf16>
    %c0_2 = arith.constant 0 : index
    %c0_3 = arith.constant 0 : index
    %2 = vector.load %arg2[%c0_2, %c0_3] : memref<64x128xbf16, #tpu.memory_space<vmem>>, vector<64x128xbf16>
    %cst = arith.constant dense<0.000000e+00> : vector<64x128xf32>
    %3 = tpu.matmul %1, %2, %cst {dimension_numbers = #tpu.dot_dimension_numbers<[1], [0], [0], [1], [0, 0, 1, 1], [], []>} : vector<64x64xbf16>, vector<64x128xbf16>, vector<64x128xf32> -> vector<64x128xf32>
    %c0_4 = arith.constant 0 : index
    %c0_5 = arith.constant 0 : index
    %4 = vector.load %arg3[%c0_4, %c0_5] : memref<1x128xf32, #tpu.memory_space<vmem>>, vector<1x128xf32>
    %5 = vector.broadcast %4 : vector<1x128xf32> to vector<64x128xf32>
    %6 = arith.addf %3, %5 : vector<64x128xf32>
    %c0_6 = arith.constant 0 : index
    %c0_7 = arith.constant 0 : index
    %c0_8 = arith.constant 0 : index
    %7 = vector.load %arg4[%c0_6, %c0_7, %c0_8] : memref<2x128x128xbf16, #tpu.memory_space<vmem>>, vector<1x128x128xbf16>
    %8 = vector.shape_cast %7 : vector<1x128x128xbf16> to vector<128x128xbf16>
    %c0_9 = arith.constant 0 : index
    %c0_10 = arith.constant 0 : index
    %c0_11 = arith.constant 0 : index
    %9 = vector.load %arg5[%c0_9, %c0_10, %c0_11] : memref<2x128x128xbf16, #tpu.memory_space<vmem>>, vector<1x128x128xbf16>
    %10 = vector.shape_cast %9 : vector<1x128x128xbf16> to vector<128x128xbf16>
    %c0_12 = arith.constant 0 : index
    %c0_13 = arith.constant 0 : index
    %c0_14 = arith.constant 0 : index
    %11 = vector.load %arg6[%c0_12, %c0_13, %c0_14] : memref<2x128x128xbf16, #tpu.memory_space<vmem>>, vector<1x128x128xbf16>
    %12 = vector.shape_cast %11 : vector<1x128x128xbf16> to vector<128x128xbf16>
    %13 = arith.truncf %6 : vector<64x128xf32> to vector<64x128xbf16>
    %cst_15 = arith.constant dense<0.000000e+00> : vector<64x128xf32>
    %14 = tpu.matmul %13, %8, %cst_15 {dimension_numbers = #tpu.dot_dimension_numbers<[1], [0], [0], [1], [0, 0, 1, 1], [], []>} : vector<64x128xbf16>, vector<128x128xbf16>, vector<64x128xf32> -> vector<64x128xf32>
    %cst_16 = arith.constant 5.000000e-01 : f32
    %15 = vector.broadcast %cst_16 : f32 to vector<64x128xf32>
    %16 = arith.mulf %15, %14 : vector<64x128xf32>
    %cst_17 = arith.constant 4.471500e-02 : f32
    %17 = vector.broadcast %cst_17 : f32 to vector<64x128xf32>
    %18 = arith.mulf %17, %14 : vector<64x128xf32>
    %19 = arith.mulf %18, %14 : vector<64x128xf32>
    %20 = arith.mulf %19, %14 : vector<64x128xf32>
    %21 = arith.addf %14, %20 : vector<64x128xf32>
    %cst_18 = arith.constant 0.797884583 : f32
    %22 = vector.broadcast %cst_18 : f32 to vector<64x128xf32>
    %23 = arith.mulf %22, %21 : vector<64x128xf32>
    %24 = math.tanh %23 : vector<64x128xf32>
    %cst_19 = arith.constant 1.000000e+00 : f32
    %25 = vector.broadcast %cst_19 : f32 to vector<64x128xf32>
    %26 = arith.addf %25, %24 : vector<64x128xf32>
    %27 = arith.mulf %16, %26 : vector<64x128xf32>
    %28 = arith.truncf %27 : vector<64x128xf32> to vector<64x128xbf16>
    %cst_20 = arith.constant dense<0.000000e+00> : vector<64x128xf32>
    %29 = tpu.matmul %28, %10, %cst_20 {dimension_numbers = #tpu.dot_dimension_numbers<[1], [0], [0], [1], [0, 0, 1, 1], [], []>} : vector<64x128xbf16>, vector<128x128xbf16>, vector<64x128xf32> -> vector<64x128xf32>
    %cst_21 = arith.constant 5.000000e-01 : f32
    %30 = vector.broadcast %cst_21 : f32 to vector<64x128xf32>
    %31 = arith.mulf %30, %29 : vector<64x128xf32>
    %cst_22 = arith.constant 4.471500e-02 : f32
    %32 = vector.broadcast %cst_22 : f32 to vector<64x128xf32>
    %33 = arith.mulf %32, %29 : vector<64x128xf32>
    %34 = arith.mulf %33, %29 : vector<64x128xf32>
    %35 = arith.mulf %34, %29 : vector<64x128xf32>
    %36 = arith.addf %29, %35 : vector<64x128xf32>
    %cst_23 = arith.constant 0.797884583 : f32
    %37 = vector.broadcast %cst_23 : f32 to vector<64x128xf32>
    %38 = arith.mulf %37, %36 : vector<64x128xf32>
    %39 = math.tanh %38 : vector<64x128xf32>
    %cst_24 = arith.constant 1.000000e+00 : f32
    %40 = vector.broadcast %cst_24 : f32 to vector<64x128xf32>
    %41 = arith.addf %40, %39 : vector<64x128xf32>
    %42 = arith.mulf %31, %41 : vector<64x128xf32>
    %43 = arith.truncf %42 : vector<64x128xf32> to vector<64x128xbf16>
    %cst_25 = arith.constant dense<0.000000e+00> : vector<64x128xf32>
    %44 = tpu.matmul %43, %12, %cst_25 {dimension_numbers = #tpu.dot_dimension_numbers<[1], [0], [0], [1], [0, 0, 1, 1], [], []>} : vector<64x128xbf16>, vector<128x128xbf16>, vector<64x128xf32> -> vector<64x128xf32>
    %c1 = arith.constant 1 : index
    %c0_26 = arith.constant 0 : index
    %c0_27 = arith.constant 0 : index
    %45 = vector.load %arg4[%c1, %c0_26, %c0_27] : memref<2x128x128xbf16, #tpu.memory_space<vmem>>, vector<1x128x128xbf16>
    %46 = vector.shape_cast %45 : vector<1x128x128xbf16> to vector<128x128xbf16>
    %c1_28 = arith.constant 1 : index
    %c0_29 = arith.constant 0 : index
    %c0_30 = arith.constant 0 : index
    %47 = vector.load %arg5[%c1_28, %c0_29, %c0_30] : memref<2x128x128xbf16, #tpu.memory_space<vmem>>, vector<1x128x128xbf16>
    %48 = vector.shape_cast %47 : vector<1x128x128xbf16> to vector<128x128xbf16>
    %c1_31 = arith.constant 1 : index
    %c0_32 = arith.constant 0 : index
    %c0_33 = arith.constant 0 : index
    %49 = vector.load %arg6[%c1_31, %c0_32, %c0_33] : memref<2x128x128xbf16, #tpu.memory_space<vmem>>, vector<1x128x128xbf16>
    %50 = vector.shape_cast %49 : vector<1x128x128xbf16> to vector<128x128xbf16>
    %51 = arith.truncf %44 : vector<64x128xf32> to vector<64x128xbf16>
    %cst_34 = arith.constant dense<0.000000e+00> : vector<64x128xf32>
    %52 = tpu.matmul %51, %46, %cst_34 {dimension_numbers = #tpu.dot_dimension_numbers<[1], [0], [0], [1], [0, 0, 1, 1], [], []>} : vector<64x128xbf16>, vector<128x128xbf16>, vector<64x128xf32> -> vector<64x128xf32>
    %cst_35 = arith.constant 5.000000e-01 : f32
    %53 = vector.broadcast %cst_35 : f32 to vector<64x128xf32>
    %54 = arith.mulf %53, %52 : vector<64x128xf32>
    %cst_36 = arith.constant 4.471500e-02 : f32
    %55 = vector.broadcast %cst_36 : f32 to vector<64x128xf32>
    %56 = arith.mulf %55, %52 : vector<64x128xf32>
    %57 = arith.mulf %56, %52 : vector<64x128xf32>
    %58 = arith.mulf %57, %52 : vector<64x128xf32>
    %59 = arith.addf %52, %58 : vector<64x128xf32>
    %cst_37 = arith.constant 0.797884583 : f32
    %60 = vector.broadcast %cst_37 : f32 to vector<64x128xf32>
    %61 = arith.mulf %60, %59 : vector<64x128xf32>
    %62 = math.tanh %61 : vector<64x128xf32>
    %cst_38 = arith.constant 1.000000e+00 : f32
    %63 = vector.broadcast %cst_38 : f32 to vector<64x128xf32>
    %64 = arith.addf %63, %62 : vector<64x128xf32>
    %65 = arith.mulf %54, %64 : vector<64x128xf32>
    %66 = arith.truncf %65 : vector<64x128xf32> to vector<64x128xbf16>
    %cst_39 = arith.constant dense<0.000000e+00> : vector<64x128xf32>
    %67 = tpu.matmul %66, %48, %cst_39 {dimension_numbers = #tpu.dot_dimension_numbers<[1], [0], [0], [1], [0, 0, 1, 1], [], []>} : vector<64x128xbf16>, vector<128x128xbf16>, vector<64x128xf32> -> vector<64x128xf32>
    %cst_40 = arith.constant 5.000000e-01 : f32
    %68 = vector.broadcast %cst_40 : f32 to vector<64x128xf32>
    %69 = arith.mulf %68, %67 : vector<64x128xf32>
    %cst_41 = arith.constant 4.471500e-02 : f32
    %70 = vector.broadcast %cst_41 : f32 to vector<64x128xf32>
    %71 = arith.mulf %70, %67 : vector<64x128xf32>
    %72 = arith.mulf %71, %67 : vector<64x128xf32>
    %73 = arith.mulf %72, %67 : vector<64x128xf32>
    %74 = arith.addf %67, %73 : vector<64x128xf32>
    %cst_42 = arith.constant 0.797884583 : f32
    %75 = vector.broadcast %cst_42 : f32 to vector<64x128xf32>
    %76 = arith.mulf %75, %74 : vector<64x128xf32>
    %77 = math.tanh %76 : vector<64x128xf32>
    %cst_43 = arith.constant 1.000000e+00 : f32
    %78 = vector.broadcast %cst_43 : f32 to vector<64x128xf32>
    %79 = arith.addf %78, %77 : vector<64x128xf32>
    %80 = arith.mulf %69, %79 : vector<64x128xf32>
    %81 = arith.truncf %80 : vector<64x128xf32> to vector<64x128xbf16>
    %cst_44 = arith.constant dense<0.000000e+00> : vector<64x128xf32>
    %82 = tpu.matmul %81, %50, %cst_44 {dimension_numbers = #tpu.dot_dimension_numbers<[1], [0], [0], [1], [0, 0, 1, 1], [], []>} : vector<64x128xbf16>, vector<128x128xbf16>, vector<64x128xf32> -> vector<64x128xf32>
    %cst_45 = arith.constant 0.000000e+00 : f32
    %83 = vector.broadcast %cst_45 : f32 to vector<8x128xf32>
    %84 = vector.extract_strided_slice %82 {offsets = [0, 0], sizes = [8, 128], strides = [1, 1]} : vector<64x128xf32> to vector<8x128xf32>
    %85 = arith.truncf %84 : vector<8x128xf32> to vector<8x128xbf16>
    %c0_46 = arith.constant 0 : index
    %c0_47 = arith.constant 0 : index
    %c0_48 = arith.constant 0 : index
    %86 = vector.load %arg7[%c0_46, %c0_47, %c0_48] : memref<8x128x128xbf16, #tpu.memory_space<vmem>>, vector<1x128x128xbf16>
    %87 = vector.shape_cast %86 : vector<1x128x128xbf16> to vector<128x128xbf16>
    %cst_49 = arith.constant dense<0.000000e+00> : vector<8x128xf32>
    %88 = tpu.matmul %85, %87, %cst_49 {dimension_numbers = #tpu.dot_dimension_numbers<[1], [0], [0], [1], [0, 0, 1, 1], [], []>} : vector<8x128xbf16>, vector<128x128xbf16>, vector<8x128xf32> -> vector<8x128xf32>
    %89 = arith.addf %83, %88 : vector<8x128xf32>
    %90 = vector.extract_strided_slice %82 {offsets = [8, 0], sizes = [8, 128], strides = [1, 1]} : vector<64x128xf32> to vector<8x128xf32>
    %91 = arith.truncf %90 : vector<8x128xf32> to vector<8x128xbf16>
    %c1_50 = arith.constant 1 : index
    %c0_51 = arith.constant 0 : index
    %c0_52 = arith.constant 0 : index
    %92 = vector.load %arg7[%c1_50, %c0_51, %c0_52] : memref<8x128x128xbf16, #tpu.memory_space<vmem>>, vector<1x128x128xbf16>
    %93 = vector.shape_cast %92 : vector<1x128x128xbf16> to vector<128x128xbf16>
    %cst_53 = arith.constant dense<0.000000e+00> : vector<8x128xf32>
    %94 = tpu.matmul %91, %93, %cst_53 {dimension_numbers = #tpu.dot_dimension_numbers<[1], [0], [0], [1], [0, 0, 1, 1], [], []>} : vector<8x128xbf16>, vector<128x128xbf16>, vector<8x128xf32> -> vector<8x128xf32>
    %95 = arith.addf %89, %94 : vector<8x128xf32>
    %96 = vector.extract_strided_slice %82 {offsets = [16, 0], sizes = [8, 128], strides = [1, 1]} : vector<64x128xf32> to vector<8x128xf32>
    %97 = arith.truncf %96 : vector<8x128xf32> to vector<8x128xbf16>
    %c2 = arith.constant 2 : index
    %c0_54 = arith.constant 0 : index
    %c0_55 = arith.constant 0 : index
    %98 = vector.load %arg7[%c2, %c0_54, %c0_55] : memref<8x128x128xbf16, #tpu.memory_space<vmem>>, vector<1x128x128xbf16>
    %99 = vector.shape_cast %98 : vector<1x128x128xbf16> to vector<128x128xbf16>
    %cst_56 = arith.constant dense<0.000000e+00> : vector<8x128xf32>
    %100 = tpu.matmul %97, %99, %cst_56 {dimension_numbers = #tpu.dot_dimension_numbers<[1], [0], [0], [1], [0, 0, 1, 1], [], []>} : vector<8x128xbf16>, vector<128x128xbf16>, vector<8x128xf32> -> vector<8x128xf32>
    %101 = arith.addf %95, %100 : vector<8x128xf32>
    %102 = vector.extract_strided_slice %82 {offsets = [24, 0], sizes = [8, 128], strides = [1, 1]} : vector<64x128xf32> to vector<8x128xf32>
    %103 = arith.truncf %102 : vector<8x128xf32> to vector<8x128xbf16>
    %c3 = arith.constant 3 : index
    %c0_57 = arith.constant 0 : index
    %c0_58 = arith.constant 0 : index
    %104 = vector.load %arg7[%c3, %c0_57, %c0_58] : memref<8x128x128xbf16, #tpu.memory_space<vmem>>, vector<1x128x128xbf16>
    %105 = vector.shape_cast %104 : vector<1x128x128xbf16> to vector<128x128xbf16>
    %cst_59 = arith.constant dense<0.000000e+00> : vector<8x128xf32>
    %106 = tpu.matmul %103, %105, %cst_59 {dimension_numbers = #tpu.dot_dimension_numbers<[1], [0], [0], [1], [0, 0, 1, 1], [], []>} : vector<8x128xbf16>, vector<128x128xbf16>, vector<8x128xf32> -> vector<8x128xf32>
    %107 = arith.addf %101, %106 : vector<8x128xf32>
    %108 = vector.extract_strided_slice %82 {offsets = [32, 0], sizes = [8, 128], strides = [1, 1]} : vector<64x128xf32> to vector<8x128xf32>
    %109 = arith.truncf %108 : vector<8x128xf32> to vector<8x128xbf16>
    %c4 = arith.constant 4 : index
    %c0_60 = arith.constant 0 : index
    %c0_61 = arith.constant 0 : index
    %110 = vector.load %arg7[%c4, %c0_60, %c0_61] : memref<8x128x128xbf16, #tpu.memory_space<vmem>>, vector<1x128x128xbf16>
    %111 = vector.shape_cast %110 : vector<1x128x128xbf16> to vector<128x128xbf16>
    %cst_62 = arith.constant dense<0.000000e+00> : vector<8x128xf32>
    %112 = tpu.matmul %109, %111, %cst_62 {dimension_numbers = #tpu.dot_dimension_numbers<[1], [0], [0], [1], [0, 0, 1, 1], [], []>} : vector<8x128xbf16>, vector<128x128xbf16>, vector<8x128xf32> -> vector<8x128xf32>
    %113 = arith.addf %107, %112 : vector<8x128xf32>
    %114 = vector.extract_strided_slice %82 {offsets = [40, 0], sizes = [8, 128], strides = [1, 1]} : vector<64x128xf32> to vector<8x128xf32>
    %115 = arith.truncf %114 : vector<8x128xf32> to vector<8x128xbf16>
    %c5 = arith.constant 5 : index
    %c0_63 = arith.constant 0 : index
    %c0_64 = arith.constant 0 : index
    %116 = vector.load %arg7[%c5, %c0_63, %c0_64] : memref<8x128x128xbf16, #tpu.memory_space<vmem>>, vector<1x128x128xbf16>
    %117 = vector.shape_cast %116 : vector<1x128x128xbf16> to vector<128x128xbf16>
    %cst_65 = arith.constant dense<0.000000e+00> : vector<8x128xf32>
    %118 = tpu.matmul %115, %117, %cst_65 {dimension_numbers = #tpu.dot_dimension_numbers<[1], [0], [0], [1], [0, 0, 1, 1], [], []>} : vector<8x128xbf16>, vector<128x128xbf16>, vector<8x128xf32> -> vector<8x128xf32>
    %119 = arith.addf %113, %118 : vector<8x128xf32>
    %120 = vector.extract_strided_slice %82 {offsets = [48, 0], sizes = [8, 128], strides = [1, 1]} : vector<64x128xf32> to vector<8x128xf32>
    %121 = arith.truncf %120 : vector<8x128xf32> to vector<8x128xbf16>
    %c6 = arith.constant 6 : index
    %c0_66 = arith.constant 0 : index
    %c0_67 = arith.constant 0 : index
    %122 = vector.load %arg7[%c6, %c0_66, %c0_67] : memref<8x128x128xbf16, #tpu.memory_space<vmem>>, vector<1x128x128xbf16>
    %123 = vector.shape_cast %122 : vector<1x128x128xbf16> to vector<128x128xbf16>
    %cst_68 = arith.constant dense<0.000000e+00> : vector<8x128xf32>
    %124 = tpu.matmul %121, %123, %cst_68 {dimension_numbers = #tpu.dot_dimension_numbers<[1], [0], [0], [1], [0, 0, 1, 1], [], []>} : vector<8x128xbf16>, vector<128x128xbf16>, vector<8x128xf32> -> vector<8x128xf32>
    %125 = arith.addf %119, %124 : vector<8x128xf32>
    %126 = vector.extract_strided_slice %82 {offsets = [56, 0], sizes = [8, 128], strides = [1, 1]} : vector<64x128xf32> to vector<8x128xf32>
    %127 = arith.truncf %126 : vector<8x128xf32> to vector<8x128xbf16>
    %c7 = arith.constant 7 : index
    %c0_69 = arith.constant 0 : index
    %c0_70 = arith.constant 0 : index
    %128 = vector.load %arg7[%c7, %c0_69, %c0_70] : memref<8x128x128xbf16, #tpu.memory_space<vmem>>, vector<1x128x128xbf16>
    %129 = vector.shape_cast %128 : vector<1x128x128xbf16> to vector<128x128xbf16>
    %cst_71 = arith.constant dense<0.000000e+00> : vector<8x128xf32>
    %130 = tpu.matmul %127, %129, %cst_71 {dimension_numbers = #tpu.dot_dimension_numbers<[1], [0], [0], [1], [0, 0, 1, 1], [], []>} : vector<8x128xbf16>, vector<128x128xbf16>, vector<8x128xf32> -> vector<8x128xf32>
    %131 = arith.addf %125, %130 : vector<8x128xf32>
    %c0_72 = arith.constant 0 : index
    %c0_73 = arith.constant 0 : index
    %132 = vector.load %arg8[%c0_72, %c0_73] : memref<1x128xf32, #tpu.memory_space<vmem>>, vector<1x128xf32>
    %133 = vector.broadcast %132 : vector<1x128xf32> to vector<8x128xf32>
    %134 = arith.addf %131, %133 : vector<8x128xf32>
    %c0_74 = arith.constant 0 : index
    %c0_75 = arith.constant 0 : index
    %c0_76 = arith.constant 0 : index
    %135 = vector.load %arg9[%c0_74, %c0_75, %c0_76] : memref<2x128x128xbf16, #tpu.memory_space<vmem>>, vector<1x128x128xbf16>
    %136 = vector.shape_cast %135 : vector<1x128x128xbf16> to vector<128x128xbf16>
    %c0_77 = arith.constant 0 : index
    %c0_78 = arith.constant 0 : index
    %c0_79 = arith.constant 0 : index
    %137 = vector.load %arg10[%c0_77, %c0_78, %c0_79] : memref<2x128x128xbf16, #tpu.memory_space<vmem>>, vector<1x128x128xbf16>
    %138 = vector.shape_cast %137 : vector<1x128x128xbf16> to vector<128x128xbf16>
    %c0_80 = arith.constant 0 : index
    %c0_81 = arith.constant 0 : index
    %c0_82 = arith.constant 0 : index
    %139 = vector.load %arg11[%c0_80, %c0_81, %c0_82] : memref<2x128x128xbf16, #tpu.memory_space<vmem>>, vector<1x128x128xbf16>
    %140 = vector.shape_cast %139 : vector<1x128x128xbf16> to vector<128x128xbf16>
    %141 = arith.truncf %134 : vector<8x128xf32> to vector<8x128xbf16>
    %cst_83 = arith.constant dense<0.000000e+00> : vector<8x128xf32>
    %142 = tpu.matmul %141, %136, %cst_83 {dimension_numbers = #tpu.dot_dimension_numbers<[1], [0], [0], [1], [0, 0, 1, 1], [], []>} : vector<8x128xbf16>, vector<128x128xbf16>, vector<8x128xf32> -> vector<8x128xf32>
    %cst_84 = arith.constant 5.000000e-01 : f32
    %143 = vector.broadcast %cst_84 : f32 to vector<8x128xf32>
    %144 = arith.mulf %143, %142 : vector<8x128xf32>
    %cst_85 = arith.constant 4.471500e-02 : f32
    %145 = vector.broadcast %cst_85 : f32 to vector<8x128xf32>
    %146 = arith.mulf %145, %142 : vector<8x128xf32>
    %147 = arith.mulf %146, %142 : vector<8x128xf32>
    %148 = arith.mulf %147, %142 : vector<8x128xf32>
    %149 = arith.addf %142, %148 : vector<8x128xf32>
    %cst_86 = arith.constant 0.797884583 : f32
    %150 = vector.broadcast %cst_86 : f32 to vector<8x128xf32>
    %151 = arith.mulf %150, %149 : vector<8x128xf32>
    %152 = math.tanh %151 : vector<8x128xf32>
    %cst_87 = arith.constant 1.000000e+00 : f32
    %153 = vector.broadcast %cst_87 : f32 to vector<8x128xf32>
    %154 = arith.addf %153, %152 : vector<8x128xf32>
    %155 = arith.mulf %144, %154 : vector<8x128xf32>
    %156 = arith.truncf %155 : vector<8x128xf32> to vector<8x128xbf16>
    %cst_88 = arith.constant dense<0.000000e+00> : vector<8x128xf32>
    %157 = tpu.matmul %156, %138, %cst_88 {dimension_numbers = #tpu.dot_dimension_numbers<[1], [0], [0], [1], [0, 0, 1, 1], [], []>} : vector<8x128xbf16>, vector<128x128xbf16>, vector<8x128xf32> -> vector<8x128xf32>
    %cst_89 = arith.constant 5.000000e-01 : f32
    %158 = vector.broadcast %cst_89 : f32 to vector<8x128xf32>
    %159 = arith.mulf %158, %157 : vector<8x128xf32>
    %cst_90 = arith.constant 4.471500e-02 : f32
    %160 = vector.broadcast %cst_90 : f32 to vector<8x128xf32>
    %161 = arith.mulf %160, %157 : vector<8x128xf32>
    %162 = arith.mulf %161, %157 : vector<8x128xf32>
    %163 = arith.mulf %162, %157 : vector<8x128xf32>
    %164 = arith.addf %157, %163 : vector<8x128xf32>
    %cst_91 = arith.constant 0.797884583 : f32
    %165 = vector.broadcast %cst_91 : f32 to vector<8x128xf32>
    %166 = arith.mulf %165, %164 : vector<8x128xf32>
    %167 = math.tanh %166 : vector<8x128xf32>
    %cst_92 = arith.constant 1.000000e+00 : f32
    %168 = vector.broadcast %cst_92 : f32 to vector<8x128xf32>
    %169 = arith.addf %168, %167 : vector<8x128xf32>
    %170 = arith.mulf %159, %169 : vector<8x128xf32>
    %171 = arith.truncf %170 : vector<8x128xf32> to vector<8x128xbf16>
    %cst_93 = arith.constant dense<0.000000e+00> : vector<8x128xf32>
    %172 = tpu.matmul %171, %140, %cst_93 {dimension_numbers = #tpu.dot_dimension_numbers<[1], [0], [0], [1], [0, 0, 1, 1], [], []>} : vector<8x128xbf16>, vector<128x128xbf16>, vector<8x128xf32> -> vector<8x128xf32>
    %c1_94 = arith.constant 1 : index
    %c0_95 = arith.constant 0 : index
    %c0_96 = arith.constant 0 : index
    %173 = vector.load %arg9[%c1_94, %c0_95, %c0_96] : memref<2x128x128xbf16, #tpu.memory_space<vmem>>, vector<1x128x128xbf16>
    %174 = vector.shape_cast %173 : vector<1x128x128xbf16> to vector<128x128xbf16>
    %c1_97 = arith.constant 1 : index
    %c0_98 = arith.constant 0 : index
    %c0_99 = arith.constant 0 : index
    %175 = vector.load %arg10[%c1_97, %c0_98, %c0_99] : memref<2x128x128xbf16, #tpu.memory_space<vmem>>, vector<1x128x128xbf16>
    %176 = vector.shape_cast %175 : vector<1x128x128xbf16> to vector<128x128xbf16>
    %c1_100 = arith.constant 1 : index
    %c0_101 = arith.constant 0 : index
    %c0_102 = arith.constant 0 : index
    %177 = vector.load %arg11[%c1_100, %c0_101, %c0_102] : memref<2x128x128xbf16, #tpu.memory_space<vmem>>, vector<1x128x128xbf16>
    %178 = vector.shape_cast %177 : vector<1x128x128xbf16> to vector<128x128xbf16>
    %179 = arith.truncf %172 : vector<8x128xf32> to vector<8x128xbf16>
    %cst_103 = arith.constant dense<0.000000e+00> : vector<8x128xf32>
    %180 = tpu.matmul %179, %174, %cst_103 {dimension_numbers = #tpu.dot_dimension_numbers<[1], [0], [0], [1], [0, 0, 1, 1], [], []>} : vector<8x128xbf16>, vector<128x128xbf16>, vector<8x128xf32> -> vector<8x128xf32>
    %cst_104 = arith.constant 5.000000e-01 : f32
    %181 = vector.broadcast %cst_104 : f32 to vector<8x128xf32>
    %182 = arith.mulf %181, %180 : vector<8x128xf32>
    %cst_105 = arith.constant 4.471500e-02 : f32
    %183 = vector.broadcast %cst_105 : f32 to vector<8x128xf32>
    %184 = arith.mulf %183, %180 : vector<8x128xf32>
    %185 = arith.mulf %184, %180 : vector<8x128xf32>
    %186 = arith.mulf %185, %180 : vector<8x128xf32>
    %187 = arith.addf %180, %186 : vector<8x128xf32>
    %cst_106 = arith.constant 0.797884583 : f32
    %188 = vector.broadcast %cst_106 : f32 to vector<8x128xf32>
    %189 = arith.mulf %188, %187 : vector<8x128xf32>
    %190 = math.tanh %189 : vector<8x128xf32>
    %cst_107 = arith.constant 1.000000e+00 : f32
    %191 = vector.broadcast %cst_107 : f32 to vector<8x128xf32>
    %192 = arith.addf %191, %190 : vector<8x128xf32>
    %193 = arith.mulf %182, %192 : vector<8x128xf32>
    %194 = arith.truncf %193 : vector<8x128xf32> to vector<8x128xbf16>
    %cst_108 = arith.constant dense<0.000000e+00> : vector<8x128xf32>
    %195 = tpu.matmul %194, %176, %cst_108 {dimension_numbers = #tpu.dot_dimension_numbers<[1], [0], [0], [1], [0, 0, 1, 1], [], []>} : vector<8x128xbf16>, vector<128x128xbf16>, vector<8x128xf32> -> vector<8x128xf32>
    %cst_109 = arith.constant 5.000000e-01 : f32
    %196 = vector.broadcast %cst_109 : f32 to vector<8x128xf32>
    %197 = arith.mulf %196, %195 : vector<8x128xf32>
    %cst_110 = arith.constant 4.471500e-02 : f32
    %198 = vector.broadcast %cst_110 : f32 to vector<8x128xf32>
    %199 = arith.mulf %198, %195 : vector<8x128xf32>
    %200 = arith.mulf %199, %195 : vector<8x128xf32>
    %201 = arith.mulf %200, %195 : vector<8x128xf32>
    %202 = arith.addf %195, %201 : vector<8x128xf32>
    %cst_111 = arith.constant 0.797884583 : f32
    %203 = vector.broadcast %cst_111 : f32 to vector<8x128xf32>
    %204 = arith.mulf %203, %202 : vector<8x128xf32>
    %205 = math.tanh %204 : vector<8x128xf32>
    %cst_112 = arith.constant 1.000000e+00 : f32
    %206 = vector.broadcast %cst_112 : f32 to vector<8x128xf32>
    %207 = arith.addf %206, %205 : vector<8x128xf32>
    %208 = arith.mulf %197, %207 : vector<8x128xf32>
    %209 = arith.truncf %208 : vector<8x128xf32> to vector<8x128xbf16>
    %cst_113 = arith.constant dense<0.000000e+00> : vector<8x128xf32>
    %210 = tpu.matmul %209, %178, %cst_113 {dimension_numbers = #tpu.dot_dimension_numbers<[1], [0], [0], [1], [0, 0, 1, 1], [], []>} : vector<8x128xbf16>, vector<128x128xbf16>, vector<8x128xf32> -> vector<8x128xf32>
    %211 = arith.truncf %210 : vector<8x128xf32> to vector<8x128xbf16>
    %c0_114 = arith.constant 0 : index
    %c0_115 = arith.constant 0 : index
    %212 = vector.load %arg12[%c0_114, %c0_115] : memref<128x128xbf16, #tpu.memory_space<vmem>>, vector<128x128xbf16>
    %cst_116 = arith.constant dense<0.000000e+00> : vector<8x128xf32>
    %213 = tpu.matmul %211, %212, %cst_116 {dimension_numbers = #tpu.dot_dimension_numbers<[1], [0], [0], [1], [0, 0, 1, 1], [], []>} : vector<8x128xbf16>, vector<128x128xbf16>, vector<8x128xf32> -> vector<8x128xf32>
    %c0_117 = arith.constant 0 : index
    %c0_118 = arith.constant 0 : index
    %214 = vector.load %arg13[%c0_117, %c0_118] : memref<1x128xf32, #tpu.memory_space<vmem>>, vector<1x128xf32>
    %215 = vector.broadcast %214 : vector<1x128xf32> to vector<8x128xf32>
    %216 = arith.addf %213, %215 : vector<8x128xf32>
    %cst_119 = arith.constant dense<0.000000e+00> : vector<128xf32>
    %217 = vector.multi_reduction <add>, %216, %cst_119 [0] : vector<8x128xf32> to vector<128xf32>
    %218 = vector.shape_cast %217 : vector<128xf32> to vector<1x128xf32>
    %cst_120 = arith.constant 8.000000e+00 : f32
    %219 = vector.broadcast %cst_120 : f32 to vector<1x128xf32>
    %220 = arith.divf %218, %219 : vector<1x128xf32>
    %221 = arith.truncf %220 : vector<1x128xf32> to vector<1x128xbf16>
    %c0_121 = arith.constant 0 : index
    %c0_122 = arith.constant 0 : index
    %222 = vector.load %arg14[%c0_121, %c0_122] : memref<128x512xbf16, #tpu.memory_space<vmem>>, vector<128x512xbf16>
    %cst_123 = arith.constant dense<0.000000e+00> : vector<1x512xf32>
    %223 = tpu.matmul %221, %222, %cst_123 {dimension_numbers = #tpu.dot_dimension_numbers<[1], [0], [0], [1], [0, 0, 1, 1], [], []>} : vector<1x128xbf16>, vector<128x512xbf16>, vector<1x512xf32> -> vector<1x512xf32>
    %c0_124 = arith.constant 0 : index
    %c0_125 = arith.constant 0 : index
    %224 = vector.load %arg15[%c0_124, %c0_125] : memref<1x512xf32, #tpu.memory_space<vmem>>, vector<1x512xf32>
    %225 = arith.addf %223, %224 : vector<1x512xf32>
    %cst_126 = arith.constant 0.000000e+00 : f32
    %226 = vector.broadcast %cst_126 : f32 to vector<1x512xf32>
    %227 = arith.maximumf %225, %226 : vector<1x512xf32>
    %228 = arith.truncf %227 : vector<1x512xf32> to vector<1x512xbf16>
    %c0_127 = arith.constant 0 : index
    %c0_128 = arith.constant 0 : index
    %229 = vector.load %arg16[%c0_127, %c0_128] : memref<512x128xbf16, #tpu.memory_space<vmem>>, vector<512x128xbf16>
    %cst_129 = arith.constant dense<0.000000e+00> : vector<1x128xf32>
    %230 = tpu.matmul %228, %229, %cst_129 {dimension_numbers = #tpu.dot_dimension_numbers<[1], [0], [0], [1], [0, 0, 1, 1], [], []>} : vector<1x512xbf16>, vector<512x128xbf16>, vector<1x128xf32> -> vector<1x128xf32>
    %c0_130 = arith.constant 0 : index
    %c0_131 = arith.constant 0 : index
    %231 = vector.load %arg17[%c0_130, %c0_131] : memref<1x128xf32, #tpu.memory_space<vmem>>, vector<1x128xf32>
    %232 = arith.addf %230, %231 : vector<1x128xf32>
    %233 = vector.shape_cast %232 : vector<1x128xf32> to vector<1x128xf32>
    %234 = vector.broadcast %233 : vector<1x128xf32> to vector<8x128xf32>
    %c0_132 = arith.constant 0 : index
    %c0_133 = arith.constant 0 : index
    %c0_134 = arith.constant 0 : index
    %235 = vector.load %arg18[%c0_132, %c0_133, %c0_134] : memref<1x8x128xf32, #tpu.memory_space<vmem>>, vector<1x8x128xf32>
    %236 = vector.shape_cast %235 : vector<1x8x128xf32> to vector<8x128xf32>
    %237 = vector.shape_cast %234 : vector<8x128xf32> to vector<1x8x128xf32>
    tpu.vector_store %arg18[%c0_132, %c0_133, %c0_134], %237 {strides = array<i32>} : memref<1x8x128xf32, #tpu.memory_space<vmem>>, vector<1x8x128xf32>,
    return
  }
  func.func @transform_0(%arg0: i32) -> (i32, i32, i32) {
    %c0_i32 = arith.constant 0 : i32
    %c0_i32_0 = arith.constant 0 : i32
    %c0_i32_1 = arith.constant 0 : i32
    return %arg0, %c0_i32, %c0_i32_0 : i32, i32, i32
  }
  func.func @transform_1(%arg0: i32) -> (i32, i32) {
    %c0_i32 = arith.constant 0 : i32
    %c0_i32_0 = arith.constant 0 : i32
    %c0_i32_1 = arith.constant 0 : i32
    return %c0_i32, %c0_i32_0 : i32, i32
  }
  func.func @transform_2(%arg0: i32) -> (i32, i32) {
    %c0_i32 = arith.constant 0 : i32
    %c0_i32_0 = arith.constant 0 : i32
    %c0_i32_1 = arith.constant 0 : i32
    return %c0_i32, %c0_i32_0 : i32, i32
  }
  func.func @transform_3(%arg0: i32) -> (i32, i32, i32) {
    %c0_i32 = arith.constant 0 : i32
    %c0_i32_0 = arith.constant 0 : i32
    %c0_i32_1 = arith.constant 0 : i32
    %c0_i32_2 = arith.constant 0 : i32
    return %c0_i32, %c0_i32_0, %c0_i32_1 : i32, i32, i32
  }
  func.func @transform_4(%arg0: i32) -> (i32, i32, i32) {
    %c0_i32 = arith.constant 0 : i32
    %c0_i32_0 = arith.constant 0 : i32
    %c0_i32_1 = arith.constant 0 : i32
    %c0_i32_2 = arith.constant 0 : i32
    return %c0_i32, %c0_i32_0, %c0_i32_1 : i32, i32, i32
  }
  func.func @transform_5(%arg0: i32) -> (i32, i32, i32) {
    %c0_i32 = arith.constant 0 : i32
    %c0_i32_0 = arith.constant 0 : i32
    %c0_i32_1 = arith.constant 0 : i32
    %c0_i32_2 = arith.constant 0 : i32
    return %c0_i32, %c0_i32_0, %c0_i32_1 : i32, i32, i32
  }
  func.func @transform_6(%arg0: i32) -> (i32, i32, i32) {
    %c0_i32 = arith.constant 0 : i32
    %c0_i32_0 = arith.constant 0 : i32
    %c0_i32_1 = arith.constant 0 : i32
    %c0_i32_2 = arith.constant 0 : i32
    return %c0_i32, %c0_i32_0, %c0_i32_1 : i32, i32, i32
  }
  func.func @transform_7(%arg0: i32) -> (i32, i32) {
    %c0_i32 = arith.constant 0 : i32
    %c0_i32_0 = arith.constant 0 : i32
    %c0_i32_1 = arith.constant 0 : i32
    return %c0_i32, %c0_i32_0 : i32, i32
  }
  func.func @transform_8(%arg0: i32) -> (i32, i32, i32) {
    %c0_i32 = arith.constant 0 : i32
    %c0_i32_0 = arith.constant 0 : i32
    %c0_i32_1 = arith.constant 0 : i32
    %c0_i32_2 = arith.constant 0 : i32
    return %c0_i32, %c0_i32_0, %c0_i32_1 : i32, i32, i32
  }
  func.func @transform_9(%arg0: i32) -> (i32, i32, i32) {
    %c0_i32 = arith.constant 0 : i32
    %c0_i32_0 = arith.constant 0 : i32
    %c0_i32_1 = arith.constant 0 : i32
    %c0_i32_2 = arith.constant 0 : i32
    return %c0_i32, %c0_i32_0, %c0_i32_1 : i32, i32, i32
  }
  func.func @transform_10(%arg0: i32) -> (i32, i32, i32) {
    %c0_i32 = arith.constant 0 : i32
    %c0_i32_0 = arith.constant 0 : i32
    %c0_i32_1 = arith.constant 0 : i32
    %c0_i32_2 = arith.constant 0 : i32
    return %c0_i32, %c0_i32_0, %c0_i32_1 : i32, i32, i32
  }
  func.func @transform_11(%arg0: i32) -> (i32, i32) {
    %c0_i32 = arith.constant 0 : i32
    %c0_i32_0 = arith.constant 0 : i32
    %c0_i32_1 = arith.constant 0 : i32
    return %c0_i32, %c0_i32_0 : i32, i32
  }
  func.func @transform_12(%arg0: i32) -> (i32, i32) {
    %c0_i32 = arith.constant 0 : i32
    %c0_i32_0 = arith.constant 0 : i32
    %c0_i32_1 = arith.constant 0 : i32
    return %c0_i32, %c0_i32_0 : i32, i32
  }
  func.func @transform_13(%arg0: i32) -> (i32, i32) {
    %c0_i32 = arith.constant 0 : i32
    %c0_i32_0 = arith.constant 0 : i32
    %c0_i32_1 = arith.constant 0 : i32
    return %c0_i32, %c0_i32_0 : i32, i32
  }
  func.func @transform_14(%arg0: i32) -> (i32, i32) {
    %c0_i32 = arith.constant 0 : i32
    %c0_i32_0 = arith.constant 0 : i32
    %c0_i32_1 = arith.constant 0 : i32
    return %c0_i32, %c0_i32_0 : i32, i32
  }
  func.func @transform_15(%arg0: i32) -> (i32, i32) {
    %c0_i32 = arith.constant 0 : i32
    %c0_i32_0 = arith.constant 0 : i32
    %c0_i32_1 = arith.constant 0 : i32
    return %c0_i32, %c0_i32_0 : i32, i32
  }
  func.func @transform_16(%arg0: i32) -> (i32, i32) {
    %c0_i32 = arith.constant 0 : i32
    %c0_i32_0 = arith.constant 0 : i32
    %c0_i32_1 = arith.constant 0 : i32
    return %c0_i32, %c0_i32_0 : i32, i32
  }
  func.func @transform_17(%arg0: i32) -> (i32, i32, i32) {
    %c0_i32 = arith.constant 0 : i32
    %c0_i32_0 = arith.constant 0 : i32
    %c0_i32_1 = arith.constant 0 : i32
    return %arg0, %c0_i32, %c0_i32_0 : i32, i32, i32
  }
}

</mosaic_0001>

<llo_original>
// kernel: vision_mamba3d_forward.1
$region0: #{vision_mamba3d_forward.1}
  #allocation0 [shape = 'u32[]', space=smem, size = 0x4, offset = 0x4, fixed_abs, tag = 'smem constant byte address 0x4 - core index']
  #allocation1 [shape = 'u32[144,128]{1,0:T(1,128)}', space=vmem, size = 0x12000, scoped, tag = 'internal scratch']
  %s0 = inlined_call_operand.vmem [shape: bf16[2,64,64], index: 0, kind: input, shape index: {}]
  %s1 = inlined_call_operand.vmem [shape: bf16[64,128], index: 1, kind: input, shape index: {}]
  %s2 = inlined_call_operand.vmem [shape: f32[1,128], index: 2, kind: input, shape index: {}]
  %s3 = inlined_call_operand.vmem [shape: bf16[2,128,128], index: 3, kind: input, shape index: {}]
  %s4 = inlined_call_operand.vmem [shape: bf16[2,128,128], index: 4, kind: input, shape index: {}]
  %s5 = inlined_call_operand.vmem [shape: bf16[2,128,128], index: 5, kind: input, shape index: {}]
  %s6 = inlined_call_operand.vmem [shape: bf16[8,128,128], index: 6, kind: input, shape index: {}]
  %s7 = inlined_call_operand.vmem [shape: f32[1,128], index: 7, kind: input, shape index: {}]
  %s8 = inlined_call_operand.vmem [shape: bf16[2,128,128], index: 8, kind: input, shape index: {}]
  %s9 = inlined_call_operand.vmem [shape: bf16[2,128,128], index: 9, kind: input, shape index: {}]
  %s10 = inlined_call_operand.vmem [shape: bf16[2,128,128], index: 10, kind: input, shape index: {}]
  %s11 = inlined_call_operand.vmem [shape: bf16[128,128], index: 11, kind: input, shape index: {}]
  %s12 = inlined_call_operand.vmem [shape: f32[1,128], index: 12, kind: input, shape index: {}]
  %s13 = inlined_call_operand.vmem [shape: bf16[128,512], index: 13, kind: input, shape index: {}]
  %s14 = inlined_call_operand.vmem [shape: f32[1,512], index: 14, kind: input, shape index: {}]
  %s15 = inlined_call_operand.vmem [shape: bf16[512,128], index: 15, kind: input, shape index: {}]
  %s16 = inlined_call_operand.vmem [shape: f32[1,128], index: 16, kind: input, shape index: {}]
  %s17 = inlined_call_operand.vmem [shape: f32[2,8,128], index: 17, kind: output, shape index: {}]
  %s18 = sld [smem:[#allocation0]]
  $region101: #{vision_mamba3d_forward.1} parent=0
    _
  %s20 = ssub.s32 1, %s18
  %s21 = scalar_select 0, %s20, %s18
  loop: start=0, step=1, limit=4
  $region2: #{vision_mamba3d_forward.1} parent=0 // loop_pre_header
    _
  $region3: #{vision_mamba3d_forward.1} parent=0 // loop_header
    %s23 = sphi 0, %s27
    %p24 = scmp.ge.s32.totalorder %s23, 4
    %s33 = sphi 0, %s35
    %s36 = sphi 0, %s33
    %s37 = sphi 0, %s36
    %s53 = sphi 0, %s37
    %s57 = sphi 0, %s57
    %s59 = sphi 0, %s57
    %s60 = sphi 0, %s59
    %s74 = sphi 0, %s60
    %s78 = sphi 0, %s78
    %s80 = sphi 0, %s78
    %s81 = sphi 0, %s80
    %s95 = sphi 0, %s81
    %s99 = sphi 0, %s99
    %s101 = sphi 0, %s99
    %s102 = sphi 0, %s101
    %s116 = sphi 0, %s102
    %s120 = sphi 0, %s120
    %s122 = sphi 0, %s120
    %s123 = sphi 0, %s122
    %s137 = sphi 0, %s123
    %s141 = sphi 0, %s141
    %s143 = sphi 0, %s141
    %s144 = sphi 0, %s143
    %s158 = sphi 0, %s144
    %s162 = sphi 0, %s162
    %s164 = sphi 0, %s162
    %s165 = sphi 0, %s164
    %s179 = sphi 0, %s165
    %s183 = sphi 0, %s183
    %s185 = sphi 0, %s183
    %s186 = sphi 0, %s185
    %s200 = sphi 0, %s186
    %s204 = sphi 0, %s204
    %s206 = sphi 0, %s204
    %s207 = sphi 0, %s206
    %s221 = sphi 0, %s207
    %s225 = sphi 0, %s225
    %s227 = sphi 0, %s225
    %s228 = sphi 0, %s227
    %s242 = sphi 0, %s228
    %s246 = sphi 0, %s246
    %s248 = sphi 0, %s246
    %s249 = sphi 0, %s248
    %s263 = sphi 0, %s249
    %s267 = sphi 0, %s267
    %s269 = sphi 0, %s267
    %s270 = sphi 0, %s269
    %s284 = sphi 0, %s270
    %s288 = sphi 0, %s288
    %s290 = sphi 0, %s288
    %s291 = sphi 0, %s290
    %s305 = sphi 0, %s291
    %s309 = sphi 0, %s309
    %s311 = sphi 0, %s309
    %s312 = sphi 0, %s311
    %s326 = sphi 0, %s312
    %s330 = sphi 0, %s330
    %s332 = sphi 0, %s330
    %s333 = sphi 0, %s332
    %s347 = sphi 0, %s333
    %s351 = sphi 0, %s351
    %s353 = sphi 0, %s351
    %s354 = sphi 0, %s353
    %s368 = sphi 0, %s354
    %s372 = sphi 0, %s372
    %s374 = sphi 0, %s372
    %s375 = sphi 0, %s374
    %s389 = sphi 0, %s375
    %s395 = sphi 0, %s397
    %s398 = sphi 0, %s395
    %s399 = sphi 0, %s398
    %s415 = sphi 0, %s399
  $region4: #{vision_mamba3d_forward.1} parent=0 // loop_header_branch
    %26 = sbr.rel (%p24) target = $region8
  $region5: #{vision_mamba3d_forward.1} parent=0 // loop_body
    %s28 = ssub.s32 %s23, 1
    %s29 = ssub.s32 %s23, 2
    %s30 = sadd.s32 %s23, 1
    %s31 = ssub.s32 %s23, %s30
    %p32 = scmp.eq.s32.totalorder %s31, 0
    %s34 = sadd.s32 %s33, 1
    %s35 = scalar_select %p32, %s33, %s34
    %p38 = pneg %p32
    %p39 = scmp.eq.s32.totalorder %s23, 1
    %p40 = por %p38, %p39
    %p41 = scmp.ne.s32.totalorder %s33, %s36
    %p42 = scmp.eq.s32.totalorder %s23, 0
    %p43 = por %p41, %p42
    %p44 = scmp.ne.s32.totalorder %s33, %s36
    %p45 = scmp.eq.s32.totalorder %s28, 1
    %p46 = por %p44, %p45
    %p47 = scmp.ne.s32.totalorder %s36, %s37
    %p48 = scmp.eq.s32.totalorder %s28, 0
    %p49 = por %p47, %p48
    %p50 = scmp.ne.s32.totalorder %s36, %s37
    %p51 = scmp.eq.s32.totalorder %s29, 1
    %p52 = por %p50, %p51
    %p54 = scmp.ne.s32.totalorder %s37, %s53
    %p55 = scmp.eq.s32.totalorder %s29, 0
    %p56 = por %p54, %p55
    %s58 = sadd.s32 %s57, 1
    %p61 = scmp.eq.s32.totalorder %s23, 1
    %p62 = scmp.ne.s32.totalorder %s57, %s59
    %p63 = scmp.eq.s32.totalorder %s23, 0
    %p64 = por %p62, %p63
    %p65 = scmp.ne.s32.totalorder %s57, %s59
    %p66 = scmp.eq.s32.totalorder %s28, 1
    %p67 = por %p65, %p66
    %p68 = scmp.ne.s32.totalorder %s59, %s60
    %p69 = scmp.eq.s32.totalorder %s28, 0
    %p70 = por %p68, %p69
    %p71 = scmp.ne.s32.totalorder %s59, %s60
    %p72 = scmp.eq.s32.totalorder %s29, 1
    %p73 = por %p71, %p72
    %p75 = scmp.ne.s32.totalorder %s60, %s74
    %p76 = scmp.eq.s32.totalorder %s29, 0
    %p77 = por %p75, %p76
    %s79 = sadd.s32 %s78, 1
    %p82 = scmp.eq.s32.totalorder %s23, 1
    %p83 = scmp.ne.s32.totalorder %s78, %s80
    %p84 = scmp.eq.s32.totalorder %s23, 0
    %p85 = por %p83, %p84
    %p86 = scmp.ne.s32.totalorder %s78, %s80
    %p87 = scmp.eq.s32.totalorder %s28, 1
    %p88 = por %p86, %p87
    %p89 = scmp.ne.s32.totalorder %s80, %s81
    %p90 = scmp.eq.s32.totalorder %s28, 0
    %p91 = por %p89, %p90
    %p92 = scmp.ne.s32.totalorder %s80, %s81
    %p93 = scmp.eq.s32.totalorder %s29, 1
    %p94 = por %p92, %p93
    %p96 = scmp.ne.s32.totalorder %s81, %s95
    %p97 = scmp.eq.s32.totalorder %s29, 0
    %p98 = por %p96, %p97
    %s100 = sadd.s32 %s99, 1
    %p103 = scmp.eq.s32.totalorder %s23, 1
    %p104 = scmp.ne.s32.totalorder %s99, %s101
    %p105 = scmp.eq.s32.totalorder %s23, 0
    %p106 = por %p104, %p105
    %p107 = scmp.ne.s32.totalorder %s99, %s101
    %p108 = scmp.eq.s32.totalorder %s28, 1
    %p109 = por %p107, %p108
    %p110 = scmp.ne.s32.totalorder %s101, %s102
    %p111 = scmp.eq.s32.totalorder %s28, 0
    %p112 = por %p110, %p111
    %p113 = scmp.ne.s32.totalorder %s101, %s102
    %p114 = scmp.eq.s32.totalorder %s29, 1
    %p115 = por %p113, %p114
    %p117 = scmp.ne.s32.totalorder %s102, %s116
    %p118 = scmp.eq.s32.totalorder %s29, 0
    %p119 = por %p117, %p118
    %s121 = sadd.s32 %s120, 1
    %p124 = scmp.eq.s32.totalorder %s23, 1
    %p125 = scmp.ne.s32.totalorder %s120, %s122
    %p126 = scmp.eq.s32.totalorder %s23, 0
    %p127 = por %p125, %p126
    %p128 = scmp.ne.s32.totalorder %s120, %s122
    %p129 = scmp.eq.s32.totalorder %s28, 1
    %p130 = por %p128, %p129
    %p131 = scmp.ne.s32.totalorder %s122, %s123
    %p132 = scmp.eq.s32.totalorder %s28, 0
    %p133 = por %p131, %p132
    %p134 = scmp.ne.s32.totalorder %s122, %s123
    %p135 = scmp.eq.s32.totalorder %s29, 1
    %p136 = por %p134, %p135
    %p138 = scmp.ne.s32.totalorder %s123, %s137
    %p139 = scmp.eq.s32.totalorder %s29, 0
    %p140 = por %p138, %p139
    %s142 = sadd.s32 %s141, 1
    %p145 = scmp.eq.s32.totalorder %s23, 1
    %p146 = scmp.ne.s32.totalorder %s141, %s143
    %p147 = scmp.eq.s32.totalorder %s23, 0
    %p148 = por %p146, %p147
    %p149 = scmp.ne.s32.totalorder %s141, %s143
    %p150 = scmp.eq.s32.totalorder %s28, 1
    %p151 = por %p149, %p150
    %p152 = scmp.ne.s32.totalorder %s143, %s144
    %p153 = scmp.eq.s32.totalorder %s28, 0
    %p154 = por %p152, %p153
    %p155 = scmp.ne.s32.totalorder %s143, %s144
    %p156 = scmp.eq.s32.totalorder %s29, 1
    %p157 = por %p155, %p156
    %p159 = scmp.ne.s32.totalorder %s144, %s158
    %p160 = scmp.eq.s32.totalorder %s29, 0
    %p161 = por %p159, %p160
    %s163 = sadd.s32 %s162, 1
    %p166 = scmp.eq.s32.totalorder %s23, 1
    %p167 = scmp.ne.s32.totalorder %s162, %s164
    %p168 = scmp.eq.s32.totalorder %s23, 0
    %p169 = por %p167, %p168
    %p170 = scmp.ne.s32.totalorder %s162, %s164
    %p171 = scmp.eq.s32.totalorder %s28, 1
    %p172 = por %p170, %p171
    %p173 = scmp.ne.s32.totalorder %s164, %s165
    %p174 = scmp.eq.s32.totalorder %s28, 0
    %p175 = por %p173, %p174
    %p176 = scmp.ne.s32.totalorder %s164, %s165
    %p177 = scmp.eq.s32.totalorder %s29, 1
    %p178 = por %p176, %p177
    %p180 = scmp.ne.s32.totalorder %s165, %s179
    %p181 = scmp.eq.s32.totalorder %s29, 0
    %p182 = por %p180, %p181
    %s184 = sadd.s32 %s183, 1
    %p187 = scmp.eq.s32.totalorder %s23, 1
    %p188 = scmp.ne.s32.totalorder %s183, %s185
    %p189 = scmp.eq.s32.totalorder %s23, 0
    %p190 = por %p188, %p189
    %p191 = scmp.ne.s32.totalorder %s183, %s185
    %p192 = scmp.eq.s32.totalorder %s28, 1
    %p193 = por %p191, %p192
    %p194 = scmp.ne.s32.totalorder %s185, %s186
    %p195 = scmp.eq.s32.totalorder %s28, 0
    %p196 = por %p194, %p195
    %p197 = scmp.ne.s32.totalorder %s185, %s186
    %p198 = scmp.eq.s32.totalorder %s29, 1
    %p199 = por %p197, %p198
    %p201 = scmp.ne.s32.totalorder %s186, %s200
    %p202 = scmp.eq.s32.totalorder %s29, 0
    %p203 = por %p201, %p202
    %s205 = sadd.s32 %s204, 1
    %p208 = scmp.eq.s32.totalorder %s23, 1
    %p209 = scmp.ne.s32.totalorder %s204, %s206
    %p210 = scmp.eq.s32.totalorder %s23, 0
    %p211 = por %p209, %p210
    %p212 = scmp.ne.s32.totalorder %s204, %s206
    %p213 = scmp.eq.s32.totalorder %s28, 1
    %p214 = por %p212, %p213
    %p215 = scmp.ne.s32.totalorder %s206, %s207
    %p216 = scmp.eq.s32.totalorder %s28, 0
    %p217 = por %p215, %p216
    %p218 = scmp.ne.s32.totalorder %s206, %s207
    %p219 = scmp.eq.s32.totalorder %s29, 1
    %p220 = por %p218, %p219
    %p222 = scmp.ne.s32.totalorder %s207, %s221
    %p223 = scmp.eq.s32.totalorder %s29, 0
    %p224 = por %p222, %p223
    %s226 = sadd.s32 %s225, 1
    %p229 = scmp.eq.s32.totalorder %s23, 1
    %p230 = scmp.ne.s32.totalorder %s225, %s227
    %p231 = scmp.eq.s32.totalorder %s23, 0
    %p232 = por %p230, %p231
    %p233 = scmp.ne.s32.totalorder %s225, %s227
    %p234 = scmp.eq.s32.totalorder %s28, 1
    %p235 = por %p233, %p234
    %p236 = scmp.ne.s32.totalorder %s227, %s228
    %p237 = scmp.eq.s32.totalorder %s28, 0
    %p238 = por %p236, %p237
    %p239 = scmp.ne.s32.totalorder %s227, %s228
    %p240 = scmp.eq.s32.totalorder %s29, 1
    %p241 = por %p239, %p240
    %p243 = scmp.ne.s32.totalorder %s228, %s242
    %p244 = scmp.eq.s32.totalorder %s29, 0
    %p245 = por %p243, %p244
    %s247 = sadd.s32 %s246, 1
    %p250 = scmp.eq.s32.totalorder %s23, 1
    %p251 = scmp.ne.s32.totalorder %s246, %s248
    %p252 = scmp.eq.s32.totalorder %s23, 0
    %p253 = por %p251, %p252
    %p254 = scmp.ne.s32.totalorder %s246, %s248
    %p255 = scmp.eq.s32.totalorder %s28, 1
    %p256 = por %p254, %p255
    %p257 = scmp.ne.s32.totalorder %s248, %s249
    %p258 = scmp.eq.s32.totalorder %s28, 0
    %p259 = por %p257, %p258
    %p260 = scmp.ne.s32.totalorder %s248, %s249
    %p261 = scmp.eq.s32.totalorder %s29, 1
    %p262 = por %p260, %p261
    %p264 = scmp.ne.s32.totalorder %s249, %s263
    %p265 = scmp.eq.s32.totalorder %s29, 0
    %p266 = por %p264, %p265
    %s268 = sadd.s32 %s267, 1
    %p271 = scmp.eq.s32.totalorder %s23, 1
    %p272 = scmp.ne.s32.totalorder %s267, %s269
    %p273 = scmp.eq.s32.totalorder %s23, 0
    %p274 = por %p272, %p273
    %p275 = scmp.ne.s32.totalorder %s267, %s269
    %p276 = scmp.eq.s32.totalorder %s28, 1
    %p277 = por %p275, %p276
    %p278 = scmp.ne.s32.totalorder %s269, %s270
    %p279 = scmp.eq.s32.totalorder %s28, 0
    %p280 = por %p278, %p279
    %p281 = scmp.ne.s32.totalorder %s269, %s270
    %p282 = scmp.eq.s32.totalorder %s29, 1
    %p283 = por %p281, %p282
    %p285 = scmp.ne.s32.totalorder %s270, %s284
    %p286 = scmp.eq.s32.totalorder %s29, 0
    %p287 = por %p285, %p286
    %s289 = sadd.s32 %s288, 1
    %p292 = scmp.eq.s32.totalorder %s23, 1
    %p293 = scmp.ne.s32.totalorder %s288, %s290
    %p294 = scmp.eq.s32.totalorder %s23, 0
    %p295 = por %p293, %p294
    %p296 = scmp.ne.s32.totalorder %s288, %s290
    %p297 = scmp.eq.s32.totalorder %s28, 1
    %p298 = por %p296, %p297
    %p299 = scmp.ne.s32.totalorder %s290, %s291
    %p300 = scmp.eq.s32.totalorder %s28, 0
    %p301 = por %p299, %p300
    %p302 = scmp.ne.s32.totalorder %s290, %s291
    %p303 = scmp.eq.s32.totalorder %s29, 1
    %p304 = por %p302, %p303
    %p306 = scmp.ne.s32.totalorder %s291, %s305
    %p307 = scmp.eq.s32.totalorder %s29, 0
    %p308 = por %p306, %p307
    %s310 = sadd.s32 %s309, 1
    %p313 = scmp.eq.s32.totalorder %s23, 1
    %p314 = scmp.ne.s32.totalorder %s309, %s311
    %p315 = scmp.eq.s32.totalorder %s23, 0
    %p316 = por %p314, %p315
    %p317 = scmp.ne.s32.totalorder %s309, %s311
    %p318 = scmp.eq.s32.totalorder %s28, 1
    %p319 = por %p317, %p318
    %p320 = scmp.ne.s32.totalorder %s311, %s312
    %p321 = scmp.eq.s32.totalorder %s28, 0
    %p322 = por %p320, %p321
    %p323 = scmp.ne.s32.totalorder %s311, %s312
    %p324 = scmp.eq.s32.totalorder %s29, 1
    %p325 = por %p323, %p324
    %p327 = scmp.ne.s32.totalorder %s312, %s326
    %p328 = scmp.eq.s32.totalorder %s29, 0
    %p329 = por %p327, %p328
    %s331 = sadd.s32 %s330, 1
    %p334 = scmp.eq.s32.totalorder %s23, 1
    %p335 = scmp.ne.s32.totalorder %s330, %s332
    %p336 = scmp.eq.s32.totalorder %s23, 0
    %p337 = por %p335, %p336
    %p338 = scmp.ne.s32.totalorder %s330, %s332
    %p339 = scmp.eq.s32.totalorder %s28, 1
    %p340 = por %p338, %p339
    %p341 = scmp.ne.s32.totalorder %s332, %s333
    %p342 = scmp.eq.s32.totalorder %s28, 0
    %p343 = por %p341, %p342
    %p344 = scmp.ne.s32.totalorder %s332, %s333
    %p345 = scmp.eq.s32.totalorder %s29, 1
    %p346 = por %p344, %p345
    %p348 = scmp.ne.s32.totalorder %s333, %s347
    %p349 = scmp.eq.s32.totalorder %s29, 0
    %p350 = por %p348, %p349
    %s352 = sadd.s32 %s351, 1
    %p355 = scmp.eq.s32.totalorder %s23, 1
    %p356 = scmp.ne.s32.totalorder %s351, %s353
    %p357 = scmp.eq.s32.totalorder %s23, 0
    %p358 = por %p356, %p357
    %p359 = scmp.ne.s32.totalorder %s351, %s353
    %p360 = scmp.eq.s32.totalorder %s28, 1
    %p361 = por %p359, %p360
    %p362 = scmp.ne.s32.totalorder %s353, %s354
    %p363 = scmp.eq.s32.totalorder %s28, 0
    %p364 = por %p362, %p363
    %p365 = scmp.ne.s32.totalorder %s353, %s354
    %p366 = scmp.eq.s32.totalorder %s29, 1
    %p367 = por %p365, %p366
    %p369 = scmp.ne.s32.totalorder %s354, %s368
    %p370 = scmp.eq.s32.totalorder %s29, 0
    %p371 = por %p369, %p370
    %s373 = sadd.s32 %s372, 1
    %p376 = scmp.eq.s32.totalorder %s23, 1
    %p377 = scmp.ne.s32.totalorder %s372, %s374
    %p378 = scmp.eq.s32.totalorder %s23, 0
    %p379 = por %p377, %p378
    %p380 = scmp.ne.s32.totalorder %s372, %s374
    %p381 = scmp.eq.s32.totalorder %s28, 1
    %p382 = por %p380, %p381
    %p383 = scmp.ne.s32.totalorder %s374, %s375
    %p384 = scmp.eq.s32.totalorder %s28, 0
    %p385 = por %p383, %p384
    %p386 = scmp.ne.s32.totalorder %s374, %s375
    %p387 = scmp.eq.s32.totalorder %s29, 1
    %p388 = por %p386, %p387
    %p390 = scmp.ne.s32.totalorder %s375, %s389
    %p391 = scmp.eq.s32.totalorder %s29, 0
    %p392 = por %p390, %p391
    %s393 = ssub.s32 %s23, %s30
    %p394 = scmp.eq.s32.totalorder %s393, 0
    %s396 = sadd.s32 %s395, 1
    %s397 = scalar_select %p394, %s395, %s396
    %p400 = pneg %p394
    %p401 = scmp.eq.s32.totalorder %s23, 1
    %p402 = por %p400, %p401
    %p403 = scmp.ne.s32.totalorder %s395, %s398
    %p404 = scmp.eq.s32.totalorder %s23, 0
    %p405 = por %p403, %p404
    %p406 = scmp.ne.s32.totalorder %s395, %s398
    %p407 = scmp.eq.s32.totalorder %s28, 1
    %p408 = por %p406, %p407
    %p409 = scmp.ne.s32.totalorder %s398, %s399
    %p410 = scmp.eq.s32.totalorder %s28, 0
    %p411 = por %p409, %p410
    %p412 = scmp.ne.s32.totalorder %s398, %s399
    %p413 = scmp.eq.s32.totalorder %s29, 1
    %p414 = por %p412, %p413
    %p416 = scmp.ne.s32.totalorder %s399, %s415
    %p417 = scmp.eq.s32.totalorder %s29, 0
    %p418 = por %p416, %p417
    %p419 = scmp.le.s32.totalorder 1, %s23
    %p420 = scmp.lt.s32.totalorder %s23, 3
    %p421 = pnand %p419, %p420
    %p422 = pneg %p421
    // Predicated region
    $region9: #{vision_mamba3d_forward.1} parent=5 // pred_check
      _
    $region10: #{vision_mamba3d_forward.1} parent=5 // pred_check_branch
      %424 = sbr.rel (%p421) target = $region12
    $region11: #{vision_mamba3d_forward.1} parent=5 // pred_region
      %s425 = ssub.s32 %s23, 1
      // Predicated region
      $region13: #{vision_mamba3d_forward.1} parent=11 // pred_check
        %p426 = pneg %p70
      $region14: #{vision_mamba3d_forward.1} parent=11 // pred_check_branch
        %428 = sbr.rel (%p426) target = $region16
      $region15: #{vision_mamba3d_forward.1} parent=11 // pred_region
        _
      $region16: #{vision_mamba3d_forward.1} parent=11 // pred_fallthru
        _
      // Predicated region
      $region17: #{vision_mamba3d_forward.1} parent=11 // pred_check
        %p429 = pneg %p91
      $region18: #{vision_mamba3d_forward.1} parent=11 // pred_check_branch
        %431 = sbr.rel (%p429) target = $region20
      $region19: #{vision_mamba3d_forward.1} parent=11 // pred_region
        _
      $region20: #{vision_mamba3d_forward.1} parent=11 // pred_fallthru
        _
      // Predicated region
      $region21: #{vision_mamba3d_forward.1} parent=11 // pred_check
        %p432 = pneg %p112
      $region22: #{vision_mamba3d_forward.1} parent=11 // pred_check_branch
        %434 = sbr.rel (%p432) target = $region24
      $region23: #{vision_mamba3d_forward.1} parent=11 // pred_region
        _
      $region24: #{vision_mamba3d_forward.1} parent=11 // pred_fallthru
        _
      // Predicated region
      $region25: #{vision_mamba3d_forward.1} parent=11 // pred_check
        %p435 = pneg %p133
      $region26: #{vision_mamba3d_forward.1} parent=11 // pred_check_branch
        %437 = sbr.rel (%p435) target = $region28
      $region27: #{vision_mamba3d_forward.1} parent=11 // pred_region
        _
      $region28: #{vision_mamba3d_forward.1} parent=11 // pred_fallthru
        _
      // Predicated region
      $region29: #{vision_mamba3d_forward.1} parent=11 // pred_check
        %p438 = pneg %p154
      $region30: #{vision_mamba3d_forward.1} parent=11 // pred_check_branch
        %440 = sbr.rel (%p438) target = $region32
      $region31: #{vision_mamba3d_forward.1} parent=11 // pred_region
        _
      $region32: #{vision_mamba3d_forward.1} parent=11 // pred_fallthru
        _
      // Predicated region
      $region33: #{vision_mamba3d_forward.1} parent=11 // pred_check
        %p441 = pneg %p175
      $region34: #{vision_mamba3d_forward.1} parent=11 // pred_check_branch
        %443 = sbr.rel (%p441) target = $region36
      $region35: #{vision_mamba3d_forward.1} parent=11 // pred_region
        _
      $region36: #{vision_mamba3d_forward.1} parent=11 // pred_fallthru
        _
      // Predicated region
      $region37: #{vision_mamba3d_forward.1} parent=11 // pred_check
        %p444 = pneg %p196
      $region38: #{vision_mamba3d_forward.1} parent=11 // pred_check_branch
        %446 = sbr.rel (%p444) target = $region40
      $region39: #{vision_mamba3d_forward.1} parent=11 // pred_region
        _
      $region40: #{vision_mamba3d_forward.1} parent=11 // pred_fallthru
        _
      // Predicated region
      $region41: #{vision_mamba3d_forward.1} parent=11 // pred_check
        %p447 = pneg %p217
      $region42: #{vision_mamba3d_forward.1} parent=11 // pred_check_branch
        %449 = sbr.rel (%p447) target = $region44
      $region43: #{vision_mamba3d_forward.1} parent=11 // pred_region
        _
      $region44: #{vision_mamba3d_forward.1} parent=11 // pred_fallthru
        _
      // Predicated region
      $region45: #{vision_mamba3d_forward.1} parent=11 // pred_check
        %p450 = pneg %p238
      $region46: #{vision_mamba3d_forward.1} parent=11 // pred_check_branch
        %452 = sbr.rel (%p450) target = $region48
      $region47: #{vision_mamba3d_forward.1} parent=11 // pred_region
        _
      $region48: #{vision_mamba3d_forward.1} parent=11 // pred_fallthru
        _
      // Predicated region
      $region49: #{vision_mamba3d_forward.1} parent=11 // pred_check
        %p453 = pneg %p259
      $region50: #{vision_mamba3d_forward.1} parent=11 // pred_check_branch
        %455 = sbr.rel (%p453) target = $region52
      $region51: #{vision_mamba3d_forward.1} parent=11 // pred_region
        _
      $region52: #{vision_mamba3d_forward.1} parent=11 // pred_fallthru
        _
      // Predicated region
      $region53: #{vision_mamba3d_forward.1} parent=11 // pred_check
        %p456 = pneg %p280
      $region54: #{vision_mamba3d_forward.1} parent=11 // pred_check_branch
        %458 = sbr.rel (%p456) target = $region56
      $region55: #{vision_mamba3d_forward.1} parent=11 // pred_region
        _
      $region56: #{vision_mamba3d_forward.1} parent=11 // pred_fallthru
        _
      // Predicated region
      $region57: #{vision_mamba3d_forward.1} parent=11 // pred_check
        %p459 = pneg %p301
      $region58: #{vision_mamba3d_forward.1} parent=11 // pred_check_branch
        %461 = sbr.rel (%p459) target = $region60
      $region59: #{vision_mamba3d_forward.1} parent=11 // pred_region
        _
      $region60: #{vision_mamba3d_forward.1} parent=11 // pred_fallthru
        _
      // Predicated region
      $region61: #{vision_mamba3d_forward.1} parent=11 // pred_check
        %p462 = pneg %p322
      $region62: #{vision_mamba3d_forward.1} parent=11 // pred_check_branch
        %464 = sbr.rel (%p462) target = $region64
      $region63: #{vision_mamba3d_forward.1} parent=11 // pred_region
        _
      $region64: #{vision_mamba3d_forward.1} parent=11 // pred_fallthru
        _
      // Predicated region
      $region65: #{vision_mamba3d_forward.1} parent=11 // pred_check
        %p465 = pneg %p343
      $region66: #{vision_mamba3d_forward.1} parent=11 // pred_check_branch
        %467 = sbr.rel (%p465) target = $region68
      $region67: #{vision_mamba3d_forward.1} parent=11 // pred_region
        _
      $region68: #{vision_mamba3d_forward.1} parent=11 // pred_fallthru
        _
      // Predicated region
      $region69: #{vision_mamba3d_forward.1} parent=11 // pred_check
        %p468 = pneg %p364
      $region70: #{vision_mamba3d_forward.1} parent=11 // pred_check_branch
        %470 = sbr.rel (%p468) target = $region72
      $region71: #{vision_mamba3d_forward.1} parent=11 // pred_region
        _
      $region72: #{vision_mamba3d_forward.1} parent=11 // pred_fallthru
        _
      // Predicated region
      $region73: #{vision_mamba3d_forward.1} parent=11 // pred_check
        %p471 = pneg %p385
      $region74: #{vision_mamba3d_forward.1} parent=11 // pred_check_branch
        %473 = sbr.rel (%p471) target = $region76
      $region75: #{vision_mamba3d_forward.1} parent=11 // pred_region
        _
      $region76: #{vision_mamba3d_forward.1} parent=11 // pred_fallthru
        _
    $region12: #{vision_mamba3d_forward.1} parent=5 // pred_fallthru
      _
    %p474 = scmp.lt.s32.totalorder %s23, 2
    // Predicated region
    $region77: #{vision_mamba3d_forward.1} parent=5 // pred_check
      %p475 = pneg %p474
    $region78: #{vision_mamba3d_forward.1} parent=5 // pred_check_branch
      %477 = sbr.rel (%p475) target = $region80
    $region79: #{vision_mamba3d_forward.1} parent=5 // pred_region
      // Predicated region
      $region81: #{vision_mamba3d_forward.1} parent=79 // pred_check
        %p478 = pneg %p43
      $region82: #{vision_mamba3d_forward.1} parent=79 // pred_check_branch
        %480 = sbr.rel (%p478) target = $region84
      $region83: #{vision_mamba3d_forward.1} parent=79 // pred_region
        %p481 = scmp.lt.s32.totalorder %s23, 1
        %s482 = scalar_select %p481, %s23, 1
        %s483 = smul.addr %s482, 8
        %s484 = smul.addr %s483, 4
        %s485 = scalar_lea.vmem %s0, %s484
      $region84: #{vision_mamba3d_forward.1} parent=79 // pred_fallthru
        _
    $region80: #{vision_mamba3d_forward.1} parent=5 // pred_fallthru
      _
    %p486 = scmp.le.s32.totalorder 1, %s23
    %p487 = scmp.lt.s32.totalorder %s23, 3
    %p488 = pnand %p486, %p487
    %p489 = pneg %p488
    // Predicated region
    $region85: #{vision_mamba3d_forward.1} parent=5 // pred_check
      _
    $region86: #{vision_mamba3d_forward.1} parent=5 // pred_check_branch
      %491 = sbr.rel (%p488) target = $region88
    $region87: #{vision_mamba3d_forward.1} parent=5 // pred_region
      %s492 = ssub.s32 %s23, 1
      %p493 = scmp.lt.s32.totalorder %s28, 1
      %s494 = scalar_select %p493, %s28, 1
      %s495 = smul.addr %s494, 8
      %s496 = smul.addr %s495, 4
      %s497 = scalar_lea.vmem %s0, %s496
      %p498 = pneg %p49
      %p499 = pneg %p46
      %p500 = pneg %p70
      %p501 = pneg %p67
      %p502 = pneg %p91
      %p503 = pneg %p88
      %p504 = pneg %p112
      %p505 = pneg %p109
      %p506 = pneg %p133
      %p507 = pneg %p130
      %p508 = pneg %p154
      %p509 = pneg %p151
      %p510 = pneg %p175
      %p511 = pneg %p172
      %p512 = pneg %p196
      %p513 = pneg %p193
      %p514 = pneg %p217
      %p515 = pneg %p214
      %p516 = pneg %p238
      %p517 = pneg %p235
      %p518 = pneg %p259
      %p519 = pneg %p256
      %p520 = pneg %p280
      %p521 = pneg %p277
      %p522 = pneg %p301
      %p523 = pneg %p298
      %p524 = pneg %p322
      %p525 = pneg %p319
      %p526 = pneg %p343
      %p527 = pneg %p340
      %p528 = pneg %p364
      %p529 = pneg %p361
      %p530 = pneg %p385
      %p531 = pneg %p382
      %p532 = pneg %p411
      %p533 = pneg %p408
      %p534 = scmp.lt.s32.totalorder %s28, 1
      %s535 = scalar_select %p534, %s28, 1
      %s536 = smul.addr %s535, 8
      %s537 = scalar_lea.vmem %s17, %s536
      %p538 = scmp.lt.s32.totalorder %s28, 1
      %s539 = scalar_select %p538, %s28, 1
      %s540 = smul.addr %s539, 8
      %s541 = smul.addr %s540, 4
      %s542 = scalar_lea.vmem %s0, %s541
      %p543 = scmp.lt.s32.totalorder %s28, 1
      %s544 = scalar_select %p543, %s28, 1
      %s545 = smul.addr %s544, 8
      %s546 = scalar_lea.vmem %s17, %s545
      %v548 = vld [vmem:[%s542] sm:$0xf]
      %v549 = vld [vmem:[%s542 + $0x4] sm:$0xf]
      %v550 = vld [vmem:[%s542 + $0x8] sm:$0xf]
      %v551 = vld [vmem:[%s542 + $0xc] sm:$0xf]
      %v552 = vld [vmem:[%s542 + $0x10] sm:$0xf]
      %v553 = vld [vmem:[%s542 + $0x14] sm:$0xf]
      %v554 = vld [vmem:[%s542 + $0x18] sm:$0xf]
      %v555 = vld [vmem:[%s542 + $0x1c] sm:$0xf]
      %v556 = vld [vmem:[%s1] sm:$0xf]
      %v557 = vld [vmem:[%s1 + $0x4] sm:$0xf]
      %v558 = vld [vmem:[%s1 + $0x8] sm:$0xf]
      %v559 = vld [vmem:[%s1 + $0xc] sm:$0xf]
      %v560 = vld [vmem:[%s1 + $0x10] sm:$0xf]
      %v561 = vld [vmem:[%s1 + $0x14] sm:$0xf]
      %v562 = vld [vmem:[%s1 + $0x18] sm:$0xf]
      %v563 = vld [vmem:[%s1 + $0x1c] sm:$0xf]
      %v564 = vld [vmem:[%s2] sm:$0x1]
      %v566 = vlaneseq
      %v567 = vshrl.u32 %v566, 7
      %v568 = vsub.s32 0, %v567
      %v569 = vrot.slane %v564, %v568
      %v579 = vunpack.c.l.b16 %v548
      %v580 = vunpack.c.l.b16 %v549
      %v581 = vunpack.c.l.b16 %v550
      %v582 = vunpack.c.l.b16 %v551
      %v583 = vunpack.c.l.b16 %v552
      %v584 = vunpack.c.l.b16 %v553
      %v585 = vunpack.c.l.b16 %v554
      %v586 = vunpack.c.l.b16 %v555
      %v587 = vpack.c.b16 %v580, %v579
      %v588 = vpack.c.b16 %v582, %v581
      %v589 = vpack.c.b16 %v584, %v583
      %v590 = vpack.c.b16 %v586, %v585
      %v599 = vunpack.c.l.b16 %v556
      %v600 = vunpack.c.l.b16 %v557
      %v601 = vunpack.c.l.b16 %v558
      %v602 = vunpack.c.l.b16 %v559
      %v603 = vunpack.c.l.b16 %v560
      %v604 = vunpack.c.l.b16 %v561
      %v605 = vunpack.c.l.b16 %v562
      %v606 = vunpack.c.l.b16 %v563
      %v607 = vpack.c.b16 %v600, %v599
      %v608 = vpack.c.b16 %v602, %v601
      %v609 = vpack.c.b16 %v604, %v603
      %v610 = vpack.c.b16 %v606, %v605
      %vm615 = vcmask 523264
      %v617 = vsel %vm615, %v587, 0
      %v620 = vsel %vm615, %v588, 0
      %v623 = vsel %vm615, %v589, 0
      %v626 = vsel %vm615, %v590, 0
      %628 = vmatprep.subr.bf16.mxu0 0
      %629 = vmatpush1.bf16.msra.mxu0 0
      %630 = vmatprep.subr.bf16.mxu0 0
      %631 = vmatpush1.bf16.msra.mxu0 0
      %632 = vmatprep.subr.bf16.mxu0 0
      %633 = vmatpush1.bf16.msra.mxu0 0
      %634 = vmatprep.subr.bf16.mxu0 0
      %635 = vmatpush1.bf16.msra.mxu0 0
      %636 = vmatprep.subr.bf16.mxu0 0
      %637 = vmatpush1.bf16.msra.mxu0 %v610
      %638 = vmatprep.subr.bf16.mxu0 0
      %639 = vmatpush1.bf16.msra.mxu0 %v609
      %640 = vmatprep.subr.bf16.mxu0 0
      %641 = vmatpush1.bf16.msra.mxu0 %v608
      %642 = vmatprep.subr.bf16.mxu0 0
      %643 = vmatpush1.bf16.msra.mxu0 %v607
      %644 = vmatprep.subr.bf16.mxu0 0
      %645 = vmatpush2.bf16.msra.mxu0 0
      %646 = vmatprep.subr.bf16.mxu0 0
      %647 = vmatpush2.bf16.msra.mxu0 0
      %648 = vmatprep.subr.bf16.mxu0 0
      %649 = vmatpush2.bf16.msra.mxu0 0
      %650 = vmatprep.subr.bf16.mxu0 0
      %651 = vmatpush2.bf16.msra.mxu0 0
      %652 = vmatprep.subr.bf16.mxu0 0
      %653 = vmatpush2.bf16.msra.mxu0 0
      %654 = vmatprep.subr.bf16.mxu0 0
      %655 = vmatpush2.bf16.msra.mxu0 0
      %656 = vmatprep.subr.bf16.mxu0 0
      %657 = vmatpush2.bf16.msra.mxu0 0
      %658 = vmatprep.subr.bf16.mxu0 0
      %659 = vmatpush2.bf16.msra.mxu0 0
      %660 = vmatprep.mubr.bf16.mxu0 0
      %661 = vmatmul.mubr.bf16.gmra.mxu0 %v617
      %v662 = vpop.f32.mrf.mxu0
      %v663 = vadd.f32 %v569, %v662
      %v664 = vpop.f32.mrf.mxu0
      %v665 = vpop.f32.mrf.mxu0
      %v666 = vadd.f32 %v569, %v665
      %v667 = vpop.f32.mrf.mxu0
      %668 = vmatprep.mubr.bf16.mxu0 0
      %669 = vmatmul.mubr.bf16.gmra.mxu0 %v620
      %v670 = vpop.f32.mrf.mxu0
      %v671 = vadd.f32 %v569, %v670
      %v672 = vpop.f32.mrf.mxu0
      %v673 = vpop.f32.mrf.mxu0
      %v674 = vadd.f32 %v569, %v673
      %v675 = vpop.f32.mrf.mxu0
      %676 = vmatprep.mubr.bf16.mxu0 0
      %677 = vmatmul.mubr.bf16.gmra.mxu0 %v623
      %v678 = vpop.f32.mrf.mxu0
      %v679 = vadd.f32 %v569, %v678
      %v680 = vpop.f32.mrf.mxu0
      %v681 = vpop.f32.mrf.mxu0
      %v682 = vadd.f32 %v569, %v681
      %v683 = vpop.f32.mrf.mxu0
      %684 = vmatprep.mubr.bf16.mxu0 0
      %685 = vmatmul.mubr.bf16.gmra.mxu0 %v626
      %v686 = vpop.f32.mrf.mxu0
      %v687 = vadd.f32 %v569, %v686
      %v688 = vpop.f32.mrf.mxu0
      %v689 = vpop.f32.mrf.mxu0
      %v690 = vadd.f32 %v569, %v689
      %v691 = vpop.f32.mrf.mxu0
      %692 = vdwg.mxu0
      %v693 = vld [vmem:[%s3] sm:$0xf]
      %v694 = vld [vmem:[%s3 + $0x4] sm:$0xf]
      %v695 = vld [vmem:[%s3 + $0x8] sm:$0xf]
      %v696 = vld [vmem:[%s3 + $0xc] sm:$0xf]
      %v697 = vld [vmem:[%s3 + $0x10] sm:$0xf]
      %v698 = vld [vmem:[%s3 + $0x14] sm:$0xf]
      %v699 = vld [vmem:[%s3 + $0x18] sm:$0xf]
      %v700 = vld [vmem:[%s3 + $0x1c] sm:$0xf]
      %v701 = vld [vmem:[%s3 + $0x20] sm:$0xf]
      %v702 = vld [vmem:[%s3 + $0x24] sm:$0xf]
      %v703 = vld [vmem:[%s3 + $0x28] sm:$0xf]
      %v704 = vld [vmem:[%s3 + $0x2c] sm:$0xf]
      %v705 = vld [vmem:[%s3 + $0x30] sm:$0xf]
      %v706 = vld [vmem:[%s3 + $0x34] sm:$0xf]
      %v707 = vld [vmem:[%s3 + $0x38] sm:$0xf]
      %v708 = vld [vmem:[%s3 + $0x3c] sm:$0xf]
      %v709 = vld [vmem:[%s4] sm:$0xf]
      %v710 = vld [vmem:[%s4 + $0x4] sm:$0xf]
      %v711 = vld [vmem:[%s4 + $0x8] sm:$0xf]
      %v712 = vld [vmem:[%s4 + $0xc] sm:$0xf]
      %v713 = vld [vmem:[%s4 + $0x10] sm:$0xf]
      %v714 = vld [vmem:[%s4 + $0x14] sm:$0xf]
      %v715 = vld [vmem:[%s4 + $0x18] sm:$0xf]
      %v716 = vld [vmem:[%s4 + $0x1c] sm:$0xf]
      %v717 = vld [vmem:[%s4 + $0x20] sm:$0xf]
      %v718 = vld [vmem:[%s4 + $0x24] sm:$0xf]
      %v719 = vld [vmem:[%s4 + $0x28] sm:$0xf]
      %v720 = vld [vmem:[%s4 + $0x2c] sm:$0xf]
      %v721 = vld [vmem:[%s4 + $0x30] sm:$0xf]
      %v722 = vld [vmem:[%s4 + $0x34] sm:$0xf]
      %v723 = vld [vmem:[%s4 + $0x38] sm:$0xf]
      %v724 = vld [vmem:[%s4 + $0x3c] sm:$0xf]
      %v725 = vld [vmem:[%s5] sm:$0xf]
      %v726 = vld [vmem:[%s5 + $0x4] sm:$0xf]
      %v727 = vld [vmem:[%s5 + $0x8] sm:$0xf]
      %v728 = vld [vmem:[%s5 + $0xc] sm:$0xf]
      %v729 = vld [vmem:[%s5 + $0x10] sm:$0xf]
      %v730 = vld [vmem:[%s5 + $0x14] sm:$0xf]
      %v731 = vld [vmem:[%s5 + $0x18] sm:$0xf]
      %v732 = vld [vmem:[%s5 + $0x1c] sm:$0xf]
      %v733 = vld [vmem:[%s5 + $0x20] sm:$0xf]
      %v734 = vld [vmem:[%s5 + $0x24] sm:$0xf]
      %v735 = vld [vmem:[%s5 + $0x28] sm:$0xf]
      %v736 = vld [vmem:[%s5 + $0x2c] sm:$0xf]
      %v737 = vld [vmem:[%s5 + $0x30] sm:$0xf]
      %v738 = vld [vmem:[%s5 + $0x34] sm:$0xf]
      %v739 = vld [vmem:[%s5 + $0x38] sm:$0xf]
      %v740 = vld [vmem:[%s5 + $0x3c] sm:$0xf]
      %v741 = vpack.c.bf16 %v666, %v663
      %v742 = vpack.c.bf16 %v674, %v671
      %v743 = vpack.c.bf16 %v682, %v679
      %v744 = vpack.c.bf16 %v690, %v687
      %v761 = vunpack.c.l.b16 %v693
      %v762 = vunpack.c.l.b16 %v694
      %v763 = vunpack.c.l.b16 %v695
      %v764 = vunpack.c.l.b16 %v696
      %v765 = vunpack.c.l.b16 %v697
      %v766 = vunpack.c.l.b16 %v698
      %v767 = vunpack.c.l.b16 %v699
      %v768 = vunpack.c.l.b16 %v700
      %v769 = vunpack.c.l.b16 %v701
      %v770 = vunpack.c.l.b16 %v702
      %v771 = vunpack.c.l.b16 %v703
      %v772 = vunpack.c.l.b16 %v704
      %v773 = vunpack.c.l.b16 %v705
      %v774 = vunpack.c.l.b16 %v706
      %v775 = vunpack.c.l.b16 %v707
      %v776 = vunpack.c.l.b16 %v708
      %v777 = vpack.c.b16 %v762, %v761
      %v778 = vpack.c.b16 %v764, %v763
      %v779 = vpack.c.b16 %v766, %v765
      %v780 = vpack.c.b16 %v768, %v767
      %v781 = vpack.c.b16 %v770, %v769
      %v782 = vpack.c.b16 %v772, %v771
      %v783 = vpack.c.b16 %v774, %v773
      %v784 = vpack.c.b16 %v776, %v775
      %793 = vmatprep.subr.bf16.mxu0 0
      %794 = vmatpush1.bf16.msra.mxu0 %v784
      %795 = vmatprep.subr.bf16.mxu0 0
      %796 = vmatpush1.bf16.msra.mxu0 %v783
      %797 = vmatprep.subr.bf16.mxu0 0
      %798 = vmatpush1.bf16.msra.mxu0 %v782
      %799 = vmatprep.subr.bf16.mxu0 0
      %800 = vmatpush1.bf16.msra.mxu0 %v781
      %801 = vmatprep.subr.bf16.mxu0 0
      %802 = vmatpush1.bf16.msra.mxu0 %v780
      %803 = vmatprep.subr.bf16.mxu0 0
      %804 = vmatpush1.bf16.msra.mxu0 %v779
      %805 = vmatprep.subr.bf16.mxu0 0
      %806 = vmatpush1.bf16.msra.mxu0 %v778
      %807 = vmatprep.subr.bf16.mxu0 0
      %808 = vmatpush1.bf16.msra.mxu0 %v777
      %809 = vmatprep.subr.bf16.mxu0 0
      %810 = vmatpush2.bf16.msra.mxu0 0
      %811 = vmatprep.subr.bf16.mxu0 0
      %812 = vmatpush2.bf16.msra.mxu0 0
      %813 = vmatprep.subr.bf16.mxu0 0
      %814 = vmatpush2.bf16.msra.mxu0 0
      %815 = vmatprep.subr.bf16.mxu0 0
      %816 = vmatpush2.bf16.msra.mxu0 0
      %817 = vmatprep.subr.bf16.mxu0 0
      %818 = vmatpush2.bf16.msra.mxu0 0
      %819 = vmatprep.subr.bf16.mxu0 0
      %820 = vmatpush2.bf16.msra.mxu0 0
      %821 = vmatprep.subr.bf16.mxu0 0
      %822 = vmatpush2.bf16.msra.mxu0 0
      %823 = vmatprep.subr.bf16.mxu0 0
      %824 = vmatpush2.bf16.msra.mxu0 0
      %825 = vmatprep.mubr.bf16.mxu0 0
      %826 = vmatmul.mubr.bf16.gmra.mxu0 %v741
      %v827 = vpop.f32.mrf.mxu0
      %v828 = vadd.f32 0.0, %v827
      %v829 = vpop.f32.mrf.mxu0
      %v830 = vpop.f32.mrf.mxu0
      %v831 = vadd.f32 0.0, %v830
      %v832 = vpop.f32.mrf.mxu0
      %833 = vmatprep.mubr.bf16.mxu0 0
      %834 = vmatmul.mubr.bf16.gmra.mxu0 %v742
      %v835 = vpop.f32.mrf.mxu0
      %v836 = vadd.f32 0.0, %v835
      %v837 = vpop.f32.mrf.mxu0
      %v838 = vpop.f32.mrf.mxu0
      %v839 = vadd.f32 0.0, %v838
      %v840 = vpop.f32.mrf.mxu0
      %841 = vmatprep.mubr.bf16.mxu0 0
      %842 = vmatmul.mubr.bf16.gmra.mxu0 %v743
      %v843 = vpop.f32.mrf.mxu0
      %v844 = vadd.f32 0.0, %v843
      %v845 = vpop.f32.mrf.mxu0
      %v846 = vpop.f32.mrf.mxu0
      %v847 = vadd.f32 0.0, %v846
      %v848 = vpop.f32.mrf.mxu0
      %849 = vmatprep.mubr.bf16.mxu0 0
      %850 = vmatmul.mubr.bf16.gmra.mxu0 %v744
      %v851 = vpop.f32.mrf.mxu0
      %v852 = vadd.f32 0.0, %v851
      %v853 = vpop.f32.mrf.mxu0
      %v854 = vpop.f32.mrf.mxu0
      %v855 = vadd.f32 0.0, %v854
      %v856 = vpop.f32.mrf.mxu0
      %857 = vdwg.mxu0
      %v858 = vmul.f32 %v828, 0.5
      %v859 = vmul.f32 %v831, 0.5
      %v860 = vmul.f32 %v836, 0.5
      %v861 = vmul.f32 %v839, 0.5
      %v862 = vmul.f32 %v844, 0.5
      %v863 = vmul.f32 %v847, 0.5
      %v864 = vmul.f32 %v852, 0.5
      %v865 = vmul.f32 %v855, 0.5
      %v866 = vmul.f32 %v828, 0.044715
      %v867 = vmul.f32 %v831, 0.044715
      %v868 = vmul.f32 %v836, 0.044715
      %v869 = vmul.f32 %v839, 0.044715
      %v870 = vmul.f32 %v844, 0.044715
      %v871 = vmul.f32 %v847, 0.044715
      %v872 = vmul.f32 %v852, 0.044715
      %v873 = vmul.f32 %v855, 0.044715
      %v874 = vmul.f32 %v866, %v828
      %v875 = vmul.f32 %v867, %v831
      %v876 = vmul.f32 %v868, %v836
      %v877 = vmul.f32 %v869, %v839
      %v878 = vmul.f32 %v870, %v844
      %v879 = vmul.f32 %v871, %v847
      %v880 = vmul.f32 %v872, %v852
      %v881 = vmul.f32 %v873, %v855
      %v882 = vmul.f32 %v874, %v828
      %v883 = vmul.f32 %v875, %v831
      %v884 = vmul.f32 %v876, %v836
      %v885 = vmul.f32 %v877, %v839
      %v886 = vmul.f32 %v878, %v844
      %v887 = vmul.f32 %v879, %v847
      %v888 = vmul.f32 %v880, %v852
      %v889 = vmul.f32 %v881, %v855
      %v890 = vadd.f32 %v828, %v882
      %v891 = vadd.f32 %v831, %v883
      %v892 = vadd.f32 %v836, %v884
      %v893 = vadd.f32 %v839, %v885
      %v894 = vadd.f32 %v844, %v886
      %v895 = vadd.f32 %v847, %v887
      %v896 = vadd.f32 %v852, %v888
      %v897 = vadd.f32 %v855, %v889
      %v898 = vmul.f32 %v890, 0.7978846
      %v899 = vmul.f32 %v891, 0.7978846
      %v900 = vmul.f32 %v892, 0.7978846
      %v901 = vmul.f32 %v893, 0.7978846
      %v902 = vmul.f32 %v894, 0.7978846
      %v903 = vmul.f32 %v895, 0.7978846
      %v904 = vmul.f32 %v896, 0.7978846
      %v905 = vmul.f32 %v897, 0.7978846
      %v906 = vtanh.pop %v898
      %v907 = vtanh.pop %v899
      %v908 = vtanh.pop %v900
      %v909 = vtanh.pop %v901
      %v910 = vtanh.pop %v902
      %v911 = vtanh.pop %v903
      %v912 = vtanh.pop %v904
      %v913 = vtanh.pop %v905
      %v914 = vadd.f32 %v906, 1.0
      %v915 = vadd.f32 %v907, 1.0
      %v916 = vadd.f32 %v908, 1.0
      %v917 = vadd.f32 %v909, 1.0
      %v918 = vadd.f32 %v910, 1.0
      %v919 = vadd.f32 %v911, 1.0
      %v920 = vadd.f32 %v912, 1.0
      %v921 = vadd.f32 %v913, 1.0
      %v922 = vmul.f32 %v858, %v914
      %v923 = vmul.f32 %v859, %v915
      %v924 = vmul.f32 %v860, %v916
      %v925 = vmul.f32 %v861, %v917
      %v926 = vmul.f32 %v862, %v918
      %v927 = vmul.f32 %v863, %v919
      %v928 = vmul.f32 %v864, %v920
      %v929 = vmul.f32 %v865, %v921
      %v930 = vpack.c.bf16 %v923, %v922
      %v931 = vpack.c.bf16 %v925, %v924
      %v932 = vpack.c.bf16 %v927, %v926
      %v933 = vpack.c.bf16 %v929, %v928
      %v950 = vunpack.c.l.b16 %v709
      %v951 = vunpack.c.l.b16 %v710
      %v952 = vunpack.c.l.b16 %v711
      %v953 = vunpack.c.l.b16 %v712
      %v954 = vunpack.c.l.b16 %v713
      %v955 = vunpack.c.l.b16 %v714
      %v956 = vunpack.c.l.b16 %v715
      %v957 = vunpack.c.l.b16 %v716
      %v958 = vunpack.c.l.b16 %v717
      %v959 = vunpack.c.l.b16 %v718
      %v960 = vunpack.c.l.b16 %v719
      %v961 = vunpack.c.l.b16 %v720
      %v962 = vunpack.c.l.b16 %v721
      %v963 = vunpack.c.l.b16 %v722
      %v964 = vunpack.c.l.b16 %v723
      %v965 = vunpack.c.l.b16 %v724
      %v966 = vpack.c.b16 %v951, %v950
      %v967 = vpack.c.b16 %v953, %v952
      %v968 = vpack.c.b16 %v955, %v954
      %v969 = vpack.c.b16 %v957, %v956
      %v970 = vpack.c.b16 %v959, %v958
      %v971 = vpack.c.b16 %v961, %v960
      %v972 = vpack.c.b16 %v963, %v962
      %v973 = vpack.c.b16 %v965, %v964
      %982 = vmatprep.subr.bf16.mxu0 0
      %983 = vmatpush1.bf16.msra.mxu0 %v973
      %984 = vmatprep.subr.bf16.mxu0 0
      %985 = vmatpush1.bf16.msra.mxu0 %v972
      %986 = vmatprep.subr.bf16.mxu0 0
      %987 = vmatpush1.bf16.msra.mxu0 %v971
      %988 = vmatprep.subr.bf16.mxu0 0
      %989 = vmatpush1.bf16.msra.mxu0 %v970
      %990 = vmatprep.subr.bf16.mxu0 0
      %991 = vmatpush1.bf16.msra.mxu0 %v969
      %992 = vmatprep.subr.bf16.mxu0 0
      %993 = vmatpush1.bf16.msra.mxu0 %v968
      %994 = vmatprep.subr.bf16.mxu0 0
      %995 = vmatpush1.bf16.msra.mxu0 %v967
      %996 = vmatprep.subr.bf16.mxu0 0
      %997 = vmatpush1.bf16.msra.mxu0 %v966
      %998 = vmatprep.subr.bf16.mxu0 0
      %999 = vmatpush2.bf16.msra.mxu0 0
      %1000 = vmatprep.subr.bf16.mxu0 0
      %1001 = vmatpush2.bf16.msra.mxu0 0
      %1002 = vmatprep.subr.bf16.mxu0 0
      %1003 = vmatpush2.bf16.msra.mxu0 0
      %1004 = vmatprep.subr.bf16.mxu0 0
      %1005 = vmatpush2.bf16.msra.mxu0 0
      %1006 = vmatprep.subr.bf16.mxu0 0
      %1007 = vmatpush2.bf16.msra.mxu0 0
      %1008 = vmatprep.subr.bf16.mxu0 0
      %1009 = vmatpush2.bf16.msra.mxu0 0
      %1010 = vmatprep.subr.bf16.mxu0 0
      %1011 = vmatpush2.bf16.msra.mxu0 0
      %1012 = vmatprep.subr.bf16.mxu0 0
      %1013 = vmatpush2.bf16.msra.mxu0 0
      %1014 = vmatprep.mubr.bf16.mxu0 0
      %1015 = vmatmul.mubr.bf16.gmra.mxu0 %v930
      %v1016 = vpop.f32.mrf.mxu0
      %v1017 = vadd.f32 0.0, %v1016
      %v1018 = vpop.f32.mrf.mxu0
      %v1019 = vpop.f32.mrf.mxu0
      %v1020 = vadd.f32 0.0, %v1019
      %v1021 = vpop.f32.mrf.mxu0
      %1022 = vmatprep.mubr.bf16.mxu0 0
      %1023 = vmatmul.mubr.bf16.gmra.mxu0 %v931
      %v1024 = vpop.f32.mrf.mxu0
      %v1025 = vadd.f32 0.0, %v1024
      %v1026 = vpop.f32.mrf.mxu0
      %v1027 = vpop.f32.mrf.mxu0
      %v1028 = vadd.f32 0.0, %v1027
      %v1029 = vpop.f32.mrf.mxu0
      %1030 = vmatprep.mubr.bf16.mxu0 0
      %1031 = vmatmul.mubr.bf16.gmra.mxu0 %v932
      %v1032 = vpop.f32.mrf.mxu0
      %v1033 = vadd.f32 0.0, %v1032
      %v1034 = vpop.f32.mrf.mxu0
      %v1035 = vpop.f32.mrf.mxu0
      %v1036 = vadd.f32 0.0, %v1035
      %v1037 = vpop.f32.mrf.mxu0
      %1038 = vmatprep.mubr.bf16.mxu0 0
      %1039 = vmatmul.mubr.bf16.gmra.mxu0 %v933
      %v1040 = vpop.f32.mrf.mxu0
      %v1041 = vadd.f32 0.0, %v1040
      %v1042 = vpop.f32.mrf.mxu0
      %v1043 = vpop.f32.mrf.mxu0
      %v1044 = vadd.f32 0.0, %v1043
      %v1045 = vpop.f32.mrf.mxu0
      %1046 = vdwg.mxu0
      %v1047 = vmul.f32 %v1017, 0.5
      %v1048 = vmul.f32 %v1020, 0.5
      %v1049 = vmul.f32 %v1025, 0.5
      %v1050 = vmul.f32 %v1028, 0.5
      %v1051 = vmul.f32 %v1033, 0.5
      %v1052 = vmul.f32 %v1036, 0.5
      %v1053 = vmul.f32 %v1041, 0.5
      %v1054 = vmul.f32 %v1044, 0.5
      %v1055 = vmul.f32 %v1017, 0.044715
      %v1056 = vmul.f32 %v1020, 0.044715
      %v1057 = vmul.f32 %v1025, 0.044715
      %v1058 = vmul.f32 %v1028, 0.044715
      %v1059 = vmul.f32 %v1033, 0.044715
      %v1060 = vmul.f32 %v1036, 0.044715
      %v1061 = vmul.f32 %v1041, 0.044715
      %v1062 = vmul.f32 %v1044, 0.044715
      %v1063 = vmul.f32 %v1055, %v1017
      %v1064 = vmul.f32 %v1056, %v1020
      %v1065 = vmul.f32 %v1057, %v1025
      %v1066 = vmul.f32 %v1058, %v1028
      %v1067 = vmul.f32 %v1059, %v1033
      %v1068 = vmul.f32 %v1060, %v1036
      %v1069 = vmul.f32 %v1061, %v1041
      %v1070 = vmul.f32 %v1062, %v1044
      %v1071 = vmul.f32 %v1063, %v1017
      %v1072 = vmul.f32 %v1064, %v1020
      %v1073 = vmul.f32 %v1065, %v1025
      %v1074 = vmul.f32 %v1066, %v1028
      %v1075 = vmul.f32 %v1067, %v1033
      %v1076 = vmul.f32 %v1068, %v1036
      %v1077 = vmul.f32 %v1069, %v1041
      %v1078 = vmul.f32 %v1070, %v1044
      %v1079 = vadd.f32 %v1017, %v1071
      %v1080 = vadd.f32 %v1020, %v1072
      %v1081 = vadd.f32 %v1025, %v1073
      %v1082 = vadd.f32 %v1028, %v1074
      %v1083 = vadd.f32 %v1033, %v1075
      %v1084 = vadd.f32 %v1036, %v1076
      %v1085 = vadd.f32 %v1041, %v1077
      %v1086 = vadd.f32 %v1044, %v1078
      %v1087 = vmul.f32 %v1079, 0.7978846
      %v1088 = vmul.f32 %v1080, 0.7978846
      %v1089 = vmul.f32 %v1081, 0.7978846
      %v1090 = vmul.f32 %v1082, 0.7978846
      %v1091 = vmul.f32 %v1083, 0.7978846
      %v1092 = vmul.f32 %v1084, 0.7978846
      %v1093 = vmul.f32 %v1085, 0.7978846
      %v1094 = vmul.f32 %v1086, 0.7978846
      %v1095 = vtanh.pop %v1087
      %v1096 = vtanh.pop %v1088
      %v1097 = vtanh.pop %v1089
      %v1098 = vtanh.pop %v1090
      %v1099 = vtanh.pop %v1091
      %v1100 = vtanh.pop %v1092
      %v1101 = vtanh.pop %v1093
      %v1102 = vtanh.pop %v1094
      %v1103 = vadd.f32 %v1095, 1.0
      %v1104 = vadd.f32 %v1096, 1.0
      %v1105 = vadd.f32 %v1097, 1.0
      %v1106 = vadd.f32 %v1098, 1.0
      %v1107 = vadd.f32 %v1099, 1.0
      %v1108 = vadd.f32 %v1100, 1.0
      %v1109 = vadd.f32 %v1101, 1.0
      %v1110 = vadd.f32 %v1102, 1.0
      %v1111 = vmul.f32 %v1047, %v1103
      %v1112 = vmul.f32 %v1048, %v1104
      %v1113 = vmul.f32 %v1049, %v1105
      %v1114 = vmul.f32 %v1050, %v1106
      %v1115 = vmul.f32 %v1051, %v1107
      %v1116 = vmul.f32 %v1052, %v1108
      %v1117 = vmul.f32 %v1053, %v1109
      %v1118 = vmul.f32 %v1054, %v1110
      %v1119 = vpack.c.bf16 %v1112, %v1111
      %v1120 = vpack.c.bf16 %v1114, %v1113
      %v1121 = vpack.c.bf16 %v1116, %v1115
      %v1122 = vpack.c.bf16 %v1118, %v1117
      %v1139 = vunpack.c.l.b16 %v725
      %v1140 = vunpack.c.l.b16 %v726
      %v1141 = vunpack.c.l.b16 %v727
      %v1142 = vunpack.c.l.b16 %v728
      %v1143 = vunpack.c.l.b16 %v729
      %v1144 = vunpack.c.l.b16 %v730
      %v1145 = vunpack.c.l.b16 %v731
      %v1146 = vunpack.c.l.b16 %v732
      %v1147 = vunpack.c.l.b16 %v733
      %v1148 = vunpack.c.l.b16 %v734
      %v1149 = vunpack.c.l.b16 %v735
      %v1150 = vunpack.c.l.b16 %v736
      %v1151 = vunpack.c.l.b16 %v737
      %v1152 = vunpack.c.l.b16 %v738
      %v1153 = vunpack.c.l.b16 %v739
      %v1154 = vunpack.c.l.b16 %v740
      %v1155 = vpack.c.b16 %v1140, %v1139
      %v1156 = vpack.c.b16 %v1142, %v1141
      %v1157 = vpack.c.b16 %v1144, %v1143
      %v1158 = vpack.c.b16 %v1146, %v1145
      %v1159 = vpack.c.b16 %v1148, %v1147
      %v1160 = vpack.c.b16 %v1150, %v1149
      %v1161 = vpack.c.b16 %v1152, %v1151
      %v1162 = vpack.c.b16 %v1154, %v1153
      %1171 = vmatprep.subr.bf16.mxu0 0
      %1172 = vmatpush1.bf16.msra.mxu0 %v1162
      %1173 = vmatprep.subr.bf16.mxu0 0
      %1174 = vmatpush1.bf16.msra.mxu0 %v1161
      %1175 = vmatprep.subr.bf16.mxu0 0
      %1176 = vmatpush1.bf16.msra.mxu0 %v1160
      %1177 = vmatprep.subr.bf16.mxu0 0
      %1178 = vmatpush1.bf16.msra.mxu0 %v1159
      %1179 = vmatprep.subr.bf16.mxu0 0
      %1180 = vmatpush1.bf16.msra.mxu0 %v1158
      %1181 = vmatprep.subr.bf16.mxu0 0
      %1182 = vmatpush1.bf16.msra.mxu0 %v1157
      %1183 = vmatprep.subr.bf16.mxu0 0
      %1184 = vmatpush1.bf16.msra.mxu0 %v1156
      %1185 = vmatprep.subr.bf16.mxu0 0
      %1186 = vmatpush1.bf16.msra.mxu0 %v1155
      %1187 = vmatprep.subr.bf16.mxu0 0
      %1188 = vmatpush2.bf16.msra.mxu0 0
      %1189 = vmatprep.subr.bf16.mxu0 0
      %1190 = vmatpush2.bf16.msra.mxu0 0
      %1191 = vmatprep.subr.bf16.mxu0 0
      %1192 = vmatpush2.bf16.msra.mxu0 0
      %1193 = vmatprep.subr.bf16.mxu0 0
      %1194 = vmatpush2.bf16.msra.mxu0 0
      %1195 = vmatprep.subr.bf16.mxu0 0
      %1196 = vmatpush2.bf16.msra.mxu0 0
      %1197 = vmatprep.subr.bf16.mxu0 0
      %1198 = vmatpush2.bf16.msra.mxu0 0
      %1199 = vmatprep.subr.bf16.mxu0 0
      %1200 = vmatpush2.bf16.msra.mxu0 0
      %1201 = vmatprep.subr.bf16.mxu0 0
      %1202 = vmatpush2.bf16.msra.mxu0 0
      %1203 = vmatprep.mubr.bf16.mxu0 0
      %1204 = vmatmul.mubr.bf16.gmra.mxu0 %v1119
      %v1205 = vpop.f32.mrf.mxu0
      %v1206 = vadd.f32 0.0, %v1205
      %v1207 = vpop.f32.mrf.mxu0
      %v1208 = vpop.f32.mrf.mxu0
      %v1209 = vadd.f32 0.0, %v1208
      %v1210 = vpop.f32.mrf.mxu0
      %1211 = vmatprep.mubr.bf16.mxu0 0
      %1212 = vmatmul.mubr.bf16.gmra.mxu0 %v1120
      %v1213 = vpop.f32.mrf.mxu0
      %v1214 = vadd.f32 0.0, %v1213
      %v1215 = vpop.f32.mrf.mxu0
      %v1216 = vpop.f32.mrf.mxu0
      %v1217 = vadd.f32 0.0, %v1216
      %v1218 = vpop.f32.mrf.mxu0
      %1219 = vmatprep.mubr.bf16.mxu0 0
      %1220 = vmatmul.mubr.bf16.gmra.mxu0 %v1121
      %v1221 = vpop.f32.mrf.mxu0
      %v1222 = vadd.f32 0.0, %v1221
      %v1223 = vpop.f32.mrf.mxu0
      %v1224 = vpop.f32.mrf.mxu0
      %v1225 = vadd.f32 0.0, %v1224
      %v1226 = vpop.f32.mrf.mxu0
      %1227 = vmatprep.mubr.bf16.mxu0 0
      %1228 = vmatmul.mubr.bf16.gmra.mxu0 %v1122
      %v1229 = vpop.f32.mrf.mxu0
      %v1230 = vadd.f32 0.0, %v1229
      %v1231 = vpop.f32.mrf.mxu0
      %v1232 = vpop.f32.mrf.mxu0
      %v1233 = vadd.f32 0.0, %v1232
      %v1234 = vpop.f32.mrf.mxu0
      %1235 = vdwg.mxu0
      %s1236 = scalar_lea.vmem %s3, 64
      %v1237 = vld [vmem:[%s1236] sm:$0xf]
      %v1238 = vld [vmem:[%s1236 + $0x4] sm:$0xf]
      %v1239 = vld [vmem:[%s1236 + $0x8] sm:$0xf]
      %v1240 = vld [vmem:[%s1236 + $0xc] sm:$0xf]
      %v1241 = vld [vmem:[%s1236 + $0x10] sm:$0xf]
      %v1242 = vld [vmem:[%s1236 + $0x14] sm:$0xf]
      %v1243 = vld [vmem:[%s1236 + $0x18] sm:$0xf]
      %v1244 = vld [vmem:[%s1236 + $0x1c] sm:$0xf]
      %v1245 = vld [vmem:[%s1236 + $0x20] sm:$0xf]
      %v1246 = vld [vmem:[%s1236 + $0x24] sm:$0xf]
      %v1247 = vld [vmem:[%s1236 + $0x28] sm:$0xf]
      %v1248 = vld [vmem:[%s1236 + $0x2c] sm:$0xf]
      %v1249 = vld [vmem:[%s1236 + $0x30] sm:$0xf]
      %v1250 = vld [vmem:[%s1236 + $0x34] sm:$0xf]
      %v1251 = vld [vmem:[%s1236 + $0x38] sm:$0xf]
      %v1252 = vld [vmem:[%s1236 + $0x3c] sm:$0xf]
      %s1253 = scalar_lea.vmem %s4, 64
      %v1254 = vld [vmem:[%s1253] sm:$0xf]
      %v1255 = vld [vmem:[%s1253 + $0x4] sm:$0xf]
      %v1256 = vld [vmem:[%s1253 + $0x8] sm:$0xf]
      %v1257 = vld [vmem:[%s1253 + $0xc] sm:$0xf]
      %v1258 = vld [vmem:[%s1253 + $0x10] sm:$0xf]
      %v1259 = vld [vmem:[%s1253 + $0x14] sm:$0xf]
      %v1260 = vld [vmem:[%s1253 + $0x18] sm:$0xf]
      %v1261 = vld [vmem:[%s1253 + $0x1c] sm:$0xf]
      %v1262 = vld [vmem:[%s1253 + $0x20] sm:$0xf]
      %v1263 = vld [vmem:[%s1253 + $0x24] sm:$0xf]
      %v1264 = vld [vmem:[%s1253 + $0x28] sm:$0xf]
      %v1265 = vld [vmem:[%s1253 + $0x2c] sm:$0xf]
      %v1266 = vld [vmem:[%s1253 + $0x30] sm:$0xf]
      %v1267 = vld [vmem:[%s1253 + $0x34] sm:$0xf]
      %v1268 = vld [vmem:[%s1253 + $0x38] sm:$0xf]
      %v1269 = vld [vmem:[%s1253 + $0x3c] sm:$0xf]
      %s1270 = scalar_lea.vmem %s5, 64
      %v1271 = vld [vmem:[%s1270] sm:$0xf]
      %v1272 = vld [vmem:[%s1270 + $0x4] sm:$0xf]
      %v1273 = vld [vmem:[%s1270 + $0x8] sm:$0xf]
      %v1274 = vld [vmem:[%s1270 + $0xc] sm:$0xf]
      %v1275 = vld [vmem:[%s1270 + $0x10] sm:$0xf]
      %v1276 = vld [vmem:[%s1270 + $0x14] sm:$0xf]
      %v1277 = vld [vmem:[%s1270 + $0x18] sm:$0xf]
      %v1278 = vld [vmem:[%s1270 + $0x1c] sm:$0xf]
      %v1279 = vld [vmem:[%s1270 + $0x20] sm:$0xf]
      %v1280 = vld [vmem:[%s1270 + $0x24] sm:$0xf]
      %v1281 = vld [vmem:[%s1270 + $0x28] sm:$0xf]
      %v1282 = vld [vmem:[%s1270 + $0x2c] sm:$0xf]
      %v1283 = vld [vmem:[%s1270 + $0x30] sm:$0xf]
      %v1284 = vld [vmem:[%s1270 + $0x34] sm:$0xf]
      %v1285 = vld [vmem:[%s1270 + $0x38] sm:$0xf]
      %v1286 = vld [vmem:[%s1270 + $0x3c] sm:$0xf]
      %v1287 = vpack.c.bf16 %v1209, %v1206
      %v1288 = vpack.c.bf16 %v1217, %v1214
      %v1289 = vpack.c.bf16 %v1225, %v1222
      %v1290 = vpack.c.bf16 %v1233, %v1230
      %v1307 = vunpack.c.l.b16 %v1237
      %v1308 = vunpack.c.l.b16 %v1238
      %v1309 = vunpack.c.l.b16 %v1239
      %v1310 = vunpack.c.l.b16 %v1240
      %v1311 = vunpack.c.l.b16 %v1241
      %v1312 = vunpack.c.l.b16 %v1242
      %v1313 = vunpack.c.l.b16 %v1243
      %v1314 = vunpack.c.l.b16 %v1244
      %v1315 = vunpack.c.l.b16 %v1245
      %v1316 = vunpack.c.l.b16 %v1246
      %v1317 = vunpack.c.l.b16 %v1247
      %v1318 = vunpack.c.l.b16 %v1248
      %v1319 = vunpack.c.l.b16 %v1249
      %v1320 = vunpack.c.l.b16 %v1250
      %v1321 = vunpack.c.l.b16 %v1251
      %v1322 = vunpack.c.l.b16 %v1252
      %v1323 = vpack.c.b16 %v1308, %v1307
      %v1324 = vpack.c.b16 %v1310, %v1309
      %v1325 = vpack.c.b16 %v1312, %v1311
      %v1326 = vpack.c.b16 %v1314, %v1313
      %v1327 = vpack.c.b16 %v1316, %v1315
      %v1328 = vpack.c.b16 %v1318, %v1317
      %v1329 = vpack.c.b16 %v1320, %v1319
      %v1330 = vpack.c.b16 %v1322, %v1321
      %1339 = vmatprep.subr.bf16.mxu0 0
      %1340 = vmatpush1.bf16.msra.mxu0 %v1330
      %1341 = vmatprep.subr.bf16.mxu0 0
      %1342 = vmatpush1.bf16.msra.mxu0 %v1329
      %1343 = vmatprep.subr.bf16.mxu0 0
      %1344 = vmatpush1.bf16.msra.mxu0 %v1328
      %1345 = vmatprep.subr.bf16.mxu0 0
      %1346 = vmatpush1.bf16.msra.mxu0 %v1327
      %1347 = vmatprep.subr.bf16.mxu0 0
      %1348 = vmatpush1.bf16.msra.mxu0 %v1326
      %1349 = vmatprep.subr.bf16.mxu0 0
      %1350 = vmatpush1.bf16.msra.mxu0 %v1325
      %1351 = vmatprep.subr.bf16.mxu0 0
      %1352 = vmatpush1.bf16.msra.mxu0 %v1324
      %1353 = vmatprep.subr.bf16.mxu0 0
      %1354 = vmatpush1.bf16.msra.mxu0 %v1323
      %1355 = vmatprep.subr.bf16.mxu0 0
      %1356 = vmatpush2.bf16.msra.mxu0 0
      %1357 = vmatprep.subr.bf16.mxu0 0
      %1358 = vmatpush2.bf16.msra.mxu0 0
      %1359 = vmatprep.subr.bf16.mxu0 0
      %1360 = vmatpush2.bf16.msra.mxu0 0
      %1361 = vmatprep.subr.bf16.mxu0 0
      %1362 = vmatpush2.bf16.msra.mxu0 0
      %1363 = vmatprep.subr.bf16.mxu0 0
      %1364 = vmatpush2.bf16.msra.mxu0 0
      %1365 = vmatprep.subr.bf16.mxu0 0
      %1366 = vmatpush2.bf16.msra.mxu0 0
      %1367 = vmatprep.subr.bf16.mxu0 0
      %1368 = vmatpush2.bf16.msra.mxu0 0
      %1369 = vmatprep.subr.bf16.mxu0 0
      %1370 = vmatpush2.bf16.msra.mxu0 0
      %1371 = vmatprep.mubr.bf16.mxu0 0
      %1372 = vmatmul.mubr.bf16.gmra.mxu0 %v1287
      %v1373 = vpop.f32.mrf.mxu0
      %v1374 = vadd.f32 0.0, %v1373
      %v1375 = vpop.f32.mrf.mxu0
      %v1376 = vpop.f32.mrf.mxu0
      %v1377 = vadd.f32 0.0, %v1376
      %v1378 = vpop.f32.mrf.mxu0
      %1379 = vmatprep.mubr.bf16.mxu0 0
      %1380 = vmatmul.mubr.bf16.gmra.mxu0 %v1288
      %v1381 = vpop.f32.mrf.mxu0
      %v1382 = vadd.f32 0.0, %v1381
      %v1383 = vpop.f32.mrf.mxu0
      %v1384 = vpop.f32.mrf.mxu0
      %v1385 = vadd.f32 0.0, %v1384
      %v1386 = vpop.f32.mrf.mxu0
      %1387 = vmatprep.mubr.bf16.mxu0 0
      %1388 = vmatmul.mubr.bf16.gmra.mxu0 %v1289
      %v1389 = vpop.f32.mrf.mxu0
      %v1390 = vadd.f32 0.0, %v1389
      %v1391 = vpop.f32.mrf.mxu0
      %v1392 = vpop.f32.mrf.mxu0
      %v1393 = vadd.f32 0.0, %v1392
      %v1394 = vpop.f32.mrf.mxu0
      %1395 = vmatprep.mubr.bf16.mxu0 0
      %1396 = vmatmul.mubr.bf16.gmra.mxu0 %v1290
      %v1397 = vpop.f32.mrf.mxu0
      %v1398 = vadd.f32 0.0, %v1397
      %v1399 = vpop.f32.mrf.mxu0
      %v1400 = vpop.f32.mrf.mxu0
      %v1401 = vadd.f32 0.0, %v1400
      %v1402 = vpop.f32.mrf.mxu0
      %1403 = vdwg.mxu0
      %v1404 = vmul.f32 %v1374, 0.5
      %v1405 = vmul.f32 %v1377, 0.5
      %v1406 = vmul.f32 %v1382, 0.5
      %v1407 = vmul.f32 %v1385, 0.5
      %v1408 = vmul.f32 %v1390, 0.5
      %v1409 = vmul.f32 %v1393, 0.5
      %v1410 = vmul.f32 %v1398, 0.5
      %v1411 = vmul.f32 %v1401, 0.5
      %v1412 = vmul.f32 %v1374, 0.044715
      %v1413 = vmul.f32 %v1377, 0.044715
      %v1414 = vmul.f32 %v1382, 0.044715
      %v1415 = vmul.f32 %v1385, 0.044715
      %v1416 = vmul.f32 %v1390, 0.044715
      %v1417 = vmul.f32 %v1393, 0.044715
      %v1418 = vmul.f32 %v1398, 0.044715
      %v1419 = vmul.f32 %v1401, 0.044715
      %v1420 = vmul.f32 %v1412, %v1374
      %v1421 = vmul.f32 %v1413, %v1377
      %v1422 = vmul.f32 %v1414, %v1382
      %v1423 = vmul.f32 %v1415, %v1385
      %v1424 = vmul.f32 %v1416, %v1390
      %v1425 = vmul.f32 %v1417, %v1393
      %v1426 = vmul.f32 %v1418, %v1398
      %v1427 = vmul.f32 %v1419, %v1401
      %v1428 = vmul.f32 %v1420, %v1374
      %v1429 = vmul.f32 %v1421, %v1377
      %v1430 = vmul.f32 %v1422, %v1382
      %v1431 = vmul.f32 %v1423, %v1385
      %v1432 = vmul.f32 %v1424, %v1390
      %v1433 = vmul.f32 %v1425, %v1393
      %v1434 = vmul.f32 %v1426, %v1398
      %v1435 = vmul.f32 %v1427, %v1401
      %v1436 = vadd.f32 %v1374, %v1428
      %v1437 = vadd.f32 %v1377, %v1429
      %v1438 = vadd.f32 %v1382, %v1430
      %v1439 = vadd.f32 %v1385, %v1431
      %v1440 = vadd.f32 %v1390, %v1432
      %v1441 = vadd.f32 %v1393, %v1433
      %v1442 = vadd.f32 %v1398, %v1434
      %v1443 = vadd.f32 %v1401, %v1435
      %v1444 = vmul.f32 %v1436, 0.7978846
      %v1445 = vmul.f32 %v1437, 0.7978846
      %v1446 = vmul.f32 %v1438, 0.7978846
      %v1447 = vmul.f32 %v1439, 0.7978846
      %v1448 = vmul.f32 %v1440, 0.7978846
      %v1449 = vmul.f32 %v1441, 0.7978846
      %v1450 = vmul.f32 %v1442, 0.7978846
      %v1451 = vmul.f32 %v1443, 0.7978846
      %v1452 = vtanh.pop %v1444
      %v1453 = vtanh.pop %v1445
      %v1454 = vtanh.pop %v1446
      %v1455 = vtanh.pop %v1447
      %v1456 = vtanh.pop %v1448
      %v1457 = vtanh.pop %v1449
      %v1458 = vtanh.pop %v1450
      %v1459 = vtanh.pop %v1451
      %v1460 = vadd.f32 %v1452, 1.0
      %v1461 = vadd.f32 %v1453, 1.0
      %v1462 = vadd.f32 %v1454, 1.0
      %v1463 = vadd.f32 %v1455, 1.0
      %v1464 = vadd.f32 %v1456, 1.0
      %v1465 = vadd.f32 %v1457, 1.0
      %v1466 = vadd.f32 %v1458, 1.0
      %v1467 = vadd.f32 %v1459, 1.0
      %v1468 = vmul.f32 %v1404, %v1460
      %v1469 = vmul.f32 %v1405, %v1461
      %v1470 = vmul.f32 %v1406, %v1462
      %v1471 = vmul.f32 %v1407, %v1463
      %v1472 = vmul.f32 %v1408, %v1464
      %v1473 = vmul.f32 %v1409, %v1465
      %v1474 = vmul.f32 %v1410, %v1466
      %v1475 = vmul.f32 %v1411, %v1467
      %v1476 = vpack.c.bf16 %v1469, %v1468
      %v1477 = vpack.c.bf16 %v1471, %v1470
      %v1478 = vpack.c.bf16 %v1473, %v1472
      %v1479 = vpack.c.bf16 %v1475, %v1474
      %v1496 = vunpack.c.l.b16 %v1254
      %v1497 = vunpack.c.l.b16 %v1255
      %v1498 = vunpack.c.l.b16 %v1256
      %v1499 = vunpack.c.l.b16 %v1257
      %v1500 = vunpack.c.l.b16 %v1258
      %v1501 = vunpack.c.l.b16 %v1259
      %v1502 = vunpack.c.l.b16 %v1260
      %v1503 = vunpack.c.l.b16 %v1261
      %v1504 = vunpack.c.l.b16 %v1262
      %v1505 = vunpack.c.l.b16 %v1263
      %v1506 = vunpack.c.l.b16 %v1264
      %v1507 = vunpack.c.l.b16 %v1265
      %v1508 = vunpack.c.l.b16 %v1266
      %v1509 = vunpack.c.l.b16 %v1267
      %v1510 = vunpack.c.l.b16 %v1268
      %v1511 = vunpack.c.l.b16 %v1269
      %v1512 = vpack.c.b16 %v1497, %v1496
      %v1513 = vpack.c.b16 %v1499, %v1498
      %v1514 = vpack.c.b16 %v1501, %v1500
      %v1515 = vpack.c.b16 %v1503, %v1502
      %v1516 = vpack.c.b16 %v1505, %v1504
      %v1517 = vpack.c.b16 %v1507, %v1506
      %v1518 = vpack.c.b16 %v1509, %v1508
      %v1519 = vpack.c.b16 %v1511, %v1510
      %1528 = vmatprep.subr.bf16.mxu0 0
      %1529 = vmatpush1.bf16.msra.mxu0 %v1519
      %1530 = vmatprep.subr.bf16.mxu0 0
      %1531 = vmatpush1.bf16.msra.mxu0 %v1518
      %1532 = vmatprep.subr.bf16.mxu0 0
      %1533 = vmatpush1.bf16.msra.mxu0 %v1517
      %1534 = vmatprep.subr.bf16.mxu0 0
      %1535 = vmatpush1.bf16.msra.mxu0 %v1516
      %1536 = vmatprep.subr.bf16.mxu0 0
      %1537 = vmatpush1.bf16.msra.mxu0 %v1515
      %1538 = vmatprep.subr.bf16.mxu0 0
      %1539 = vmatpush1.bf16.msra.mxu0 %v1514
      %1540 = vmatprep.subr.bf16.mxu0 0
      %1541 = vmatpush1.bf16.msra.mxu0 %v1513
      %1542 = vmatprep.subr.bf16.mxu0 0
      %1543 = vmatpush1.bf16.msra.mxu0 %v1512
      %1544 = vmatprep.subr.bf16.mxu0 0
      %1545 = vmatpush2.bf16.msra.mxu0 0
      %1546 = vmatprep.subr.bf16.mxu0 0
      %1547 = vmatpush2.bf16.msra.mxu0 0
      %1548 = vmatprep.subr.bf16.mxu0 0
      %1549 = vmatpush2.bf16.msra.mxu0 0
      %1550 = vmatprep.subr.bf16.mxu0 0
      %1551 = vmatpush2.bf16.msra.mxu0 0
      %1552 = vmatprep.subr.bf16.mxu0 0
      %1553 = vmatpush2.bf16.msra.mxu0 0
      %1554 = vmatprep.subr.bf16.mxu0 0
      %1555 = vmatpush2.bf16.msra.mxu0 0
      %1556 = vmatprep.subr.bf16.mxu0 0
      %1557 = vmatpush2.bf16.msra.mxu0 0
      %1558 = vmatprep.subr.bf16.mxu0 0
      %1559 = vmatpush2.bf16.msra.mxu0 0
      %1560 = vmatprep.mubr.bf16.mxu0 0
      %1561 = vmatmul.mubr.bf16.gmra.mxu0 %v1476
      %v1562 = vpop.f32.mrf.mxu0
      %v1563 = vadd.f32 0.0, %v1562
      %v1564 = vpop.f32.mrf.mxu0
      %v1565 = vpop.f32.mrf.mxu0
      %v1566 = vadd.f32 0.0, %v1565
      %v1567 = vpop.f32.mrf.mxu0
      %1568 = vmatprep.mubr.bf16.mxu0 0
      %1569 = vmatmul.mubr.bf16.gmra.mxu0 %v1477
      %v1570 = vpop.f32.mrf.mxu0
      %v1571 = vadd.f32 0.0, %v1570
      %v1572 = vpop.f32.mrf.mxu0
      %v1573 = vpop.f32.mrf.mxu0
      %v1574 = vadd.f32 0.0, %v1573
      %v1575 = vpop.f32.mrf.mxu0
      %1576 = vmatprep.mubr.bf16.mxu0 0
      %1577 = vmatmul.mubr.bf16.gmra.mxu0 %v1478
      %v1578 = vpop.f32.mrf.mxu0
      %v1579 = vadd.f32 0.0, %v1578
      %v1580 = vpop.f32.mrf.mxu0
      %v1581 = vpop.f32.mrf.mxu0
      %v1582 = vadd.f32 0.0, %v1581
      %v1583 = vpop.f32.mrf.mxu0
      %1584 = vmatprep.mubr.bf16.mxu0 0
      %1585 = vmatmul.mubr.bf16.gmra.mxu0 %v1479
      %v1586 = vpop.f32.mrf.mxu0
      %v1587 = vadd.f32 0.0, %v1586
      %v1588 = vpop.f32.mrf.mxu0
      %v1589 = vpop.f32.mrf.mxu0
      %v1590 = vadd.f32 0.0, %v1589
      %v1591 = vpop.f32.mrf.mxu0
      %1592 = vdwg.mxu0
      %v1593 = vmul.f32 %v1563, 0.5
      %v1594 = vmul.f32 %v1566, 0.5
      %v1595 = vmul.f32 %v1571, 0.5
      %v1596 = vmul.f32 %v1574, 0.5
      %v1597 = vmul.f32 %v1579, 0.5
      %v1598 = vmul.f32 %v1582, 0.5
      %v1599 = vmul.f32 %v1587, 0.5
      %v1600 = vmul.f32 %v1590, 0.5
      %v1601 = vmul.f32 %v1563, 0.044715
      %v1602 = vmul.f32 %v1566, 0.044715
      %v1603 = vmul.f32 %v1571, 0.044715
      %v1604 = vmul.f32 %v1574, 0.044715
      %v1605 = vmul.f32 %v1579, 0.044715
      %v1606 = vmul.f32 %v1582, 0.044715
      %v1607 = vmul.f32 %v1587, 0.044715
      %v1608 = vmul.f32 %v1590, 0.044715
      %v1609 = vmul.f32 %v1601, %v1563
      %v1610 = vmul.f32 %v1602, %v1566
      %v1611 = vmul.f32 %v1603, %v1571
      %v1612 = vmul.f32 %v1604, %v1574
      %v1613 = vmul.f32 %v1605, %v1579
      %v1614 = vmul.f32 %v1606, %v1582
      %v1615 = vmul.f32 %v1607, %v1587
      %v1616 = vmul.f32 %v1608, %v1590
      %v1617 = vmul.f32 %v1609, %v1563
      %v1618 = vmul.f32 %v1610, %v1566
      %v1619 = vmul.f32 %v1611, %v1571
      %v1620 = vmul.f32 %v1612, %v1574
      %v1621 = vmul.f32 %v1613, %v1579
      %v1622 = vmul.f32 %v1614, %v1582
      %v1623 = vmul.f32 %v1615, %v1587
      %v1624 = vmul.f32 %v1616, %v1590
      %v1625 = vadd.f32 %v1563, %v1617
      %v1626 = vadd.f32 %v1566, %v1618
      %v1627 = vadd.f32 %v1571, %v1619
      %v1628 = vadd.f32 %v1574, %v1620
      %v1629 = vadd.f32 %v1579, %v1621
      %v1630 = vadd.f32 %v1582, %v1622
      %v1631 = vadd.f32 %v1587, %v1623
      %v1632 = vadd.f32 %v1590, %v1624
      %v1633 = vmul.f32 %v1625, 0.7978846
      %v1634 = vmul.f32 %v1626, 0.7978846
      %v1635 = vmul.f32 %v1627, 0.7978846
      %v1636 = vmul.f32 %v1628, 0.7978846
      %v1637 = vmul.f32 %v1629, 0.7978846
      %v1638 = vmul.f32 %v1630, 0.7978846
      %v1639 = vmul.f32 %v1631, 0.7978846
      %v1640 = vmul.f32 %v1632, 0.7978846
      %v1641 = vtanh.pop %v1633
      %v1642 = vtanh.pop %v1634
      %v1643 = vtanh.pop %v1635
      %v1644 = vtanh.pop %v1636
      %v1645 = vtanh.pop %v1637
      %v1646 = vtanh.pop %v1638
      %v1647 = vtanh.pop %v1639
      %v1648 = vtanh.pop %v1640
      %v1649 = vadd.f32 %v1641, 1.0
      %v1650 = vadd.f32 %v1642, 1.0
      %v1651 = vadd.f32 %v1643, 1.0
      %v1652 = vadd.f32 %v1644, 1.0
      %v1653 = vadd.f32 %v1645, 1.0
      %v1654 = vadd.f32 %v1646, 1.0
      %v1655 = vadd.f32 %v1647, 1.0
      %v1656 = vadd.f32 %v1648, 1.0
      %v1657 = vmul.f32 %v1593, %v1649
      %v1658 = vmul.f32 %v1594, %v1650
      %v1659 = vmul.f32 %v1595, %v1651
      %v1660 = vmul.f32 %v1596, %v1652
      %v1661 = vmul.f32 %v1597, %v1653
      %v1662 = vmul.f32 %v1598, %v1654
      %v1663 = vmul.f32 %v1599, %v1655
      %v1664 = vmul.f32 %v1600, %v1656
      %v1665 = vpack.c.bf16 %v1658, %v1657
      %v1666 = vpack.c.bf16 %v1660, %v1659
      %v1667 = vpack.c.bf16 %v1662, %v1661
      %v1668 = vpack.c.bf16 %v1664, %v1663
      %v1685 = vunpack.c.l.b16 %v1271
      %v1686 = vunpack.c.l.b16 %v1272
      %v1687 = vunpack.c.l.b16 %v1273
      %v1688 = vunpack.c.l.b16 %v1274
      %v1689 = vunpack.c.l.b16 %v1275
      %v1690 = vunpack.c.l.b16 %v1276
      %v1691 = vunpack.c.l.b16 %v1277
      %v1692 = vunpack.c.l.b16 %v1278
      %v1693 = vunpack.c.l.b16 %v1279
      %v1694 = vunpack.c.l.b16 %v1280
      %v1695 = vunpack.c.l.b16 %v1281
      %v1696 = vunpack.c.l.b16 %v1282
      %v1697 = vunpack.c.l.b16 %v1283
      %v1698 = vunpack.c.l.b16 %v1284
      %v1699 = vunpack.c.l.b16 %v1285
      %v1700 = vunpack.c.l.b16 %v1286
      %v1701 = vpack.c.b16 %v1686, %v1685
      %v1702 = vpack.c.b16 %v1688, %v1687
      %v1703 = vpack.c.b16 %v1690, %v1689
      %v1704 = vpack.c.b16 %v1692, %v1691
      %v1705 = vpack.c.b16 %v1694, %v1693
      %v1706 = vpack.c.b16 %v1696, %v1695
      %v1707 = vpack.c.b16 %v1698, %v1697
      %v1708 = vpack.c.b16 %v1700, %v1699
      %1717 = vmatprep.subr.bf16.mxu0 0
      %1718 = vmatpush1.bf16.msra.mxu0 %v1708
      %1719 = vmatprep.subr.bf16.mxu0 0
      %1720 = vmatpush1.bf16.msra.mxu0 %v1707
      %1721 = vmatprep.subr.bf16.mxu0 0
      %1722 = vmatpush1.bf16.msra.mxu0 %v1706
      %1723 = vmatprep.subr.bf16.mxu0 0
      %1724 = vmatpush1.bf16.msra.mxu0 %v1705
      %1725 = vmatprep.subr.bf16.mxu0 0
      %1726 = vmatpush1.bf16.msra.mxu0 %v1704
      %1727 = vmatprep.subr.bf16.mxu0 0
      %1728 = vmatpush1.bf16.msra.mxu0 %v1703
      %1729 = vmatprep.subr.bf16.mxu0 0
      %1730 = vmatpush1.bf16.msra.mxu0 %v1702
      %1731 = vmatprep.subr.bf16.mxu0 0
      %1732 = vmatpush1.bf16.msra.mxu0 %v1701
      %1733 = vmatprep.subr.bf16.mxu0 0
      %1734 = vmatpush2.bf16.msra.mxu0 0
      %1735 = vmatprep.subr.bf16.mxu0 0
      %1736 = vmatpush2.bf16.msra.mxu0 0
      %1737 = vmatprep.subr.bf16.mxu0 0
      %1738 = vmatpush2.bf16.msra.mxu0 0
      %1739 = vmatprep.subr.bf16.mxu0 0
      %1740 = vmatpush2.bf16.msra.mxu0 0
      %1741 = vmatprep.subr.bf16.mxu0 0
      %1742 = vmatpush2.bf16.msra.mxu0 0
      %1743 = vmatprep.subr.bf16.mxu0 0
      %1744 = vmatpush2.bf16.msra.mxu0 0
      %1745 = vmatprep.subr.bf16.mxu0 0
      %1746 = vmatpush2.bf16.msra.mxu0 0
      %1747 = vmatprep.subr.bf16.mxu0 0
      %1748 = vmatpush2.bf16.msra.mxu0 0
      %1749 = vmatprep.mubr.bf16.mxu0 0
      %1750 = vmatmul.mubr.bf16.gmra.mxu0 %v1665
      %v1751 = vpop.f32.mrf.mxu0
      %v1752 = vadd.f32 0.0, %v1751
      %v1753 = vpop.f32.mrf.mxu0
      %v1754 = vpop.f32.mrf.mxu0
      %v1755 = vadd.f32 0.0, %v1754
      %v1756 = vpop.f32.mrf.mxu0
      %1757 = vmatprep.mubr.bf16.mxu0 0
      %1758 = vmatmul.mubr.bf16.gmra.mxu0 %v1666
      %v1759 = vpop.f32.mrf.mxu0
      %v1760 = vadd.f32 0.0, %v1759
      %v1761 = vpop.f32.mrf.mxu0
      %v1762 = vpop.f32.mrf.mxu0
      %v1763 = vadd.f32 0.0, %v1762
      %v1764 = vpop.f32.mrf.mxu0
      %1765 = vmatprep.mubr.bf16.mxu0 0
      %1766 = vmatmul.mubr.bf16.gmra.mxu0 %v1667
      %v1767 = vpop.f32.mrf.mxu0
      %v1768 = vadd.f32 0.0, %v1767
      %v1769 = vpop.f32.mrf.mxu0
      %v1770 = vpop.f32.mrf.mxu0
      %v1771 = vadd.f32 0.0, %v1770
      %v1772 = vpop.f32.mrf.mxu0
      %1773 = vmatprep.mubr.bf16.mxu0 0
      %1774 = vmatmul.mubr.bf16.gmra.mxu0 %v1668
      %v1775 = vpop.f32.mrf.mxu0
      %v1776 = vadd.f32 0.0, %v1775
      %v1777 = vpop.f32.mrf.mxu0
      %v1778 = vpop.f32.mrf.mxu0
      %v1779 = vadd.f32 0.0, %v1778
      %v1780 = vpop.f32.mrf.mxu0
      %1781 = vdwg.mxu0
      %v1782 = vpack.c.bf16 %v1752, %v1752
      %v1783 = vld [vmem:[%s6] sm:$0xf]
      %v1784 = vld [vmem:[%s6 + $0x4] sm:$0xf]
      %v1785 = vld [vmem:[%s6 + $0x8] sm:$0xf]
      %v1786 = vld [vmem:[%s6 + $0xc] sm:$0xf]
      %v1787 = vld [vmem:[%s6 + $0x10] sm:$0xf]
      %v1788 = vld [vmem:[%s6 + $0x14] sm:$0xf]
      %v1789 = vld [vmem:[%s6 + $0x18] sm:$0xf]
      %v1790 = vld [vmem:[%s6 + $0x1c] sm:$0xf]
      %v1791 = vld [vmem:[%s6 + $0x20] sm:$0xf]
      %v1792 = vld [vmem:[%s6 + $0x24] sm:$0xf]
      %v1793 = vld [vmem:[%s6 + $0x28] sm:$0xf]
      %v1794 = vld [vmem:[%s6 + $0x2c] sm:$0xf]
      %v1795 = vld [vmem:[%s6 + $0x30] sm:$0xf]
      %v1796 = vld [vmem:[%s6 + $0x34] sm:$0xf]
      %v1797 = vld [vmem:[%s6 + $0x38] sm:$0xf]
      %v1798 = vld [vmem:[%s6 + $0x3c] sm:$0xf]
      %v1799 = vpack.c.bf16 %v1755, %v1755
      %s1800 = scalar_lea.vmem %s6, 64
      %v1801 = vld [vmem:[%s1800] sm:$0xf]
      %v1802 = vld [vmem:[%s1800 + $0x4] sm:$0xf]
      %v1803 = vld [vmem:[%s1800 + $0x8] sm:$0xf]
      %v1804 = vld [vmem:[%s1800 + $0xc] sm:$0xf]
      %v1805 = vld [vmem:[%s1800 + $0x10] sm:$0xf]
      %v1806 = vld [vmem:[%s1800 + $0x14] sm:$0xf]
      %v1807 = vld [vmem:[%s1800 + $0x18] sm:$0xf]
      %v1808 = vld [vmem:[%s1800 + $0x1c] sm:$0xf]
      %v1809 = vld [vmem:[%s1800 + $0x20] sm:$0xf]
      %v1810 = vld [vmem:[%s1800 + $0x24] sm:$0xf]
      %v1811 = vld [vmem:[%s1800 + $0x28] sm:$0xf]
      %v1812 = vld [vmem:[%s1800 + $0x2c] sm:$0xf]
      %v1813 = vld [vmem:[%s1800 + $0x30] sm:$0xf]
      %v1814 = vld [vmem:[%s1800 + $0x34] sm:$0xf]
      %v1815 = vld [vmem:[%s1800 + $0x38] sm:$0xf]
      %v1816 = vld [vmem:[%s1800 + $0x3c] sm:$0xf]
      %v1833 = vunpack.c.l.b16 %v1801
      %v1834 = vunpack.c.l.b16 %v1802
      %v1835 = vunpack.c.l.b16 %v1803
      %v1836 = vunpack.c.l.b16 %v1804
      %v1837 = vunpack.c.l.b16 %v1805
      %v1838 = vunpack.c.l.b16 %v1806
      %v1839 = vunpack.c.l.b16 %v1807
      %v1840 = vunpack.c.l.b16 %v1808
      %v1841 = vunpack.c.l.b16 %v1809
      %v1842 = vunpack.c.l.b16 %v1810
      %v1843 = vunpack.c.l.b16 %v1811
      %v1844 = vunpack.c.l.b16 %v1812
      %v1845 = vunpack.c.l.b16 %v1813
      %v1846 = vunpack.c.l.b16 %v1814
      %v1847 = vunpack.c.l.b16 %v1815
      %v1848 = vunpack.c.l.b16 %v1816
      %v1849 = vpack.c.b16 %v1834, %v1833
      %v1850 = vpack.c.b16 %v1836, %v1835
      %v1851 = vpack.c.b16 %v1838, %v1837
      %v1852 = vpack.c.b16 %v1840, %v1839
      %v1853 = vpack.c.b16 %v1842, %v1841
      %v1854 = vpack.c.b16 %v1844, %v1843
      %v1855 = vpack.c.b16 %v1846, %v1845
      %v1856 = vpack.c.b16 %v1848, %v1847
      %1865 = vmatprep.subr.bf16.mxu0 0
      %1866 = vmatpush1.bf16.msra.mxu0 %v1856
      %1867 = vmatprep.subr.bf16.mxu0 0
      %1868 = vmatpush1.bf16.msra.mxu0 %v1855
      %1869 = vmatprep.subr.bf16.mxu0 0
      %1870 = vmatpush1.bf16.msra.mxu0 %v1854
      %1871 = vmatprep.subr.bf16.mxu0 0
      %1872 = vmatpush1.bf16.msra.mxu0 %v1853
      %1873 = vmatprep.subr.bf16.mxu0 0
      %1874 = vmatpush1.bf16.msra.mxu0 %v1852
      %1875 = vmatprep.subr.bf16.mxu0 0
      %1876 = vmatpush1.bf16.msra.mxu0 %v1851
      %1877 = vmatprep.subr.bf16.mxu0 0
      %1878 = vmatpush1.bf16.msra.mxu0 %v1850
      %1879 = vmatprep.subr.bf16.mxu0 0
      %1880 = vmatpush1.bf16.msra.mxu0 %v1849
      %1881 = vmatprep.subr.bf16.mxu0 0
      %1882 = vmatpush2.bf16.msra.mxu0 0
      %1883 = vmatprep.subr.bf16.mxu0 0
      %1884 = vmatpush2.bf16.msra.mxu0 0
      %1885 = vmatprep.subr.bf16.mxu0 0
      %1886 = vmatpush2.bf16.msra.mxu0 0
      %1887 = vmatprep.subr.bf16.mxu0 0
      %1888 = vmatpush2.bf16.msra.mxu0 0
      %1889 = vmatprep.subr.bf16.mxu0 0
      %1890 = vmatpush2.bf16.msra.mxu0 0
      %1891 = vmatprep.subr.bf16.mxu0 0
      %1892 = vmatpush2.bf16.msra.mxu0 0
      %1893 = vmatprep.subr.bf16.mxu0 0
      %1894 = vmatpush2.bf16.msra.mxu0 0
      %1895 = vmatprep.subr.bf16.mxu0 0
      %1896 = vmatpush2.bf16.msra.mxu0 0
      %1897 = vmatprep.mubr.bf16.mxu0 0
      %1898 = vmatmul.mubr.bf16.gmra.mxu0 %v1799
      %v1899 = vpop.f32.mrf.mxu0
      %v1900 = vadd.f32 0.0, %v1899
      %v1901 = vpop.f32.mrf.mxu0
      %v1902 = vpop.f32.mrf.mxu0
      %v1903 = vpop.f32.mrf.mxu0
      %1904 = vdwg.mxu0
      %v1921 = vunpack.c.l.b16 %v1783
      %v1922 = vunpack.c.l.b16 %v1784
      %v1923 = vunpack.c.l.b16 %v1785
      %v1924 = vunpack.c.l.b16 %v1786
      %v1925 = vunpack.c.l.b16 %v1787
      %v1926 = vunpack.c.l.b16 %v1788
      %v1927 = vunpack.c.l.b16 %v1789
      %v1928 = vunpack.c.l.b16 %v1790
      %v1929 = vunpack.c.l.b16 %v1791
      %v1930 = vunpack.c.l.b16 %v1792
      %v1931 = vunpack.c.l.b16 %v1793
      %v1932 = vunpack.c.l.b16 %v1794
      %v1933 = vunpack.c.l.b16 %v1795
      %v1934 = vunpack.c.l.b16 %v1796
      %v1935 = vunpack.c.l.b16 %v1797
      %v1936 = vunpack.c.l.b16 %v1798
      %v1937 = vpack.c.b16 %v1922, %v1921
      %v1938 = vpack.c.b16 %v1924, %v1923
      %v1939 = vpack.c.b16 %v1926, %v1925
      %v1940 = vpack.c.b16 %v1928, %v1927
      %v1941 = vpack.c.b16 %v1930, %v1929
      %v1942 = vpack.c.b16 %v1932, %v1931
      %v1943 = vpack.c.b16 %v1934, %v1933
      %v1944 = vpack.c.b16 %v1936, %v1935
      %1953 = vmatprep.subr.bf16.mxu0 0
      %1954 = vmatpush1.bf16.msra.mxu0 %v1944
      %1955 = vmatprep.subr.bf16.mxu0 0
      %1956 = vmatpush1.bf16.msra.mxu0 %v1943
      %1957 = vmatprep.subr.bf16.mxu0 0
      %1958 = vmatpush1.bf16.msra.mxu0 %v1942
      %1959 = vmatprep.subr.bf16.mxu0 0
      %1960 = vmatpush1.bf16.msra.mxu0 %v1941
      %1961 = vmatprep.subr.bf16.mxu0 0
      %1962 = vmatpush1.bf16.msra.mxu0 %v1940
      %1963 = vmatprep.subr.bf16.mxu0 0
      %1964 = vmatpush1.bf16.msra.mxu0 %v1939
      %1965 = vmatprep.subr.bf16.mxu0 0
      %1966 = vmatpush1.bf16.msra.mxu0 %v1938
      %1967 = vmatprep.subr.bf16.mxu0 0
      %1968 = vmatpush1.bf16.msra.mxu0 %v1937
      %1969 = vmatprep.subr.bf16.mxu0 0
      %1970 = vmatpush2.bf16.msra.mxu0 0
      %1971 = vmatprep.subr.bf16.mxu0 0
      %1972 = vmatpush2.bf16.msra.mxu0 0
      %1973 = vmatprep.subr.bf16.mxu0 0
      %1974 = vmatpush2.bf16.msra.mxu0 0
      %1975 = vmatprep.subr.bf16.mxu0 0
      %1976 = vmatpush2.bf16.msra.mxu0 0
      %1977 = vmatprep.subr.bf16.mxu0 0
      %1978 = vmatpush2.bf16.msra.mxu0 0
      %1979 = vmatprep.subr.bf16.mxu0 0
      %1980 = vmatpush2.bf16.msra.mxu0 0
      %1981 = vmatprep.subr.bf16.mxu0 0
      %1982 = vmatpush2.bf16.msra.mxu0 0
      %1983 = vmatprep.subr.bf16.mxu0 0
      %1984 = vmatpush2.bf16.msra.mxu0 0
      %1985 = vmatprep.mubr.bf16.mxu0 0
      %1986 = vmatmul.mubr.bf16.gmra.mxu0 %v1782
      %v1987 = vpop.f32.mrf.mxu0
      %v1988 = vadd.f32 %v1900, %v1987
      %v1989 = vpop.f32.mrf.mxu0
      %v1990 = vpop.f32.mrf.mxu0
      %v1991 = vpop.f32.mrf.mxu0
      %1992 = vdwg.mxu0
      %v1993 = vpack.c.bf16 %v1760, %v1760
      %s1994 = scalar_lea.vmem %s6, 128
      %v1995 = vld [vmem:[%s1994] sm:$0xf]
      %v1996 = vld [vmem:[%s1994 + $0x4] sm:$0xf]
      %v1997 = vld [vmem:[%s1994 + $0x8] sm:$0xf]
      %v1998 = vld [vmem:[%s1994 + $0xc] sm:$0xf]
      %v1999 = vld [vmem:[%s1994 + $0x10] sm:$0xf]
      %v2000 = vld [vmem:[%s1994 + $0x14] sm:$0xf]
      %v2001 = vld [vmem:[%s1994 + $0x18] sm:$0xf]
      %v2002 = vld [vmem:[%s1994 + $0x1c] sm:$0xf]
      %v2003 = vld [vmem:[%s1994 + $0x20] sm:$0xf]
      %v2004 = vld [vmem:[%s1994 + $0x24] sm:$0xf]
      %v2005 = vld [vmem:[%s1994 + $0x28] sm:$0xf]
      %v2006 = vld [vmem:[%s1994 + $0x2c] sm:$0xf]
      %v2007 = vld [vmem:[%s1994 + $0x30] sm:$0xf]
      %v2008 = vld [vmem:[%s1994 + $0x34] sm:$0xf]
      %v2009 = vld [vmem:[%s1994 + $0x38] sm:$0xf]
      %v2010 = vld [vmem:[%s1994 + $0x3c] sm:$0xf]
      %v2027 = vunpack.c.l.b16 %v1995
      %v2028 = vunpack.c.l.b16 %v1996
      %v2029 = vunpack.c.l.b16 %v1997
      %v2030 = vunpack.c.l.b16 %v1998
      %v2031 = vunpack.c.l.b16 %v1999
      %v2032 = vunpack.c.l.b16 %v2000
      %v2033 = vunpack.c.l.b16 %v2001
      %v2034 = vunpack.c.l.b16 %v2002
      %v2035 = vunpack.c.l.b16 %v2003
      %v2036 = vunpack.c.l.b16 %v2004
      %v2037 = vunpack.c.l.b16 %v2005
      %v2038 = vunpack.c.l.b16 %v2006
      %v2039 = vunpack.c.l.b16 %v2007
      %v2040 = vunpack.c.l.b16 %v2008
      %v2041 = vunpack.c.l.b16 %v2009
      %v2042 = vunpack.c.l.b16 %v2010
      %v2043 = vpack.c.b16 %v2028, %v2027
      %v2044 = vpack.c.b16 %v2030, %v2029
      %v2045 = vpack.c.b16 %v2032, %v2031
      %v2046 = vpack.c.b16 %v2034, %v2033
      %v2047 = vpack.c.b16 %v2036, %v2035
      %v2048 = vpack.c.b16 %v2038, %v2037
      %v2049 = vpack.c.b16 %v2040, %v2039
      %v2050 = vpack.c.b16 %v2042, %v2041
      %2059 = vmatprep.subr.bf16.mxu0 0
      %2060 = vmatpush1.bf16.msra.mxu0 %v2050
      %2061 = vmatprep.subr.bf16.mxu0 0
      %2062 = vmatpush1.bf16.msra.mxu0 %v2049
      %2063 = vmatprep.subr.bf16.mxu0 0
      %2064 = vmatpush1.bf16.msra.mxu0 %v2048
      %2065 = vmatprep.subr.bf16.mxu0 0
      %2066 = vmatpush1.bf16.msra.mxu0 %v2047
      %2067 = vmatprep.subr.bf16.mxu0 0
      %2068 = vmatpush1.bf16.msra.mxu0 %v2046
      %2069 = vmatprep.subr.bf16.mxu0 0
      %2070 = vmatpush1.bf16.msra.mxu0 %v2045
      %2071 = vmatprep.subr.bf16.mxu0 0
      %2072 = vmatpush1.bf16.msra.mxu0 %v2044
      %2073 = vmatprep.subr.bf16.mxu0 0
      %2074 = vmatpush1.bf16.msra.mxu0 %v2043
      %2075 = vmatprep.subr.bf16.mxu0 0
      %2076 = vmatpush2.bf16.msra.mxu0 0
      %2077 = vmatprep.subr.bf16.mxu0 0
      %2078 = vmatpush2.bf16.msra.mxu0 0
      %2079 = vmatprep.subr.bf16.mxu0 0
      %2080 = vmatpush2.bf16.msra.mxu0 0
      %2081 = vmatprep.subr.bf16.mxu0 0
      %2082 = vmatpush2.bf16.msra.mxu0 0
      %2083 = vmatprep.subr.bf16.mxu0 0
      %2084 = vmatpush2.bf16.msra.mxu0 0
      %2085 = vmatprep.subr.bf16.mxu0 0
      %2086 = vmatpush2.bf16.msra.mxu0 0
      %2087 = vmatprep.subr.bf16.mxu0 0
      %2088 = vmatpush2.bf16.msra.mxu0 0
      %2089 = vmatprep.subr.bf16.mxu0 0
      %2090 = vmatpush2.bf16.msra.mxu0 0
      %2091 = vmatprep.mubr.bf16.mxu0 0
      %2092 = vmatmul.mubr.bf16.gmra.mxu0 %v1993
      %v2093 = vpop.f32.mrf.mxu0
      %v2094 = vadd.f32 0.0, %v2093
      %v2095 = vpop.f32.mrf.mxu0
      %v2096 = vpop.f32.mrf.mxu0
      %v2097 = vpop.f32.mrf.mxu0
      %2098 = vdwg.mxu0
      %v2099 = vadd.f32 %v1988, %v2094
      %v2100 = vpack.c.bf16 %v1763, %v1763
      %s2101 = scalar_lea.vmem %s6, 192
      %v2102 = vld [vmem:[%s2101] sm:$0xf]
      %v2103 = vld [vmem:[%s2101 + $0x4] sm:$0xf]
      %v2104 = vld [vmem:[%s2101 + $0x8] sm:$0xf]
      %v2105 = vld [vmem:[%s2101 + $0xc] sm:$0xf]
      %v2106 = vld [vmem:[%s2101 + $0x10] sm:$0xf]
      %v2107 = vld [vmem:[%s2101 + $0x14] sm:$0xf]
      %v2108 = vld [vmem:[%s2101 + $0x18] sm:$0xf]
      %v2109 = vld [vmem:[%s2101 + $0x1c] sm:$0xf]
      %v2110 = vld [vmem:[%s2101 + $0x20] sm:$0xf]
      %v2111 = vld [vmem:[%s2101 + $0x24] sm:$0xf]
      %v2112 = vld [vmem:[%s2101 + $0x28] sm:$0xf]
      %v2113 = vld [vmem:[%s2101 + $0x2c] sm:$0xf]
      %v2114 = vld [vmem:[%s2101 + $0x30] sm:$0xf]
      %v2115 = vld [vmem:[%s2101 + $0x34] sm:$0xf]
      %v2116 = vld [vmem:[%s2101 + $0x38] sm:$0xf]
      %v2117 = vld [vmem:[%s2101 + $0x3c] sm:$0xf]
      %v2134 = vunpack.c.l.b16 %v2102
      %v2135 = vunpack.c.l.b16 %v2103
      %v2136 = vunpack.c.l.b16 %v2104
      %v2137 = vunpack.c.l.b16 %v2105
      %v2138 = vunpack.c.l.b16 %v2106
      %v2139 = vunpack.c.l.b16 %v2107
      %v2140 = vunpack.c.l.b16 %v2108
      %v2141 = vunpack.c.l.b16 %v2109
      %v2142 = vunpack.c.l.b16 %v2110
      %v2143 = vunpack.c.l.b16 %v2111
      %v2144 = vunpack.c.l.b16 %v2112
      %v2145 = vunpack.c.l.b16 %v2113
      %v2146 = vunpack.c.l.b16 %v2114
      %v2147 = vunpack.c.l.b16 %v2115
      %v2148 = vunpack.c.l.b16 %v2116
      %v2149 = vunpack.c.l.b16 %v2117
      %v2150 = vpack.c.b16 %v2135, %v2134
      %v2151 = vpack.c.b16 %v2137, %v2136
      %v2152 = vpack.c.b16 %v2139, %v2138
      %v2153 = vpack.c.b16 %v2141, %v2140
      %v2154 = vpack.c.b16 %v2143, %v2142
      %v2155 = vpack.c.b16 %v2145, %v2144
      %v2156 = vpack.c.b16 %v2147, %v2146
      %v2157 = vpack.c.b16 %v2149, %v2148
      %2166 = vmatprep.subr.bf16.mxu0 0
      %2167 = vmatpush1.bf16.msra.mxu0 %v2157
      %2168 = vmatprep.subr.bf16.mxu0 0
      %2169 = vmatpush1.bf16.msra.mxu0 %v2156
      %2170 = vmatprep.subr.bf16.mxu0 0
      %2171 = vmatpush1.bf16.msra.mxu0 %v2155
      %2172 = vmatprep.subr.bf16.mxu0 0
      %2173 = vmatpush1.bf16.msra.mxu0 %v2154
      %2174 = vmatprep.subr.bf16.mxu0 0
      %2175 = vmatpush1.bf16.msra.mxu0 %v2153
      %2176 = vmatprep.subr.bf16.mxu0 0
      %2177 = vmatpush1.bf16.msra.mxu0 %v2152
      %2178 = vmatprep.subr.bf16.mxu0 0
      %2179 = vmatpush1.bf16.msra.mxu0 %v2151
      %2180 = vmatprep.subr.bf16.mxu0 0
      %2181 = vmatpush1.bf16.msra.mxu0 %v2150
      %2182 = vmatprep.subr.bf16.mxu0 0
      %2183 = vmatpush2.bf16.msra.mxu0 0
      %2184 = vmatprep.subr.bf16.mxu0 0
      %2185 = vmatpush2.bf16.msra.mxu0 0
      %2186 = vmatprep.subr.bf16.mxu0 0
      %2187 = vmatpush2.bf16.msra.mxu0 0
      %2188 = vmatprep.subr.bf16.mxu0 0
      %2189 = vmatpush2.bf16.msra.mxu0 0
      %2190 = vmatprep.subr.bf16.mxu0 0
      %2191 = vmatpush2.bf16.msra.mxu0 0
      %2192 = vmatprep.subr.bf16.mxu0 0
      %2193 = vmatpush2.bf16.msra.mxu0 0
      %2194 = vmatprep.subr.bf16.mxu0 0
      %2195 = vmatpush2.bf16.msra.mxu0 0
      %2196 = vmatprep.subr.bf16.mxu0 0
      %2197 = vmatpush2.bf16.msra.mxu0 0
      %2198 = vmatprep.mubr.bf16.mxu0 0
      %2199 = vmatmul.mubr.bf16.gmra.mxu0 %v2100
      %v2200 = vpop.f32.mrf.mxu0
      %v2201 = vadd.f32 0.0, %v2200
      %v2202 = vpop.f32.mrf.mxu0
      %v2203 = vpop.f32.mrf.mxu0
      %v2204 = vpop.f32.mrf.mxu0
      %2205 = vdwg.mxu0
      %v2206 = vadd.f32 %v2099, %v2201
      %v2207 = vpack.c.bf16 %v1768, %v1768
      %s2208 = scalar_lea.vmem %s6, 256
      %v2209 = vld [vmem:[%s2208] sm:$0xf]
      %v2210 = vld [vmem:[%s2208 + $0x4] sm:$0xf]
      %v2211 = vld [vmem:[%s2208 + $0x8] sm:$0xf]
      %v2212 = vld [vmem:[%s2208 + $0xc] sm:$0xf]
      %v2213 = vld [vmem:[%s2208 + $0x10] sm:$0xf]
      %v2214 = vld [vmem:[%s2208 + $0x14] sm:$0xf]
      %v2215 = vld [vmem:[%s2208 + $0x18] sm:$0xf]
      %v2216 = vld [vmem:[%s2208 + $0x1c] sm:$0xf]
      %v2217 = vld [vmem:[%s2208 + $0x20] sm:$0xf]
      %v2218 = vld [vmem:[%s2208 + $0x24] sm:$0xf]
      %v2219 = vld [vmem:[%s2208 + $0x28] sm:$0xf]
      %v2220 = vld [vmem:[%s2208 + $0x2c] sm:$0xf]
      %v2221 = vld [vmem:[%s2208 + $0x30] sm:$0xf]
      %v2222 = vld [vmem:[%s2208 + $0x34] sm:$0xf]
      %v2223 = vld [vmem:[%s2208 + $0x38] sm:$0xf]
      %v2224 = vld [vmem:[%s2208 + $0x3c] sm:$0xf]
      %v2241 = vunpack.c.l.b16 %v2209
      %v2242 = vunpack.c.l.b16 %v2210
      %v2243 = vunpack.c.l.b16 %v2211
      %v2244 = vunpack.c.l.b16 %v2212
      %v2245 = vunpack.c.l.b16 %v2213
      %v2246 = vunpack.c.l.b16 %v2214
      %v2247 = vunpack.c.l.b16 %v2215
      %v2248 = vunpack.c.l.b16 %v2216
      %v2249 = vunpack.c.l.b16 %v2217
      %v2250 = vunpack.c.l.b16 %v2218
      %v2251 = vunpack.c.l.b16 %v2219
      %v2252 = vunpack.c.l.b16 %v2220
      %v2253 = vunpack.c.l.b16 %v2221
      %v2254 = vunpack.c.l.b16 %v2222
      %v2255 = vunpack.c.l.b16 %v2223
      %v2256 = vunpack.c.l.b16 %v2224
      %v2257 = vpack.c.b16 %v2242, %v2241
      %v2258 = vpack.c.b16 %v2244, %v2243
      %v2259 = vpack.c.b16 %v2246, %v2245
      %v2260 = vpack.c.b16 %v2248, %v2247
      %v2261 = vpack.c.b16 %v2250, %v2249
      %v2262 = vpack.c.b16 %v2252, %v2251
      %v2263 = vpack.c.b16 %v2254, %v2253
      %v2264 = vpack.c.b16 %v2256, %v2255
      %2273 = vmatprep.subr.bf16.mxu0 0
      %2274 = vmatpush1.bf16.msra.mxu0 %v2264
      %2275 = vmatprep.subr.bf16.mxu0 0
      %2276 = vmatpush1.bf16.msra.mxu0 %v2263
      %2277 = vmatprep.subr.bf16.mxu0 0
      %2278 = vmatpush1.bf16.msra.mxu0 %v2262
      %2279 = vmatprep.subr.bf16.mxu0 0
      %2280 = vmatpush1.bf16.msra.mxu0 %v2261
      %2281 = vmatprep.subr.bf16.mxu0 0
      %2282 = vmatpush1.bf16.msra.mxu0 %v2260
      %2283 = vmatprep.subr.bf16.mxu0 0
      %2284 = vmatpush1.bf16.msra.mxu0 %v2259
      %2285 = vmatprep.subr.bf16.mxu0 0
      %2286 = vmatpush1.bf16.msra.mxu0 %v2258
      %2287 = vmatprep.subr.bf16.mxu0 0
      %2288 = vmatpush1.bf16.msra.mxu0 %v2257
      %2289 = vmatprep.subr.bf16.mxu0 0
      %2290 = vmatpush2.bf16.msra.mxu0 0
      %2291 = vmatprep.subr.bf16.mxu0 0
      %2292 = vmatpush2.bf16.msra.mxu0 0
      %2293 = vmatprep.subr.bf16.mxu0 0
      %2294 = vmatpush2.bf16.msra.mxu0 0
      %2295 = vmatprep.subr.bf16.mxu0 0
      %2296 = vmatpush2.bf16.msra.mxu0 0
      %2297 = vmatprep.subr.bf16.mxu0 0
      %2298 = vmatpush2.bf16.msra.mxu0 0
      %2299 = vmatprep.subr.bf16.mxu0 0
      %2300 = vmatpush2.bf16.msra.mxu0 0
      %2301 = vmatprep.subr.bf16.mxu0 0
      %2302 = vmatpush2.bf16.msra.mxu0 0
      %2303 = vmatprep.subr.bf16.mxu0 0
      %2304 = vmatpush2.bf16.msra.mxu0 0
      %2305 = vmatprep.mubr.bf16.mxu0 0
      %2306 = vmatmul.mubr.bf16.gmra.mxu0 %v2207
      %v2307 = vpop.f32.mrf.mxu0
      %v2308 = vadd.f32 0.0, %v2307
      %v2309 = vpop.f32.mrf.mxu0
      %v2310 = vpop.f32.mrf.mxu0
      %v2311 = vpop.f32.mrf.mxu0
      %2312 = vdwg.mxu0
      %v2313 = vadd.f32 %v2206, %v2308
      %v2314 = vpack.c.bf16 %v1771, %v1771
      %s2315 = scalar_lea.vmem %s6, 320
      %v2316 = vld [vmem:[%s2315] sm:$0xf]
      %v2317 = vld [vmem:[%s2315 + $0x4] sm:$0xf]
      %v2318 = vld [vmem:[%s2315 + $0x8] sm:$0xf]
      %v2319 = vld [vmem:[%s2315 + $0xc] sm:$0xf]
      %v2320 = vld [vmem:[%s2315 + $0x10] sm:$0xf]
      %v2321 = vld [vmem:[%s2315 + $0x14] sm:$0xf]
      %v2322 = vld [vmem:[%s2315 + $0x18] sm:$0xf]
      %v2323 = vld [vmem:[%s2315 + $0x1c] sm:$0xf]
      %v2324 = vld [vmem:[%s2315 + $0x20] sm:$0xf]
      %v2325 = vld [vmem:[%s2315 + $0x24] sm:$0xf]
      %v2326 = vld [vmem:[%s2315 + $0x28] sm:$0xf]
      %v2327 = vld [vmem:[%s2315 + $0x2c] sm:$0xf]
      %v2328 = vld [vmem:[%s2315 + $0x30] sm:$0xf]
      %v2329 = vld [vmem:[%s2315 + $0x34] sm:$0xf]
      %v2330 = vld [vmem:[%s2315 + $0x38] sm:$0xf]
      %v2331 = vld [vmem:[%s2315 + $0x3c] sm:$0xf]
      %v2348 = vunpack.c.l.b16 %v2316
      %v2349 = vunpack.c.l.b16 %v2317
      %v2350 = vunpack.c.l.b16 %v2318
      %v2351 = vunpack.c.l.b16 %v2319
      %v2352 = vunpack.c.l.b16 %v2320
      %v2353 = vunpack.c.l.b16 %v2321
      %v2354 = vunpack.c.l.b16 %v2322
      %v2355 = vunpack.c.l.b16 %v2323
      %v2356 = vunpack.c.l.b16 %v2324
      %v2357 = vunpack.c.l.b16 %v2325
      %v2358 = vunpack.c.l.b16 %v2326
      %v2359 = vunpack.c.l.b16 %v2327
      %v2360 = vunpack.c.l.b16 %v2328
      %v2361 = vunpack.c.l.b16 %v2329
      %v2362 = vunpack.c.l.b16 %v2330
      %v2363 = vunpack.c.l.b16 %v2331
      %v2364 = vpack.c.b16 %v2349, %v2348
      %v2365 = vpack.c.b16 %v2351, %v2350
      %v2366 = vpack.c.b16 %v2353, %v2352
      %v2367 = vpack.c.b16 %v2355, %v2354
      %v2368 = vpack.c.b16 %v2357, %v2356
      %v2369 = vpack.c.b16 %v2359, %v2358
      %v2370 = vpack.c.b16 %v2361, %v2360
      %v2371 = vpack.c.b16 %v2363, %v2362
      %2380 = vmatprep.subr.bf16.mxu0 0
      %2381 = vmatpush1.bf16.msra.mxu0 %v2371
      %2382 = vmatprep.subr.bf16.mxu0 0
      %2383 = vmatpush1.bf16.msra.mxu0 %v2370
      %2384 = vmatprep.subr.bf16.mxu0 0
      %2385 = vmatpush1.bf16.msra.mxu0 %v2369
      %2386 = vmatprep.subr.bf16.mxu0 0
      %2387 = vmatpush1.bf16.msra.mxu0 %v2368
      %2388 = vmatprep.subr.bf16.mxu0 0
      %2389 = vmatpush1.bf16.msra.mxu0 %v2367
      %2390 = vmatprep.subr.bf16.mxu0 0
      %2391 = vmatpush1.bf16.msra.mxu0 %v2366
      %2392 = vmatprep.subr.bf16.mxu0 0
      %2393 = vmatpush1.bf16.msra.mxu0 %v2365
      %2394 = vmatprep.subr.bf16.mxu0 0
      %2395 = vmatpush1.bf16.msra.mxu0 %v2364
      %2396 = vmatprep.subr.bf16.mxu0 0
      %2397 = vmatpush2.bf16.msra.mxu0 0
      %2398 = vmatprep.subr.bf16.mxu0 0
      %2399 = vmatpush2.bf16.msra.mxu0 0
      %2400 = vmatprep.subr.bf16.mxu0 0
      %2401 = vmatpush2.bf16.msra.mxu0 0
      %2402 = vmatprep.subr.bf16.mxu0 0
      %2403 = vmatpush2.bf16.msra.mxu0 0
      %2404 = vmatprep.subr.bf16.mxu0 0
      %2405 = vmatpush2.bf16.msra.mxu0 0
      %2406 = vmatprep.subr.bf16.mxu0 0
      %2407 = vmatpush2.bf16.msra.mxu0 0
      %2408 = vmatprep.subr.bf16.mxu0 0
      %2409 = vmatpush2.bf16.msra.mxu0 0
      %2410 = vmatprep.subr.bf16.mxu0 0
      %2411 = vmatpush2.bf16.msra.mxu0 0
      %2412 = vmatprep.mubr.bf16.mxu0 0
      %2413 = vmatmul.mubr.bf16.gmra.mxu0 %v2314
      %v2414 = vpop.f32.mrf.mxu0
      %v2415 = vadd.f32 0.0, %v2414
      %v2416 = vpop.f32.mrf.mxu0
      %v2417 = vpop.f32.mrf.mxu0
      %v2418 = vpop.f32.mrf.mxu0
      %2419 = vdwg.mxu0
      %v2420 = vadd.f32 %v2313, %v2415
      %v2421 = vpack.c.bf16 %v1776, %v1776
      %s2422 = scalar_lea.vmem %s6, 384
      %v2423 = vld [vmem:[%s2422] sm:$0xf]
      %v2424 = vld [vmem:[%s2422 + $0x4] sm:$0xf]
      %v2425 = vld [vmem:[%s2422 + $0x8] sm:$0xf]
      %v2426 = vld [vmem:[%s2422 + $0xc] sm:$0xf]
      %v2427 = vld [vmem:[%s2422 + $0x10] sm:$0xf]
      %v2428 = vld [vmem:[%s2422 + $0x14] sm:$0xf]
      %v2429 = vld [vmem:[%s2422 + $0x18] sm:$0xf]
      %v2430 = vld [vmem:[%s2422 + $0x1c] sm:$0xf]
      %v2431 = vld [vmem:[%s2422 + $0x20] sm:$0xf]
      %v2432 = vld [vmem:[%s2422 + $0x24] sm:$0xf]
      %v2433 = vld [vmem:[%s2422 + $0x28] sm:$0xf]
      %v2434 = vld [vmem:[%s2422 + $0x2c] sm:$0xf]
      %v2435 = vld [vmem:[%s2422 + $0x30] sm:$0xf]
      %v2436 = vld [vmem:[%s2422 + $0x34] sm:$0xf]
      %v2437 = vld [vmem:[%s2422 + $0x38] sm:$0xf]
      %v2438 = vld [vmem:[%s2422 + $0x3c] sm:$0xf]
      %v2455 = vunpack.c.l.b16 %v2423
      %v2456 = vunpack.c.l.b16 %v2424
      %v2457 = vunpack.c.l.b16 %v2425
      %v2458 = vunpack.c.l.b16 %v2426
      %v2459 = vunpack.c.l.b16 %v2427
      %v2460 = vunpack.c.l.b16 %v2428
      %v2461 = vunpack.c.l.b16 %v2429
      %v2462 = vunpack.c.l.b16 %v2430
      %v2463 = vunpack.c.l.b16 %v2431
      %v2464 = vunpack.c.l.b16 %v2432
      %v2465 = vunpack.c.l.b16 %v2433
      %v2466 = vunpack.c.l.b16 %v2434
      %v2467 = vunpack.c.l.b16 %v2435
      %v2468 = vunpack.c.l.b16 %v2436
      %v2469 = vunpack.c.l.b16 %v2437
      %v2470 = vunpack.c.l.b16 %v2438
      %v2471 = vpack.c.b16 %v2456, %v2455
      %v2472 = vpack.c.b16 %v2458, %v2457
      %v2473 = vpack.c.b16 %v2460, %v2459
      %v2474 = vpack.c.b16 %v2462, %v2461
      %v2475 = vpack.c.b16 %v2464, %v2463
      %v2476 = vpack.c.b16 %v2466, %v2465
      %v2477 = vpack.c.b16 %v2468, %v2467
      %v2478 = vpack.c.b16 %v2470, %v2469
      %2487 = vmatprep.subr.bf16.mxu0 0
      %2488 = vmatpush1.bf16.msra.mxu0 %v2478
      %2489 = vmatprep.subr.bf16.mxu0 0
      %2490 = vmatpush1.bf16.msra.mxu0 %v2477
      %2491 = vmatprep.subr.bf16.mxu0 0
      %2492 = vmatpush1.bf16.msra.mxu0 %v2476
      %2493 = vmatprep.subr.bf16.mxu0 0
      %2494 = vmatpush1.bf16.msra.mxu0 %v2475
      %2495 = vmatprep.subr.bf16.mxu0 0
      %2496 = vmatpush1.bf16.msra.mxu0 %v2474
      %2497 = vmatprep.subr.bf16.mxu0 0
      %2498 = vmatpush1.bf16.msra.mxu0 %v2473
      %2499 = vmatprep.subr.bf16.mxu0 0
      %2500 = vmatpush1.bf16.msra.mxu0 %v2472
      %2501 = vmatprep.subr.bf16.mxu0 0
      %2502 = vmatpush1.bf16.msra.mxu0 %v2471
      %2503 = vmatprep.subr.bf16.mxu0 0
      %2504 = vmatpush2.bf16.msra.mxu0 0
      %2505 = vmatprep.subr.bf16.mxu0 0
      %2506 = vmatpush2.bf16.msra.mxu0 0
      %2507 = vmatprep.subr.bf16.mxu0 0
      %2508 = vmatpush2.bf16.msra.mxu0 0
      %2509 = vmatprep.subr.bf16.mxu0 0
      %2510 = vmatpush2.bf16.msra.mxu0 0
      %2511 = vmatprep.subr.bf16.mxu0 0
      %2512 = vmatpush2.bf16.msra.mxu0 0
      %2513 = vmatprep.subr.bf16.mxu0 0
      %2514 = vmatpush2.bf16.msra.mxu0 0
      %2515 = vmatprep.subr.bf16.mxu0 0
      %2516 = vmatpush2.bf16.msra.mxu0 0
      %2517 = vmatprep.subr.bf16.mxu0 0
      %2518 = vmatpush2.bf16.msra.mxu0 0
      %2519 = vmatprep.mubr.bf16.mxu0 0
      %2520 = vmatmul.mubr.bf16.gmra.mxu0 %v2421
      %v2521 = vpop.f32.mrf.mxu0
      %v2522 = vadd.f32 0.0, %v2521
      %v2523 = vpop.f32.mrf.mxu0
      %v2524 = vpop.f32.mrf.mxu0
      %v2525 = vpop.f32.mrf.mxu0
      %2526 = vdwg.mxu0
      %v2527 = vadd.f32 %v2420, %v2522
      %v2528 = vpack.c.bf16 %v1779, %v1779
      %s2529 = scalar_lea.vmem %s6, 448
      %v2530 = vld [vmem:[%s2529] sm:$0xf]
      %v2531 = vld [vmem:[%s2529 + $0x4] sm:$0xf]
      %v2532 = vld [vmem:[%s2529 + $0x8] sm:$0xf]
      %v2533 = vld [vmem:[%s2529 + $0xc] sm:$0xf]
      %v2534 = vld [vmem:[%s2529 + $0x10] sm:$0xf]
      %v2535 = vld [vmem:[%s2529 + $0x14] sm:$0xf]
      %v2536 = vld [vmem:[%s2529 + $0x18] sm:$0xf]
      %v2537 = vld [vmem:[%s2529 + $0x1c] sm:$0xf]
      %v2538 = vld [vmem:[%s2529 + $0x20] sm:$0xf]
      %v2539 = vld [vmem:[%s2529 + $0x24] sm:$0xf]
      %v2540 = vld [vmem:[%s2529 + $0x28] sm:$0xf]
      %v2541 = vld [vmem:[%s2529 + $0x2c] sm:$0xf]
      %v2542 = vld [vmem:[%s2529 + $0x30] sm:$0xf]
      %v2543 = vld [vmem:[%s2529 + $0x34] sm:$0xf]
      %v2544 = vld [vmem:[%s2529 + $0x38] sm:$0xf]
      %v2545 = vld [vmem:[%s2529 + $0x3c] sm:$0xf]
      %v2562 = vunpack.c.l.b16 %v2530
      %v2563 = vunpack.c.l.b16 %v2531
      %v2564 = vunpack.c.l.b16 %v2532
      %v2565 = vunpack.c.l.b16 %v2533
      %v2566 = vunpack.c.l.b16 %v2534
      %v2567 = vunpack.c.l.b16 %v2535
      %v2568 = vunpack.c.l.b16 %v2536
      %v2569 = vunpack.c.l.b16 %v2537
      %v2570 = vunpack.c.l.b16 %v2538
      %v2571 = vunpack.c.l.b16 %v2539
      %v2572 = vunpack.c.l.b16 %v2540
      %v2573 = vunpack.c.l.b16 %v2541
      %v2574 = vunpack.c.l.b16 %v2542
      %v2575 = vunpack.c.l.b16 %v2543
      %v2576 = vunpack.c.l.b16 %v2544
      %v2577 = vunpack.c.l.b16 %v2545
      %v2578 = vpack.c.b16 %v2563, %v2562
      %v2579 = vpack.c.b16 %v2565, %v2564
      %v2580 = vpack.c.b16 %v2567, %v2566
      %v2581 = vpack.c.b16 %v2569, %v2568
      %v2582 = vpack.c.b16 %v2571, %v2570
      %v2583 = vpack.c.b16 %v2573, %v2572
      %v2584 = vpack.c.b16 %v2575, %v2574
      %v2585 = vpack.c.b16 %v2577, %v2576
      %2594 = vmatprep.subr.bf16.mxu0 0
      %2595 = vmatpush1.bf16.msra.mxu0 %v2585
      %2596 = vmatprep.subr.bf16.mxu0 0
      %2597 = vmatpush1.bf16.msra.mxu0 %v2584
      %2598 = vmatprep.subr.bf16.mxu0 0
      %2599 = vmatpush1.bf16.msra.mxu0 %v2583
      %2600 = vmatprep.subr.bf16.mxu0 0
      %2601 = vmatpush1.bf16.msra.mxu0 %v2582
      %2602 = vmatprep.subr.bf16.mxu0 0
      %2603 = vmatpush1.bf16.msra.mxu0 %v2581
      %2604 = vmatprep.subr.bf16.mxu0 0
      %2605 = vmatpush1.bf16.msra.mxu0 %v2580
      %2606 = vmatprep.subr.bf16.mxu0 0
      %2607 = vmatpush1.bf16.msra.mxu0 %v2579
      %2608 = vmatprep.subr.bf16.mxu0 0
      %2609 = vmatpush1.bf16.msra.mxu0 %v2578
      %2610 = vmatprep.subr.bf16.mxu0 0
      %2611 = vmatpush2.bf16.msra.mxu0 0
      %2612 = vmatprep.subr.bf16.mxu0 0
      %2613 = vmatpush2.bf16.msra.mxu0 0
      %2614 = vmatprep.subr.bf16.mxu0 0
      %2615 = vmatpush2.bf16.msra.mxu0 0
      %2616 = vmatprep.subr.bf16.mxu0 0
      %2617 = vmatpush2.bf16.msra.mxu0 0
      %2618 = vmatprep.subr.bf16.mxu0 0
      %2619 = vmatpush2.bf16.msra.mxu0 0
      %2620 = vmatprep.subr.bf16.mxu0 0
      %2621 = vmatpush2.bf16.msra.mxu0 0
      %2622 = vmatprep.subr.bf16.mxu0 0
      %2623 = vmatpush2.bf16.msra.mxu0 0
      %2624 = vmatprep.subr.bf16.mxu0 0
      %2625 = vmatpush2.bf16.msra.mxu0 0
      %2626 = vmatprep.mubr.bf16.mxu0 0
      %2627 = vmatmul.mubr.bf16.gmra.mxu0 %v2528
      %v2628 = vpop.f32.mrf.mxu0
      %v2629 = vadd.f32 0.0, %v2628
      %v2630 = vpop.f32.mrf.mxu0
      %v2631 = vpop.f32.mrf.mxu0
      %v2632 = vpop.f32.mrf.mxu0
      %2633 = vdwg.mxu0
      %v2634 = vadd.f32 %v2527, %v2629
      %v2635 = vld [vmem:[%s7] sm:$0x1]
      %v2637 = vlaneseq
      %v2638 = vshrl.u32 %v2637, 7
      %v2639 = vsub.s32 0, %v2638
      %v2640 = vrot.slane %v2635, %v2639
      %v2642 = vadd.f32 %v2634, %v2640
      %v2643 = vld [vmem:[%s8] sm:$0xf]
      %v2644 = vld [vmem:[%s8 + $0x4] sm:$0xf]
      %v2645 = vld [vmem:[%s8 + $0x8] sm:$0xf]
      %v2646 = vld [vmem:[%s8 + $0xc] sm:$0xf]
      %v2647 = vld [vmem:[%s8 + $0x10] sm:$0xf]
      %v2648 = vld [vmem:[%s8 + $0x14] sm:$0xf]
      %v2649 = vld [vmem:[%s8 + $0x18] sm:$0xf]
      %v2650 = vld [vmem:[%s8 + $0x1c] sm:$0xf]
      %v2651 = vld [vmem:[%s8 + $0x20] sm:$0xf]
      %v2652 = vld [vmem:[%s8 + $0x24] sm:$0xf]
      %v2653 = vld [vmem:[%s8 + $0x28] sm:$0xf]
      %v2654 = vld [vmem:[%s8 + $0x2c] sm:$0xf]
      %v2655 = vld [vmem:[%s8 + $0x30] sm:$0xf]
      %v2656 = vld [vmem:[%s8 + $0x34] sm:$0xf]
      %v2657 = vld [vmem:[%s8 + $0x38] sm:$0xf]
      %v2658 = vld [vmem:[%s8 + $0x3c] sm:$0xf]
      %v2659 = vld [vmem:[%s9] sm:$0xf]
      %v2660 = vld [vmem:[%s9 + $0x4] sm:$0xf]
      %v2661 = vld [vmem:[%s9 + $0x8] sm:$0xf]
      %v2662 = vld [vmem:[%s9 + $0xc] sm:$0xf]
      %v2663 = vld [vmem:[%s9 + $0x10] sm:$0xf]
      %v2664 = vld [vmem:[%s9 + $0x14] sm:$0xf]
      %v2665 = vld [vmem:[%s9 + $0x18] sm:$0xf]
      %v2666 = vld [vmem:[%s9 + $0x1c] sm:$0xf]
      %v2667 = vld [vmem:[%s9 + $0x20] sm:$0xf]
      %v2668 = vld [vmem:[%s9 + $0x24] sm:$0xf]
      %v2669 = vld [vmem:[%s9 + $0x28] sm:$0xf]
      %v2670 = vld [vmem:[%s9 + $0x2c] sm:$0xf]
      %v2671 = vld [vmem:[%s9 + $0x30] sm:$0xf]
      %v2672 = vld [vmem:[%s9 + $0x34] sm:$0xf]
      %v2673 = vld [vmem:[%s9 + $0x38] sm:$0xf]
      %v2674 = vld [vmem:[%s9 + $0x3c] sm:$0xf]
      %v2675 = vld [vmem:[%s10] sm:$0xf]
      %v2676 = vld [vmem:[%s10 + $0x4] sm:$0xf]
      %v2677 = vld [vmem:[%s10 + $0x8] sm:$0xf]
      %v2678 = vld [vmem:[%s10 + $0xc] sm:$0xf]
      %v2679 = vld [vmem:[%s10 + $0x10] sm:$0xf]
      %v2680 = vld [vmem:[%s10 + $0x14] sm:$0xf]
      %v2681 = vld [vmem:[%s10 + $0x18] sm:$0xf]
      %v2682 = vld [vmem:[%s10 + $0x1c] sm:$0xf]
      %v2683 = vld [vmem:[%s10 + $0x20] sm:$0xf]
      %v2684 = vld [vmem:[%s10 + $0x24] sm:$0xf]
      %v2685 = vld [vmem:[%s10 + $0x28] sm:$0xf]
      %v2686 = vld [vmem:[%s10 + $0x2c] sm:$0xf]
      %v2687 = vld [vmem:[%s10 + $0x30] sm:$0xf]
      %v2688 = vld [vmem:[%s10 + $0x34] sm:$0xf]
      %v2689 = vld [vmem:[%s10 + $0x38] sm:$0xf]
      %v2690 = vld [vmem:[%s10 + $0x3c] sm:$0xf]
      %v2691 = vpack.c.bf16 %v2642, %v2642
      %v2708 = vunpack.c.l.b16 %v2643
      %v2709 = vunpack.c.l.b16 %v2644
      %v2710 = vunpack.c.l.b16 %v2645
      %v2711 = vunpack.c.l.b16 %v2646
      %v2712 = vunpack.c.l.b16 %v2647
      %v2713 = vunpack.c.l.b16 %v2648
      %v2714 = vunpack.c.l.b16 %v2649
      %v2715 = vunpack.c.l.b16 %v2650
      %v2716 = vunpack.c.l.b16 %v2651
      %v2717 = vunpack.c.l.b16 %v2652
      %v2718 = vunpack.c.l.b16 %v2653
      %v2719 = vunpack.c.l.b16 %v2654
      %v2720 = vunpack.c.l.b16 %v2655
      %v2721 = vunpack.c.l.b16 %v2656
      %v2722 = vunpack.c.l.b16 %v2657
      %v2723 = vunpack.c.l.b16 %v2658
      %v2724 = vpack.c.b16 %v2709, %v2708
      %v2725 = vpack.c.b16 %v2711, %v2710
      %v2726 = vpack.c.b16 %v2713, %v2712
      %v2727 = vpack.c.b16 %v2715, %v2714
      %v2728 = vpack.c.b16 %v2717, %v2716
      %v2729 = vpack.c.b16 %v2719, %v2718
      %v2730 = vpack.c.b16 %v2721, %v2720
      %v2731 = vpack.c.b16 %v2723, %v2722
      %2740 = vmatprep.subr.bf16.mxu0 0
      %2741 = vmatpush1.bf16.msra.mxu0 %v2731
      %2742 = vmatprep.subr.bf16.mxu0 0
      %2743 = vmatpush1.bf16.msra.mxu0 %v2730
      %2744 = vmatprep.subr.bf16.mxu0 0
      %2745 = vmatpush1.bf16.msra.mxu0 %v2729
      %2746 = vmatprep.subr.bf16.mxu0 0
      %2747 = vmatpush1.bf16.msra.mxu0 %v2728
      %2748 = vmatprep.subr.bf16.mxu0 0
      %2749 = vmatpush1.bf16.msra.mxu0 %v2727
      %2750 = vmatprep.subr.bf16.mxu0 0
      %2751 = vmatpush1.bf16.msra.mxu0 %v2726
      %2752 = vmatprep.subr.bf16.mxu0 0
      %2753 = vmatpush1.bf16.msra.mxu0 %v2725
      %2754 = vmatprep.subr.bf16.mxu0 0
      %2755 = vmatpush1.bf16.msra.mxu0 %v2724
      %2756 = vmatprep.subr.bf16.mxu0 0
      %2757 = vmatpush2.bf16.msra.mxu0 0
      %2758 = vmatprep.subr.bf16.mxu0 0
      %2759 = vmatpush2.bf16.msra.mxu0 0
      %2760 = vmatprep.subr.bf16.mxu0 0
      %2761 = vmatpush2.bf16.msra.mxu0 0
      %2762 = vmatprep.subr.bf16.mxu0 0
      %2763 = vmatpush2.bf16.msra.mxu0 0
      %2764 = vmatprep.subr.bf16.mxu0 0
      %2765 = vmatpush2.bf16.msra.mxu0 0
      %2766 = vmatprep.subr.bf16.mxu0 0
      %2767 = vmatpush2.bf16.msra.mxu0 0
      %2768 = vmatprep.subr.bf16.mxu0 0
      %2769 = vmatpush2.bf16.msra.mxu0 0
      %2770 = vmatprep.subr.bf16.mxu0 0
      %2771 = vmatpush2.bf16.msra.mxu0 0
      %2772 = vmatprep.mubr.bf16.mxu0 0
      %2773 = vmatmul.mubr.bf16.gmra.mxu0 %v2691
      %v2774 = vpop.f32.mrf.mxu0
      %v2775 = vadd.f32 0.0, %v2774
      %v2776 = vpop.f32.mrf.mxu0
      %v2777 = vpop.f32.mrf.mxu0
      %v2778 = vpop.f32.mrf.mxu0
      %2779 = vdwg.mxu0
      %v2780 = vmul.f32 %v2775, 0.5
      %v2781 = vmul.f32 %v2775, 0.044715
      %v2782 = vmul.f32 %v2781, %v2775
      %v2783 = vmul.f32 %v2782, %v2775
      %v2784 = vadd.f32 %v2775, %v2783
      %v2785 = vmul.f32 %v2784, 0.7978846
      %v2786 = vtanh.pop %v2785
      %v2787 = vadd.f32 %v2786, 1.0
      %v2788 = vmul.f32 %v2780, %v2787
      %v2789 = vpack.c.bf16 %v2788, %v2788
      %v2806 = vunpack.c.l.b16 %v2659
      %v2807 = vunpack.c.l.b16 %v2660
      %v2808 = vunpack.c.l.b16 %v2661
      %v2809 = vunpack.c.l.b16 %v2662
      %v2810 = vunpack.c.l.b16 %v2663
      %v2811 = vunpack.c.l.b16 %v2664
      %v2812 = vunpack.c.l.b16 %v2665
      %v2813 = vunpack.c.l.b16 %v2666
      %v2814 = vunpack.c.l.b16 %v2667
      %v2815 = vunpack.c.l.b16 %v2668
      %v2816 = vunpack.c.l.b16 %v2669
      %v2817 = vunpack.c.l.b16 %v2670
      %v2818 = vunpack.c.l.b16 %v2671
      %v2819 = vunpack.c.l.b16 %v2672
      %v2820 = vunpack.c.l.b16 %v2673
      %v2821 = vunpack.c.l.b16 %v2674
      %v2822 = vpack.c.b16 %v2807, %v2806
      %v2823 = vpack.c.b16 %v2809, %v2808
      %v2824 = vpack.c.b16 %v2811, %v2810
      %v2825 = vpack.c.b16 %v2813, %v2812
      %v2826 = vpack.c.b16 %v2815, %v2814
      %v2827 = vpack.c.b16 %v2817, %v2816
      %v2828 = vpack.c.b16 %v2819, %v2818
      %v2829 = vpack.c.b16 %v2821, %v2820
      %2838 = vmatprep.subr.bf16.mxu0 0
      %2839 = vmatpush1.bf16.msra.mxu0 %v2829
      %2840 = vmatprep.subr.bf16.mxu0 0
      %2841 = vmatpush1.bf16.msra.mxu0 %v2828
      %2842 = vmatprep.subr.bf16.mxu0 0
      %2843 = vmatpush1.bf16.msra.mxu0 %v2827
      %2844 = vmatprep.subr.bf16.mxu0 0
      %2845 = vmatpush1.bf16.msra.mxu0 %v2826
      %2846 = vmatprep.subr.bf16.mxu0 0
      %2847 = vmatpush1.bf16.msra.mxu0 %v2825
      %2848 = vmatprep.subr.bf16.mxu0 0
      %2849 = vmatpush1.bf16.msra.mxu0 %v2824
      %2850 = vmatprep.subr.bf16.mxu0 0
      %2851 = vmatpush1.bf16.msra.mxu0 %v2823
      %2852 = vmatprep.subr.bf16.mxu0 0
      %2853 = vmatpush1.bf16.msra.mxu0 %v2822
      %2854 = vmatprep.subr.bf16.mxu0 0
      %2855 = vmatpush2.bf16.msra.mxu0 0
      %2856 = vmatprep.subr.bf16.mxu0 0
      %2857 = vmatpush2.bf16.msra.mxu0 0
      %2858 = vmatprep.subr.bf16.mxu0 0
      %2859 = vmatpush2.bf16.msra.mxu0 0
      %2860 = vmatprep.subr.bf16.mxu0 0
      %2861 = vmatpush2.bf16.msra.mxu0 0
      %2862 = vmatprep.subr.bf16.mxu0 0
      %2863 = vmatpush2.bf16.msra.mxu0 0
      %2864 = vmatprep.subr.bf16.mxu0 0
      %2865 = vmatpush2.bf16.msra.mxu0 0
      %2866 = vmatprep.subr.bf16.mxu0 0
      %2867 = vmatpush2.bf16.msra.mxu0 0
      %2868 = vmatprep.subr.bf16.mxu0 0
      %2869 = vmatpush2.bf16.msra.mxu0 0
      %2870 = vmatprep.mubr.bf16.mxu0 0
      %2871 = vmatmul.mubr.bf16.gmra.mxu0 %v2789
      %v2872 = vpop.f32.mrf.mxu0
      %v2873 = vadd.f32 0.0, %v2872
      %v2874 = vpop.f32.mrf.mxu0
      %v2875 = vpop.f32.mrf.mxu0
      %v2876 = vpop.f32.mrf.mxu0
      %2877 = vdwg.mxu0
      %v2878 = vmul.f32 %v2873, 0.5
      %v2879 = vmul.f32 %v2873, 0.044715
      %v2880 = vmul.f32 %v2879, %v2873
      %v2881 = vmul.f32 %v2880, %v2873
      %v2882 = vadd.f32 %v2873, %v2881
      %v2883 = vmul.f32 %v2882, 0.7978846
      %v2884 = vtanh.pop %v2883
      %v2885 = vadd.f32 %v2884, 1.0
      %v2886 = vmul.f32 %v2878, %v2885
      %v2887 = vpack.c.bf16 %v2886, %v2886
      %v2904 = vunpack.c.l.b16 %v2675
      %v2905 = vunpack.c.l.b16 %v2676
      %v2906 = vunpack.c.l.b16 %v2677
      %v2907 = vunpack.c.l.b16 %v2678
      %v2908 = vunpack.c.l.b16 %v2679
      %v2909 = vunpack.c.l.b16 %v2680
      %v2910 = vunpack.c.l.b16 %v2681
      %v2911 = vunpack.c.l.b16 %v2682
      %v2912 = vunpack.c.l.b16 %v2683
      %v2913 = vunpack.c.l.b16 %v2684
      %v2914 = vunpack.c.l.b16 %v2685
      %v2915 = vunpack.c.l.b16 %v2686
      %v2916 = vunpack.c.l.b16 %v2687
      %v2917 = vunpack.c.l.b16 %v2688
      %v2918 = vunpack.c.l.b16 %v2689
      %v2919 = vunpack.c.l.b16 %v2690
      %v2920 = vpack.c.b16 %v2905, %v2904
      %v2921 = vpack.c.b16 %v2907, %v2906
      %v2922 = vpack.c.b16 %v2909, %v2908
      %v2923 = vpack.c.b16 %v2911, %v2910
      %v2924 = vpack.c.b16 %v2913, %v2912
      %v2925 = vpack.c.b16 %v2915, %v2914
      %v2926 = vpack.c.b16 %v2917, %v2916
      %v2927 = vpack.c.b16 %v2919, %v2918
      %2936 = vmatprep.subr.bf16.mxu0 0
      %2937 = vmatpush1.bf16.msra.mxu0 %v2927
      %2938 = vmatprep.subr.bf16.mxu0 0
      %2939 = vmatpush1.bf16.msra.mxu0 %v2926
      %2940 = vmatprep.subr.bf16.mxu0 0
      %2941 = vmatpush1.bf16.msra.mxu0 %v2925
      %2942 = vmatprep.subr.bf16.mxu0 0
      %2943 = vmatpush1.bf16.msra.mxu0 %v2924
      %2944 = vmatprep.subr.bf16.mxu0 0
      %2945 = vmatpush1.bf16.msra.mxu0 %v2923
      %2946 = vmatprep.subr.bf16.mxu0 0
      %2947 = vmatpush1.bf16.msra.mxu0 %v2922
      %2948 = vmatprep.subr.bf16.mxu0 0
      %2949 = vmatpush1.bf16.msra.mxu0 %v2921
      %2950 = vmatprep.subr.bf16.mxu0 0
      %2951 = vmatpush1.bf16.msra.mxu0 %v2920
      %2952 = vmatprep.subr.bf16.mxu0 0
      %2953 = vmatpush2.bf16.msra.mxu0 0
      %2954 = vmatprep.subr.bf16.mxu0 0
      %2955 = vmatpush2.bf16.msra.mxu0 0
      %2956 = vmatprep.subr.bf16.mxu0 0
      %2957 = vmatpush2.bf16.msra.mxu0 0
      %2958 = vmatprep.subr.bf16.mxu0 0
      %2959 = vmatpush2.bf16.msra.mxu0 0
      %2960 = vmatprep.subr.bf16.mxu0 0
      %2961 = vmatpush2.bf16.msra.mxu0 0
      %2962 = vmatprep.subr.bf16.mxu0 0
      %2963 = vmatpush2.bf16.msra.mxu0 0
      %2964 = vmatprep.subr.bf16.mxu0 0
      %2965 = vmatpush2.bf16.msra.mxu0 0
      %2966 = vmatprep.subr.bf16.mxu0 0
      %2967 = vmatpush2.bf16.msra.mxu0 0
      %2968 = vmatprep.mubr.bf16.mxu0 0
      %2969 = vmatmul.mubr.bf16.gmra.mxu0 %v2887
      %v2970 = vpop.f32.mrf.mxu0
      %v2971 = vadd.f32 0.0, %v2970
      %v2972 = vpop.f32.mrf.mxu0
      %v2973 = vpop.f32.mrf.mxu0
      %v2974 = vpop.f32.mrf.mxu0
      %2975 = vdwg.mxu0
      %s2976 = scalar_lea.vmem %s8, 64
      %v2977 = vld [vmem:[%s2976] sm:$0xf]
      %v2978 = vld [vmem:[%s2976 + $0x4] sm:$0xf]
      %v2979 = vld [vmem:[%s2976 + $0x8] sm:$0xf]
      %v2980 = vld [vmem:[%s2976 + $0xc] sm:$0xf]
      %v2981 = vld [vmem:[%s2976 + $0x10] sm:$0xf]
      %v2982 = vld [vmem:[%s2976 + $0x14] sm:$0xf]
      %v2983 = vld [vmem:[%s2976 + $0x18] sm:$0xf]
      %v2984 = vld [vmem:[%s2976 + $0x1c] sm:$0xf]
      %v2985 = vld [vmem:[%s2976 + $0x20] sm:$0xf]
      %v2986 = vld [vmem:[%s2976 + $0x24] sm:$0xf]
      %v2987 = vld [vmem:[%s2976 + $0x28] sm:$0xf]
      %v2988 = vld [vmem:[%s2976 + $0x2c] sm:$0xf]
      %v2989 = vld [vmem:[%s2976 + $0x30] sm:$0xf]
      %v2990 = vld [vmem:[%s2976 + $0x34] sm:$0xf]
      %v2991 = vld [vmem:[%s2976 + $0x38] sm:$0xf]
      %v2992 = vld [vmem:[%s2976 + $0x3c] sm:$0xf]
      %s2993 = scalar_lea.vmem %s9, 64
      %v2994 = vld [vmem:[%s2993] sm:$0xf]
      %v2995 = vld [vmem:[%s2993 + $0x4] sm:$0xf]
      %v2996 = vld [vmem:[%s2993 + $0x8] sm:$0xf]
      %v2997 = vld [vmem:[%s2993 + $0xc] sm:$0xf]
      %v2998 = vld [vmem:[%s2993 + $0x10] sm:$0xf]
      %v2999 = vld [vmem:[%s2993 + $0x14] sm:$0xf]
      %v3000 = vld [vmem:[%s2993 + $0x18] sm:$0xf]
      %v3001 = vld [vmem:[%s2993 + $0x1c] sm:$0xf]
      %v3002 = vld [vmem:[%s2993 + $0x20] sm:$0xf]
      %v3003 = vld [vmem:[%s2993 + $0x24] sm:$0xf]
      %v3004 = vld [vmem:[%s2993 + $0x28] sm:$0xf]
      %v3005 = vld [vmem:[%s2993 + $0x2c] sm:$0xf]
      %v3006 = vld [vmem:[%s2993 + $0x30] sm:$0xf]
      %v3007 = vld [vmem:[%s2993 + $0x34] sm:$0xf]
      %v3008 = vld [vmem:[%s2993 + $0x38] sm:$0xf]
      %v3009 = vld [vmem:[%s2993 + $0x3c] sm:$0xf]
      %s3010 = scalar_lea.vmem %s10, 64
      %v3011 = vld [vmem:[%s3010] sm:$0xf]
      %v3012 = vld [vmem:[%s3010 + $0x4] sm:$0xf]
      %v3013 = vld [vmem:[%s3010 + $0x8] sm:$0xf]
      %v3014 = vld [vmem:[%s3010 + $0xc] sm:$0xf]
      %v3015 = vld [vmem:[%s3010 + $0x10] sm:$0xf]
      %v3016 = vld [vmem:[%s3010 + $0x14] sm:$0xf]
      %v3017 = vld [vmem:[%s3010 + $0x18] sm:$0xf]
      %v3018 = vld [vmem:[%s3010 + $0x1c] sm:$0xf]
      %v3019 = vld [vmem:[%s3010 + $0x20] sm:$0xf]
      %v3020 = vld [vmem:[%s3010 + $0x24] sm:$0xf]
      %v3021 = vld [vmem:[%s3010 + $0x28] sm:$0xf]
      %v3022 = vld [vmem:[%s3010 + $0x2c] sm:$0xf]
      %v3023 = vld [vmem:[%s3010 + $0x30] sm:$0xf]
      %v3024 = vld [vmem:[%s3010 + $0x34] sm:$0xf]
      %v3025 = vld [vmem:[%s3010 + $0x38] sm:$0xf]
      %v3026 = vld [vmem:[%s3010 + $0x3c] sm:$0xf]
      %v3027 = vpack.c.bf16 %v2971, %v2971
      %v3044 = vunpack.c.l.b16 %v2977
      %v3045 = vunpack.c.l.b16 %v2978
      %v3046 = vunpack.c.l.b16 %v2979
      %v3047 = vunpack.c.l.b16 %v2980
      %v3048 = vunpack.c.l.b16 %v2981
      %v3049 = vunpack.c.l.b16 %v2982
      %v3050 = vunpack.c.l.b16 %v2983
      %v3051 = vunpack.c.l.b16 %v2984
      %v3052 = vunpack.c.l.b16 %v2985
      %v3053 = vunpack.c.l.b16 %v2986
      %v3054 = vunpack.c.l.b16 %v2987
      %v3055 = vunpack.c.l.b16 %v2988
      %v3056 = vunpack.c.l.b16 %v2989
      %v3057 = vunpack.c.l.b16 %v2990
      %v3058 = vunpack.c.l.b16 %v2991
      %v3059 = vunpack.c.l.b16 %v2992
      %v3060 = vpack.c.b16 %v3045, %v3044
      %v3061 = vpack.c.b16 %v3047, %v3046
      %v3062 = vpack.c.b16 %v3049, %v3048
      %v3063 = vpack.c.b16 %v3051, %v3050
      %v3064 = vpack.c.b16 %v3053, %v3052
      %v3065 = vpack.c.b16 %v3055, %v3054
      %v3066 = vpack.c.b16 %v3057, %v3056
      %v3067 = vpack.c.b16 %v3059, %v3058
      %3076 = vmatprep.subr.bf16.mxu0 0
      %3077 = vmatpush1.bf16.msra.mxu0 %v3067
      %3078 = vmatprep.subr.bf16.mxu0 0
      %3079 = vmatpush1.bf16.msra.mxu0 %v3066
      %3080 = vmatprep.subr.bf16.mxu0 0
      %3081 = vmatpush1.bf16.msra.mxu0 %v3065
      %3082 = vmatprep.subr.bf16.mxu0 0
      %3083 = vmatpush1.bf16.msra.mxu0 %v3064
      %3084 = vmatprep.subr.bf16.mxu0 0
      %3085 = vmatpush1.bf16.msra.mxu0 %v3063
      %3086 = vmatprep.subr.bf16.mxu0 0
      %3087 = vmatpush1.bf16.msra.mxu0 %v3062
      %3088 = vmatprep.subr.bf16.mxu0 0
      %3089 = vmatpush1.bf16.msra.mxu0 %v3061
      %3090 = vmatprep.subr.bf16.mxu0 0
      %3091 = vmatpush1.bf16.msra.mxu0 %v3060
      %3092 = vmatprep.subr.bf16.mxu0 0
      %3093 = vmatpush2.bf16.msra.mxu0 0
      %3094 = vmatprep.subr.bf16.mxu0 0
      %3095 = vmatpush2.bf16.msra.mxu0 0
      %3096 = vmatprep.subr.bf16.mxu0 0
      %3097 = vmatpush2.bf16.msra.mxu0 0
      %3098 = vmatprep.subr.bf16.mxu0 0
      %3099 = vmatpush2.bf16.msra.mxu0 0
      %3100 = vmatprep.subr.bf16.mxu0 0
      %3101 = vmatpush2.bf16.msra.mxu0 0
      %3102 = vmatprep.subr.bf16.mxu0 0
      %3103 = vmatpush2.bf16.msra.mxu0 0
      %3104 = vmatprep.subr.bf16.mxu0 0
      %3105 = vmatpush2.bf16.msra.mxu0 0
      %3106 = vmatprep.subr.bf16.mxu0 0
      %3107 = vmatpush2.bf16.msra.mxu0 0
      %3108 = vmatprep.mubr.bf16.mxu0 0
      %3109 = vmatmul.mubr.bf16.gmra.mxu0 %v3027
      %v3110 = vpop.f32.mrf.mxu0
      %v3111 = vadd.f32 0.0, %v3110
      %v3112 = vpop.f32.mrf.mxu0
      %v3113 = vpop.f32.mrf.mxu0
      %v3114 = vpop.f32.mrf.mxu0
      %3115 = vdwg.mxu0
      %v3116 = vmul.f32 %v3111, 0.5
      %v3117 = vmul.f32 %v3111, 0.044715
      %v3118 = vmul.f32 %v3117, %v3111
      %v3119 = vmul.f32 %v3118, %v3111
      %v3120 = vadd.f32 %v3111, %v3119
      %v3121 = vmul.f32 %v3120, 0.7978846
      %v3122 = vtanh.pop %v3121
      %v3123 = vadd.f32 %v3122, 1.0
      %v3124 = vmul.f32 %v3116, %v3123
      %v3125 = vpack.c.bf16 %v3124, %v3124
      %v3142 = vunpack.c.l.b16 %v2994
      %v3143 = vunpack.c.l.b16 %v2995
      %v3144 = vunpack.c.l.b16 %v2996
      %v3145 = vunpack.c.l.b16 %v2997
      %v3146 = vunpack.c.l.b16 %v2998
      %v3147 = vunpack.c.l.b16 %v2999
      %v3148 = vunpack.c.l.b16 %v3000
      %v3149 = vunpack.c.l.b16 %v3001
      %v3150 = vunpack.c.l.b16 %v3002
      %v3151 = vunpack.c.l.b16 %v3003
      %v3152 = vunpack.c.l.b16 %v3004
      %v3153 = vunpack.c.l.b16 %v3005
      %v3154 = vunpack.c.l.b16 %v3006
      %v3155 = vunpack.c.l.b16 %v3007
      %v3156 = vunpack.c.l.b16 %v3008
      %v3157 = vunpack.c.l.b16 %v3009
      %v3158 = vpack.c.b16 %v3143, %v3142
      %v3159 = vpack.c.b16 %v3145, %v3144
      %v3160 = vpack.c.b16 %v3147, %v3146
      %v3161 = vpack.c.b16 %v3149, %v3148
      %v3162 = vpack.c.b16 %v3151, %v3150
      %v3163 = vpack.c.b16 %v3153, %v3152
      %v3164 = vpack.c.b16 %v3155, %v3154
      %v3165 = vpack.c.b16 %v3157, %v3156
      %3174 = vmatprep.subr.bf16.mxu0 0
      %3175 = vmatpush1.bf16.msra.mxu0 %v3165
      %3176 = vmatprep.subr.bf16.mxu0 0
      %3177 = vmatpush1.bf16.msra.mxu0 %v3164
      %3178 = vmatprep.subr.bf16.mxu0 0
      %3179 = vmatpush1.bf16.msra.mxu0 %v3163
      %3180 = vmatprep.subr.bf16.mxu0 0
      %3181 = vmatpush1.bf16.msra.mxu0 %v3162
      %3182 = vmatprep.subr.bf16.mxu0 0
      %3183 = vmatpush1.bf16.msra.mxu0 %v3161
      %3184 = vmatprep.subr.bf16.mxu0 0
      %3185 = vmatpush1.bf16.msra.mxu0 %v3160
      %3186 = vmatprep.subr.bf16.mxu0 0
      %3187 = vmatpush1.bf16.msra.mxu0 %v3159
      %3188 = vmatprep.subr.bf16.mxu0 0
      %3189 = vmatpush1.bf16.msra.mxu0 %v3158
      %3190 = vmatprep.subr.bf16.mxu0 0
      %3191 = vmatpush2.bf16.msra.mxu0 0
      %3192 = vmatprep.subr.bf16.mxu0 0
      %3193 = vmatpush2.bf16.msra.mxu0 0
      %3194 = vmatprep.subr.bf16.mxu0 0
      %3195 = vmatpush2.bf16.msra.mxu0 0
      %3196 = vmatprep.subr.bf16.mxu0 0
      %3197 = vmatpush2.bf16.msra.mxu0 0
      %3198 = vmatprep.subr.bf16.mxu0 0
      %3199 = vmatpush2.bf16.msra.mxu0 0
      %3200 = vmatprep.subr.bf16.mxu0 0
      %3201 = vmatpush2.bf16.msra.mxu0 0
      %3202 = vmatprep.subr.bf16.mxu0 0
      %3203 = vmatpush2.bf16.msra.mxu0 0
      %3204 = vmatprep.subr.bf16.mxu0 0
      %3205 = vmatpush2.bf16.msra.mxu0 0
      %3206 = vmatprep.mubr.bf16.mxu0 0
      %3207 = vmatmul.mubr.bf16.gmra.mxu0 %v3125
      %v3208 = vpop.f32.mrf.mxu0
      %v3209 = vadd.f32 0.0, %v3208
      %v3210 = vpop.f32.mrf.mxu0
      %v3211 = vpop.f32.mrf.mxu0
      %v3212 = vpop.f32.mrf.mxu0
      %3213 = vdwg.mxu0
      %v3214 = vmul.f32 %v3209, 0.5
      %v3215 = vmul.f32 %v3209, 0.044715
      %v3216 = vmul.f32 %v3215, %v3209
      %v3217 = vmul.f32 %v3216, %v3209
      %v3218 = vadd.f32 %v3209, %v3217
      %v3219 = vmul.f32 %v3218, 0.7978846
      %v3220 = vtanh.pop %v3219
      %v3221 = vadd.f32 %v3220, 1.0
      %v3222 = vmul.f32 %v3214, %v3221
      %v3223 = vpack.c.bf16 %v3222, %v3222
      %v3240 = vunpack.c.l.b16 %v3011
      %v3241 = vunpack.c.l.b16 %v3012
      %v3242 = vunpack.c.l.b16 %v3013
      %v3243 = vunpack.c.l.b16 %v3014
      %v3244 = vunpack.c.l.b16 %v3015
      %v3245 = vunpack.c.l.b16 %v3016
      %v3246 = vunpack.c.l.b16 %v3017
      %v3247 = vunpack.c.l.b16 %v3018
      %v3248 = vunpack.c.l.b16 %v3019
      %v3249 = vunpack.c.l.b16 %v3020
      %v3250 = vunpack.c.l.b16 %v3021
      %v3251 = vunpack.c.l.b16 %v3022
      %v3252 = vunpack.c.l.b16 %v3023
      %v3253 = vunpack.c.l.b16 %v3024
      %v3254 = vunpack.c.l.b16 %v3025
      %v3255 = vunpack.c.l.b16 %v3026
      %v3256 = vpack.c.b16 %v3241, %v3240
      %v3257 = vpack.c.b16 %v3243, %v3242
      %v3258 = vpack.c.b16 %v3245, %v3244
      %v3259 = vpack.c.b16 %v3247, %v3246
      %v3260 = vpack.c.b16 %v3249, %v3248
      %v3261 = vpack.c.b16 %v3251, %v3250
      %v3262 = vpack.c.b16 %v3253, %v3252
      %v3263 = vpack.c.b16 %v3255, %v3254
      %3272 = vmatprep.subr.bf16.mxu0 0
      %3273 = vmatpush1.bf16.msra.mxu0 %v3263
      %3274 = vmatprep.subr.bf16.mxu0 0
      %3275 = vmatpush1.bf16.msra.mxu0 %v3262
      %3276 = vmatprep.subr.bf16.mxu0 0
      %3277 = vmatpush1.bf16.msra.mxu0 %v3261
      %3278 = vmatprep.subr.bf16.mxu0 0
      %3279 = vmatpush1.bf16.msra.mxu0 %v3260
      %3280 = vmatprep.subr.bf16.mxu0 0
      %3281 = vmatpush1.bf16.msra.mxu0 %v3259
      %3282 = vmatprep.subr.bf16.mxu0 0
      %3283 = vmatpush1.bf16.msra.mxu0 %v3258
      %3284 = vmatprep.subr.bf16.mxu0 0
      %3285 = vmatpush1.bf16.msra.mxu0 %v3257
      %3286 = vmatprep.subr.bf16.mxu0 0
      %3287 = vmatpush1.bf16.msra.mxu0 %v3256
      %3288 = vmatprep.subr.bf16.mxu0 0
      %3289 = vmatpush2.bf16.msra.mxu0 0
      %3290 = vmatprep.subr.bf16.mxu0 0
      %3291 = vmatpush2.bf16.msra.mxu0 0
      %3292 = vmatprep.subr.bf16.mxu0 0
      %3293 = vmatpush2.bf16.msra.mxu0 0
      %3294 = vmatprep.subr.bf16.mxu0 0
      %3295 = vmatpush2.bf16.msra.mxu0 0
      %3296 = vmatprep.subr.bf16.mxu0 0
      %3297 = vmatpush2.bf16.msra.mxu0 0
      %3298 = vmatprep.subr.bf16.mxu0 0
      %3299 = vmatpush2.bf16.msra.mxu0 0
      %3300 = vmatprep.subr.bf16.mxu0 0
      %3301 = vmatpush2.bf16.msra.mxu0 0
      %3302 = vmatprep.subr.bf16.mxu0 0
      %3303 = vmatpush2.bf16.msra.mxu0 0
      %3304 = vmatprep.mubr.bf16.mxu0 0
      %3305 = vmatmul.mubr.bf16.gmra.mxu0 %v3223
      %v3306 = vpop.f32.mrf.mxu0
      %v3307 = vadd.f32 0.0, %v3306
      %v3308 = vpop.f32.mrf.mxu0
      %v3309 = vpop.f32.mrf.mxu0
      %v3310 = vpop.f32.mrf.mxu0
      %3311 = vdwg.mxu0
      %v3312 = vpack.c.bf16 %v3307, %v3307
      %v3313 = vld [vmem:[%s11] sm:$0xf]
      %v3314 = vld [vmem:[%s11 + $0x4] sm:$0xf]
      %v3315 = vld [vmem:[%s11 + $0x8] sm:$0xf]
      %v3316 = vld [vmem:[%s11 + $0xc] sm:$0xf]
      %v3317 = vld [vmem:[%s11 + $0x10] sm:$0xf]
      %v3318 = vld [vmem:[%s11 + $0x14] sm:$0xf]
      %v3319 = vld [vmem:[%s11 + $0x18] sm:$0xf]
      %v3320 = vld [vmem:[%s11 + $0x1c] sm:$0xf]
      %v3321 = vld [vmem:[%s11 + $0x20] sm:$0xf]
      %v3322 = vld [vmem:[%s11 + $0x24] sm:$0xf]
      %v3323 = vld [vmem:[%s11 + $0x28] sm:$0xf]
      %v3324 = vld [vmem:[%s11 + $0x2c] sm:$0xf]
      %v3325 = vld [vmem:[%s11 + $0x30] sm:$0xf]
      %v3326 = vld [vmem:[%s11 + $0x34] sm:$0xf]
      %v3327 = vld [vmem:[%s11 + $0x38] sm:$0xf]
      %v3328 = vld [vmem:[%s11 + $0x3c] sm:$0xf]
      %v3329 = vld [vmem:[%s12] sm:$0x1]
      %v3331 = vlaneseq
      %v3332 = vshrl.u32 %v3331, 7
      %v3333 = vsub.s32 0, %v3332
      %v3334 = vrot.slane %v3329, %v3333
      %v3352 = vunpack.c.l.b16 %v3313
      %v3353 = vunpack.c.l.b16 %v3314
      %v3354 = vunpack.c.l.b16 %v3315
      %v3355 = vunpack.c.l.b16 %v3316
      %v3356 = vunpack.c.l.b16 %v3317
      %v3357 = vunpack.c.l.b16 %v3318
      %v3358 = vunpack.c.l.b16 %v3319
      %v3359 = vunpack.c.l.b16 %v3320
      %v3360 = vunpack.c.l.b16 %v3321
      %v3361 = vunpack.c.l.b16 %v3322
      %v3362 = vunpack.c.l.b16 %v3323
      %v3363 = vunpack.c.l.b16 %v3324
      %v3364 = vunpack.c.l.b16 %v3325
      %v3365 = vunpack.c.l.b16 %v3326
      %v3366 = vunpack.c.l.b16 %v3327
      %v3367 = vunpack.c.l.b16 %v3328
      %v3368 = vpack.c.b16 %v3353, %v3352
      %v3369 = vpack.c.b16 %v3355, %v3354
      %v3370 = vpack.c.b16 %v3357, %v3356
      %v3371 = vpack.c.b16 %v3359, %v3358
      %v3372 = vpack.c.b16 %v3361, %v3360
      %v3373 = vpack.c.b16 %v3363, %v3362
      %v3374 = vpack.c.b16 %v3365, %v3364
      %v3375 = vpack.c.b16 %v3367, %v3366
      %3384 = vmatprep.subr.bf16.mxu0 0
      %3385 = vmatpush1.bf16.msra.mxu0 %v3375
      %3386 = vmatprep.subr.bf16.mxu0 0
      %3387 = vmatpush1.bf16.msra.mxu0 %v3374
      %3388 = vmatprep.subr.bf16.mxu0 0
      %3389 = vmatpush1.bf16.msra.mxu0 %v3373
      %3390 = vmatprep.subr.bf16.mxu0 0
      %3391 = vmatpush1.bf16.msra.mxu0 %v3372
      %3392 = vmatprep.subr.bf16.mxu0 0
      %3393 = vmatpush1.bf16.msra.mxu0 %v3371
      %3394 = vmatprep.subr.bf16.mxu0 0
      %3395 = vmatpush1.bf16.msra.mxu0 %v3370
      %3396 = vmatprep.subr.bf16.mxu0 0
      %3397 = vmatpush1.bf16.msra.mxu0 %v3369
      %3398 = vmatprep.subr.bf16.mxu0 0
      %3399 = vmatpush1.bf16.msra.mxu0 %v3368
      %3400 = vmatprep.subr.bf16.mxu0 0
      %3401 = vmatpush2.bf16.msra.mxu0 0
      %3402 = vmatprep.subr.bf16.mxu0 0
      %3403 = vmatpush2.bf16.msra.mxu0 0
      %3404 = vmatprep.subr.bf16.mxu0 0
      %3405 = vmatpush2.bf16.msra.mxu0 0
      %3406 = vmatprep.subr.bf16.mxu0 0
      %3407 = vmatpush2.bf16.msra.mxu0 0
      %3408 = vmatprep.subr.bf16.mxu0 0
      %3409 = vmatpush2.bf16.msra.mxu0 0
      %3410 = vmatprep.subr.bf16.mxu0 0
      %3411 = vmatpush2.bf16.msra.mxu0 0
      %3412 = vmatprep.subr.bf16.mxu0 0
      %3413 = vmatpush2.bf16.msra.mxu0 0
      %3414 = vmatprep.subr.bf16.mxu0 0
      %3415 = vmatpush2.bf16.msra.mxu0 0
      %3416 = vmatprep.mubr.bf16.mxu0 0
      %3417 = vmatmul.mubr.bf16.gmra.mxu0 %v3312
      %v3418 = vpop.f32.mrf.mxu0
      %v3419 = vadd.f32 %v3334, %v3418
      %v3420 = vpop.f32.mrf.mxu0
      %v3421 = vpop.f32.mrf.mxu0
      %v3422 = vpop.f32.mrf.mxu0
      %3423 = vdwg.mxu0
      %v3424 = vrot.slane %v3419, 4
      %v3425 = vadd.f32 %v3419, %v3424
      %v3426 = vrot.slane %v3425, 2
      %v3427 = vadd.f32 %v3425, %v3426
      %v3428 = vrot.slane %v3427, 1
      %v3429 = vadd.f32 %v3427, %v3428
      %v3430 = vrcp.pop 8.0
      %v3431 = vmul.f32 %v3429, %v3430
      %v3432 = vpack.c.bf16 %v3431, %v3431
      %v3433 = vld [vmem:[%s13] sm:$0xff]
      %v3434 = vld [vmem:[%s13 + $0x8] sm:$0xff]
      %v3435 = vld [vmem:[%s13 + $0x10] sm:$0xff]
      %v3436 = vld [vmem:[%s13 + $0x18] sm:$0xff]
      %v3437 = vld [vmem:[%s13 + $0x20] sm:$0xff]
      %v3438 = vld [vmem:[%s13 + $0x28] sm:$0xff]
      %v3439 = vld [vmem:[%s13 + $0x30] sm:$0xff]
      %v3440 = vld [vmem:[%s13 + $0x38] sm:$0xff]
      %v3441 = vld [vmem:[%s13 + $0x40] sm:$0xff]
      %v3442 = vld [vmem:[%s13 + $0x48] sm:$0xff]
      %v3443 = vld [vmem:[%s13 + $0x50] sm:$0xff]
      %v3444 = vld [vmem:[%s13 + $0x58] sm:$0xff]
      %v3445 = vld [vmem:[%s13 + $0x60] sm:$0xff]
      %v3446 = vld [vmem:[%s13 + $0x68] sm:$0xff]
      %v3447 = vld [vmem:[%s13 + $0x70] sm:$0xff]
      %v3448 = vld [vmem:[%s13 + $0x78] sm:$0xff]
      %v3449 = vld [vmem:[%s13 + $0x80] sm:$0xff]
      %v3450 = vld [vmem:[%s13 + $0x88] sm:$0xff]
      %v3451 = vld [vmem:[%s13 + $0x90] sm:$0xff]
      %v3452 = vld [vmem:[%s13 + $0x98] sm:$0xff]
      %v3453 = vld [vmem:[%s13 + $0xa0] sm:$0xff]
      %v3454 = vld [vmem:[%s13 + $0xa8] sm:$0xff]
      %v3455 = vld [vmem:[%s13 + $0xb0] sm:$0xff]
      %v3456 = vld [vmem:[%s13 + $0xb8] sm:$0xff]
      %v3457 = vld [vmem:[%s13 + $0xc0] sm:$0xff]
      %v3458 = vld [vmem:[%s13 + $0xc8] sm:$0xff]
      %v3459 = vld [vmem:[%s13 + $0xd0] sm:$0xff]
      %v3460 = vld [vmem:[%s13 + $0xd8] sm:$0xff]
      %v3461 = vld [vmem:[%s13 + $0xe0] sm:$0xff]
      %v3462 = vld [vmem:[%s13 + $0xe8] sm:$0xff]
      %v3463 = vld [vmem:[%s13 + $0xf0] sm:$0xff]
      %v3464 = vld [vmem:[%s13 + $0xf8] sm:$0xff]
      %v3465 = vld [vmem:[%s14] sm:$0xf]
      %v3498 = vunpack.c.l.b16 %v3433
      %v3499 = vunpack.c.h.b16 %v3433
      %v3500 = vunpack.c.l.b16 %v3434
      %v3501 = vunpack.c.h.b16 %v3434
      %v3502 = vunpack.c.l.b16 %v3435
      %v3503 = vunpack.c.h.b16 %v3435
      %v3504 = vunpack.c.l.b16 %v3436
      %v3505 = vunpack.c.h.b16 %v3436
      %v3506 = vunpack.c.l.b16 %v3437
      %v3507 = vunpack.c.h.b16 %v3437
      %v3508 = vunpack.c.l.b16 %v3438
      %v3509 = vunpack.c.h.b16 %v3438
      %v3510 = vunpack.c.l.b16 %v3439
      %v3511 = vunpack.c.h.b16 %v3439
      %v3512 = vunpack.c.l.b16 %v3440
      %v3513 = vunpack.c.h.b16 %v3440
      %v3514 = vunpack.c.l.b16 %v3441
      %v3515 = vunpack.c.h.b16 %v3441
      %v3516 = vunpack.c.l.b16 %v3442
      %v3517 = vunpack.c.h.b16 %v3442
      %v3518 = vunpack.c.l.b16 %v3443
      %v3519 = vunpack.c.h.b16 %v3443
      %v3520 = vunpack.c.l.b16 %v3444
      %v3521 = vunpack.c.h.b16 %v3444
      %v3522 = vunpack.c.l.b16 %v3445
      %v3523 = vunpack.c.h.b16 %v3445
      %v3524 = vunpack.c.l.b16 %v3446
      %v3525 = vunpack.c.h.b16 %v3446
      %v3526 = vunpack.c.l.b16 %v3447
      %v3527 = vunpack.c.h.b16 %v3447
      %v3528 = vunpack.c.l.b16 %v3448
      %v3529 = vunpack.c.h.b16 %v3448
      %v3530 = vunpack.c.l.b16 %v3449
      %v3531 = vunpack.c.h.b16 %v3449
      %v3532 = vunpack.c.l.b16 %v3450
      %v3533 = vunpack.c.h.b16 %v3450
      %v3534 = vunpack.c.l.b16 %v3451
      %v3535 = vunpack.c.h.b16 %v3451
      %v3536 = vunpack.c.l.b16 %v3452
      %v3537 = vunpack.c.h.b16 %v3452
      %v3538 = vunpack.c.l.b16 %v3453
      %v3539 = vunpack.c.h.b16 %v3453
      %v3540 = vunpack.c.l.b16 %v3454
      %v3541 = vunpack.c.h.b16 %v3454
      %v3542 = vunpack.c.l.b16 %v3455
      %v3543 = vunpack.c.h.b16 %v3455
      %v3544 = vunpack.c.l.b16 %v3456
      %v3545 = vunpack.c.h.b16 %v3456
      %v3546 = vunpack.c.l.b16 %v3457
      %v3547 = vunpack.c.h.b16 %v3457
      %v3548 = vunpack.c.l.b16 %v3458
      %v3549 = vunpack.c.h.b16 %v3458
      %v3550 = vunpack.c.l.b16 %v3459
      %v3551 = vunpack.c.h.b16 %v3459
      %v3552 = vunpack.c.l.b16 %v3460
      %v3553 = vunpack.c.h.b16 %v3460
      %v3554 = vunpack.c.l.b16 %v3461
      %v3555 = vunpack.c.h.b16 %v3461
      %v3556 = vunpack.c.l.b16 %v3462
      %v3557 = vunpack.c.h.b16 %v3462
      %v3558 = vunpack.c.l.b16 %v3463
      %v3559 = vunpack.c.h.b16 %v3463
      %v3560 = vunpack.c.l.b16 %v3464
      %v3561 = vunpack.c.h.b16 %v3464
      %v3562 = vpack.c.b16 %v3502, %v3498
      %v3563 = vpack.c.b16 %v3503, %v3499
      %v3564 = vpack.c.b16 %v3504, %v3500
      %v3565 = vpack.c.b16 %v3505, %v3501
      %v3566 = vpack.c.b16 %v3510, %v3506
      %v3567 = vpack.c.b16 %v3511, %v3507
      %v3568 = vpack.c.b16 %v3512, %v3508
      %v3569 = vpack.c.b16 %v3513, %v3509
      %v3570 = vpack.c.b16 %v3518, %v3514
      %v3571 = vpack.c.b16 %v3519, %v3515
      %v3572 = vpack.c.b16 %v3520, %v3516
      %v3573 = vpack.c.b16 %v3521, %v3517
      %v3574 = vpack.c.b16 %v3526, %v3522
      %v3575 = vpack.c.b16 %v3527, %v3523
      %v3576 = vpack.c.b16 %v3528, %v3524
      %v3577 = vpack.c.b16 %v3529, %v3525
      %v3578 = vpack.c.b16 %v3534, %v3530
      %v3579 = vpack.c.b16 %v3535, %v3531
      %v3580 = vpack.c.b16 %v3536, %v3532
      %v3581 = vpack.c.b16 %v3537, %v3533
      %v3582 = vpack.c.b16 %v3542, %v3538
      %v3583 = vpack.c.b16 %v3543, %v3539
      %v3584 = vpack.c.b16 %v3544, %v3540
      %v3585 = vpack.c.b16 %v3545, %v3541
      %v3586 = vpack.c.b16 %v3550, %v3546
      %v3587 = vpack.c.b16 %v3551, %v3547
      %v3588 = vpack.c.b16 %v3552, %v3548
      %v3589 = vpack.c.b16 %v3553, %v3549
      %v3590 = vpack.c.b16 %v3558, %v3554
      %v3591 = vpack.c.b16 %v3559, %v3555
      %v3592 = vpack.c.b16 %v3560, %v3556
      %v3593 = vpack.c.b16 %v3561, %v3557
      %v3627 = vlaneseq
      %v3628 = vshrl.u32 %v3627, 7
      %v3629 = vsub.s32 0, %v3628
      %v3630 = vrot.slane %v3465, %v3629
      %v3631 = vlaneseq
      %v3632 = vshrl.u32 %v3631, 7
      %v3633 = vsub.s32 1, %v3632
      %v3634 = vrot.slane %v3465, %v3633
      %v3635 = vlaneseq
      %v3636 = vshrl.u32 %v3635, 7
      %v3637 = vsub.s32 2, %v3636
      %v3638 = vrot.slane %v3465, %v3637
      %v3639 = vlaneseq
      %v3640 = vshrl.u32 %v3639, 7
      %v3641 = vsub.s32 3, %v3640
      %v3642 = vrot.slane %v3465, %v3641
      %3647 = vmatprep.subr.bf16.mxu0 %v3591
      %3648 = vmatpush1.bf16.msra.mxu0 %v3590
      %3649 = vmatprep.subr.bf16.mxu0 %v3587
      %3650 = vmatpush1.bf16.msra.mxu0 %v3586
      %3651 = vmatprep.subr.bf16.mxu0 %v3583
      %3652 = vmatpush1.bf16.msra.mxu0 %v3582
      %3653 = vmatprep.subr.bf16.mxu0 %v3579
      %3654 = vmatpush1.bf16.msra.mxu0 %v3578
      %3655 = vmatprep.subr.bf16.mxu0 %v3575
      %3656 = vmatpush1.bf16.msra.mxu0 %v3574
      %3657 = vmatprep.subr.bf16.mxu0 %v3571
      %3658 = vmatpush1.bf16.msra.mxu0 %v3570
      %3659 = vmatprep.subr.bf16.mxu0 %v3567
      %3660 = vmatpush1.bf16.msra.mxu0 %v3566
      %3661 = vmatprep.subr.bf16.mxu0 %v3563
      %3662 = vmatpush1.bf16.msra.mxu0 %v3562
      %3663 = vmatprep.subr.bf16.mxu0 0
      %3664 = vmatpush2.bf16.msra.mxu0 0
      %3665 = vmatprep.subr.bf16.mxu0 0
      %3666 = vmatpush2.bf16.msra.mxu0 0
      %3667 = vmatprep.subr.bf16.mxu0 0
      %3668 = vmatpush2.bf16.msra.mxu0 0
      %3669 = vmatprep.subr.bf16.mxu0 0
      %3670 = vmatpush2.bf16.msra.mxu0 0
      %3671 = vmatprep.subr.bf16.mxu0 0
      %3672 = vmatpush2.bf16.msra.mxu0 0
      %3673 = vmatprep.subr.bf16.mxu0 0
      %3674 = vmatpush2.bf16.msra.mxu0 0
      %3675 = vmatprep.subr.bf16.mxu0 0
      %3676 = vmatpush2.bf16.msra.mxu0 0
      %3677 = vmatprep.subr.bf16.mxu0 0
      %3678 = vmatpush2.bf16.msra.mxu0 0
      %3679 = vmatprep.mubr.bf16.mxu0 0
      %3680 = vmatmul.mubr.bf16.gmra.mxu0 %v3432
      %v3681 = vpop.f32.mrf.mxu0
      %v3682 = vadd.f32 %v3630, %v3681
      %v3683 = vpop.f32.mrf.mxu0
      %v3684 = vadd.f32 %v3634, %v3683
      %v3685 = vpop.f32.mrf.mxu0
      %v3686 = vpop.f32.mrf.mxu0
      %3687 = vdwg.mxu0
      %3688 = vmatprep.subr.bf16.mxu0 %v3593
      %3689 = vmatpush1.bf16.msra.mxu0 %v3592
      %3690 = vmatprep.subr.bf16.mxu0 %v3589
      %3691 = vmatpush1.bf16.msra.mxu0 %v3588
      %3692 = vmatprep.subr.bf16.mxu0 %v3585
      %3693 = vmatpush1.bf16.msra.mxu0 %v3584
      %3694 = vmatprep.subr.bf16.mxu0 %v3581
      %3695 = vmatpush1.bf16.msra.mxu0 %v3580
      %3696 = vmatprep.subr.bf16.mxu0 %v3577
      %3697 = vmatpush1.bf16.msra.mxu0 %v3576
      %3698 = vmatprep.subr.bf16.mxu0 %v3573
      %3699 = vmatpush1.bf16.msra.mxu0 %v3572
      %3700 = vmatprep.subr.bf16.mxu0 %v3569
      %3701 = vmatpush1.bf16.msra.mxu0 %v3568
      %3702 = vmatprep.subr.bf16.mxu0 %v3565
      %3703 = vmatpush1.bf16.msra.mxu0 %v3564
      %3704 = vmatprep.subr.bf16.mxu0 0
      %3705 = vmatpush2.bf16.msra.mxu0 0
      %3706 = vmatprep.subr.bf16.mxu0 0
      %3707 = vmatpush2.bf16.msra.mxu0 0
      %3708 = vmatprep.subr.bf16.mxu0 0
      %3709 = vmatpush2.bf16.msra.mxu0 0
      %3710 = vmatprep.subr.bf16.mxu0 0
      %3711 = vmatpush2.bf16.msra.mxu0 0
      %3712 = vmatprep.subr.bf16.mxu0 0
      %3713 = vmatpush2.bf16.msra.mxu0 0
      %3714 = vmatprep.subr.bf16.mxu0 0
      %3715 = vmatpush2.bf16.msra.mxu0 0
      %3716 = vmatprep.subr.bf16.mxu0 0
      %3717 = vmatpush2.bf16.msra.mxu0 0
      %3718 = vmatprep.subr.bf16.mxu0 0
      %3719 = vmatpush2.bf16.msra.mxu0 0
      %3720 = vmatprep.mubr.bf16.mxu0 0
      %3721 = vmatmul.mubr.bf16.gmra.mxu0 %v3432
      %v3722 = vpop.f32.mrf.mxu0
      %v3723 = vadd.f32 %v3638, %v3722
      %v3724 = vpop.f32.mrf.mxu0
      %v3725 = vadd.f32 %v3642, %v3724
      %v3726 = vpop.f32.mrf.mxu0
      %v3727 = vpop.f32.mrf.mxu0
      %3728 = vdwg.mxu0
      %v3729 = vmax.f32 %v3682, 0.0
      %v3730 = vmax.f32 %v3684, 0.0
      %v3731 = vmax.f32 %v3723, 0.0
      %v3732 = vmax.f32 %v3725, 0.0
      %v3733 = vpack.c.bf16 %v3729, %v3729
      %v3734 = vpack.c.bf16 %v3730, %v3730
      %v3735 = vpack.c.bf16 %v3731, %v3731
      %v3736 = vpack.c.bf16 %v3732, %v3732
      %v3737 = vld [vmem:[%s15] sm:$0xf]
      %v3738 = vld [vmem:[%s15 + $0x4] sm:$0xf]
      %v3739 = vld [vmem:[%s15 + $0x8] sm:$0xf]
      %v3740 = vld [vmem:[%s15 + $0xc] sm:$0xf]
      %v3741 = vld [vmem:[%s15 + $0x10] sm:$0xf]
      %v3742 = vld [vmem:[%s15 + $0x14] sm:$0xf]
      %v3743 = vld [vmem:[%s15 + $0x18] sm:$0xf]
      %v3744 = vld [vmem:[%s15 + $0x1c] sm:$0xf]
      %v3745 = vld [vmem:[%s15 + $0x20] sm:$0xf]
      %v3746 = vld [vmem:[%s15 + $0x24] sm:$0xf]
      %v3747 = vld [vmem:[%s15 + $0x28] sm:$0xf]
      %v3748 = vld [vmem:[%s15 + $0x2c] sm:$0xf]
      %v3749 = vld [vmem:[%s15 + $0x30] sm:$0xf]
      %v3750 = vld [vmem:[%s15 + $0x34] sm:$0xf]
      %v3751 = vld [vmem:[%s15 + $0x38] sm:$0xf]
      %v3752 = vld [vmem:[%s15 + $0x3c] sm:$0xf]
      %v3753 = vld [vmem:[%s15 + $0x40] sm:$0xf]
      %v3754 = vld [vmem:[%s15 + $0x44] sm:$0xf]
      %v3755 = vld [vmem:[%s15 + $0x48] sm:$0xf]
      %v3756 = vld [vmem:[%s15 + $0x4c] sm:$0xf]
      %v3757 = vld [vmem:[%s15 + $0x50] sm:$0xf]
      %v3758 = vld [vmem:[%s15 + $0x54] sm:$0xf]
      %v3759 = vld [vmem:[%s15 + $0x58] sm:$0xf]
      %v3760 = vld [vmem:[%s15 + $0x5c] sm:$0xf]
      %v3761 = vld [vmem:[%s15 + $0x60] sm:$0xf]
      %v3762 = vld [vmem:[%s15 + $0x64] sm:$0xf]
      %v3763 = vld [vmem:[%s15 + $0x68] sm:$0xf]
      %v3764 = vld [vmem:[%s15 + $0x6c] sm:$0xf]
      %v3765 = vld [vmem:[%s15 + $0x70] sm:$0xf]
      %v3766 = vld [vmem:[%s15 + $0x74] sm:$0xf]
      %v3767 = vld [vmem:[%s15 + $0x78] sm:$0xf]
      %v3768 = vld [vmem:[%s15 + $0x7c] sm:$0xf]
      %v3769 = vld [vmem:[%s15 + $0x80] sm:$0xf]
      %v3770 = vld [vmem:[%s15 + $0x84] sm:$0xf]
      %v3771 = vld [vmem:[%s15 + $0x88] sm:$0xf]
      %v3772 = vld [vmem:[%s15 + $0x8c] sm:$0xf]
      %v3773 = vld [vmem:[%s15 + $0x90] sm:$0xf]
      %v3774 = vld [vmem:[%s15 + $0x94] sm:$0xf]
      %v3775 = vld [vmem:[%s15 + $0x98] sm:$0xf]
      %v3776 = vld [vmem:[%s15 + $0x9c] sm:$0xf]
      %v3777 = vld [vmem:[%s15 + $0xa0] sm:$0xf]
      %v3778 = vld [vmem:[%s15 + $0xa4] sm:$0xf]
      %v3779 = vld [vmem:[%s15 + $0xa8] sm:$0xf]
      %v3780 = vld [vmem:[%s15 + $0xac] sm:$0xf]
      %v3781 = vld [vmem:[%s15 + $0xb0] sm:$0xf]
      %v3782 = vld [vmem:[%s15 + $0xb4] sm:$0xf]
      %v3783 = vld [vmem:[%s15 + $0xb8] sm:$0xf]
      %v3784 = vld [vmem:[%s15 + $0xbc] sm:$0xf]
      %v3785 = vld [vmem:[%s15 + $0xc0] sm:$0xf]
      %v3786 = vld [vmem:[%s15 + $0xc4] sm:$0xf]
      %v3787 = vld [vmem:[%s15 + $0xc8] sm:$0xf]
      %v3788 = vld [vmem:[%s15 + $0xcc] sm:$0xf]
      %v3789 = vld [vmem:[%s15 + $0xd0] sm:$0xf]
      %v3790 = vld [vmem:[%s15 + $0xd4] sm:$0xf]
      %v3791 = vld [vmem:[%s15 + $0xd8] sm:$0xf]
      %v3792 = vld [vmem:[%s15 + $0xdc] sm:$0xf]
      %v3793 = vld [vmem:[%s15 + $0xe0] sm:$0xf]
      %v3794 = vld [vmem:[%s15 + $0xe4] sm:$0xf]
      %v3795 = vld [vmem:[%s15 + $0xe8] sm:$0xf]
      %v3796 = vld [vmem:[%s15 + $0xec] sm:$0xf]
      %v3797 = vld [vmem:[%s15 + $0xf0] sm:$0xf]
      %v3798 = vld [vmem:[%s15 + $0xf4] sm:$0xf]
      %v3799 = vld [vmem:[%s15 + $0xf8] sm:$0xf]
      %v3800 = vld [vmem:[%s15 + $0xfc] sm:$0xf]
      %v3801 = vld [vmem:[%s16] sm:$0x1]
      %v3866 = vunpack.c.l.b16 %v3737
      %v3867 = vunpack.c.l.b16 %v3738
      %v3868 = vunpack.c.l.b16 %v3739
      %v3869 = vunpack.c.l.b16 %v3740
      %v3870 = vunpack.c.l.b16 %v3741
      %v3871 = vunpack.c.l.b16 %v3742
      %v3872 = vunpack.c.l.b16 %v3743
      %v3873 = vunpack.c.l.b16 %v3744
      %v3874 = vunpack.c.l.b16 %v3745
      %v3875 = vunpack.c.l.b16 %v3746
      %v3876 = vunpack.c.l.b16 %v3747
      %v3877 = vunpack.c.l.b16 %v3748
      %v3878 = vunpack.c.l.b16 %v3749
      %v3879 = vunpack.c.l.b16 %v3750
      %v3880 = vunpack.c.l.b16 %v3751
      %v3881 = vunpack.c.l.b16 %v3752
      %v3882 = vunpack.c.l.b16 %v3753
      %v3883 = vunpack.c.l.b16 %v3754
      %v3884 = vunpack.c.l.b16 %v3755
      %v3885 = vunpack.c.l.b16 %v3756
      %v3886 = vunpack.c.l.b16 %v3757
      %v3887 = vunpack.c.l.b16 %v3758
      %v3888 = vunpack.c.l.b16 %v3759
      %v3889 = vunpack.c.l.b16 %v3760
      %v3890 = vunpack.c.l.b16 %v3761
      %v3891 = vunpack.c.l.b16 %v3762
      %v3892 = vunpack.c.l.b16 %v3763
      %v3893 = vunpack.c.l.b16 %v3764
      %v3894 = vunpack.c.l.b16 %v3765
      %v3895 = vunpack.c.l.b16 %v3766
      %v3896 = vunpack.c.l.b16 %v3767
      %v3897 = vunpack.c.l.b16 %v3768
      %v3898 = vunpack.c.l.b16 %v3769
      %v3899 = vunpack.c.l.b16 %v3770
      %v3900 = vunpack.c.l.b16 %v3771
      %v3901 = vunpack.c.l.b16 %v3772
      %v3902 = vunpack.c.l.b16 %v3773
      %v3903 = vunpack.c.l.b16 %v3774
      %v3904 = vunpack.c.l.b16 %v3775
      %v3905 = vunpack.c.l.b16 %v3776
      %v3906 = vunpack.c.l.b16 %v3777
      %v3907 = vunpack.c.l.b16 %v3778
      %v3908 = vunpack.c.l.b16 %v3779
      %v3909 = vunpack.c.l.b16 %v3780
      %v3910 = vunpack.c.l.b16 %v3781
      %v3911 = vunpack.c.l.b16 %v3782
      %v3912 = vunpack.c.l.b16 %v3783
      %v3913 = vunpack.c.l.b16 %v3784
      %v3914 = vunpack.c.l.b16 %v3785
      %v3915 = vunpack.c.l.b16 %v3786
      %v3916 = vunpack.c.l.b16 %v3787
      %v3917 = vunpack.c.l.b16 %v3788
      %v3918 = vunpack.c.l.b16 %v3789
      %v3919 = vunpack.c.l.b16 %v3790
      %v3920 = vunpack.c.l.b16 %v3791
      %v3921 = vunpack.c.l.b16 %v3792
      %v3922 = vunpack.c.l.b16 %v3793
      %v3923 = vunpack.c.l.b16 %v3794
      %v3924 = vunpack.c.l.b16 %v3795
      %v3925 = vunpack.c.l.b16 %v3796
      %v3926 = vunpack.c.l.b16 %v3797
      %v3927 = vunpack.c.l.b16 %v3798
      %v3928 = vunpack.c.l.b16 %v3799
      %v3929 = vunpack.c.l.b16 %v3800
      %v3930 = vpack.c.b16 %v3867, %v3866
      %v3931 = vpack.c.b16 %v3869, %v3868
      %v3932 = vpack.c.b16 %v3871, %v3870
      %v3933 = vpack.c.b16 %v3873, %v3872
      %v3934 = vpack.c.b16 %v3875, %v3874
      %v3935 = vpack.c.b16 %v3877, %v3876
      %v3936 = vpack.c.b16 %v3879, %v3878
      %v3937 = vpack.c.b16 %v3881, %v3880
      %v3938 = vpack.c.b16 %v3883, %v3882
      %v3939 = vpack.c.b16 %v3885, %v3884
      %v3940 = vpack.c.b16 %v3887, %v3886
      %v3941 = vpack.c.b16 %v3889, %v3888
      %v3942 = vpack.c.b16 %v3891, %v3890
      %v3943 = vpack.c.b16 %v3893, %v3892
      %v3944 = vpack.c.b16 %v3895, %v3894
      %v3945 = vpack.c.b16 %v3897, %v3896
      %v3946 = vpack.c.b16 %v3899, %v3898
      %v3947 = vpack.c.b16 %v3901, %v3900
      %v3948 = vpack.c.b16 %v3903, %v3902
      %v3949 = vpack.c.b16 %v3905, %v3904
      %v3950 = vpack.c.b16 %v3907, %v3906
      %v3951 = vpack.c.b16 %v3909, %v3908
      %v3952 = vpack.c.b16 %v3911, %v3910
      %v3953 = vpack.c.b16 %v3913, %v3912
      %v3954 = vpack.c.b16 %v3915, %v3914
      %v3955 = vpack.c.b16 %v3917, %v3916
      %v3956 = vpack.c.b16 %v3919, %v3918
      %v3957 = vpack.c.b16 %v3921, %v3920
      %v3958 = vpack.c.b16 %v3923, %v3922
      %v3959 = vpack.c.b16 %v3925, %v3924
      %v3960 = vpack.c.b16 %v3927, %v3926
      %v3961 = vpack.c.b16 %v3929, %v3928
      %3994 = vmatprep.subr.bf16.mxu0 0
      %3995 = vmatpush1.bf16.msra.mxu0 %v3937
      %3996 = vmatprep.subr.bf16.mxu0 0
      %3997 = vmatpush1.bf16.msra.mxu0 %v3936
      %3998 = vmatprep.subr.bf16.mxu0 0
      %3999 = vmatpush1.bf16.msra.mxu0 %v3935
      %4000 = vmatprep.subr.bf16.mxu0 0
      %4001 = vmatpush1.bf16.msra.mxu0 %v3934
      %4002 = vmatprep.subr.bf16.mxu0 0
      %4003 = vmatpush1.bf16.msra.mxu0 %v3933
      %4004 = vmatprep.subr.bf16.mxu0 0
      %4005 = vmatpush1.bf16.msra.mxu0 %v3932
      %4006 = vmatprep.subr.bf16.mxu0 0
      %4007 = vmatpush1.bf16.msra.mxu0 %v3931
      %4008 = vmatprep.subr.bf16.mxu0 0
      %4009 = vmatpush1.bf16.msra.mxu0 %v3930
      %4010 = vmatprep.subr.bf16.mxu0 0
      %4011 = vmatpush2.bf16.msra.mxu0 %v3945
      %4012 = vmatprep.subr.bf16.mxu0 0
      %4013 = vmatpush2.bf16.msra.mxu0 %v3944
      %4014 = vmatprep.subr.bf16.mxu0 0
      %4015 = vmatpush2.bf16.msra.mxu0 %v3943
      %4016 = vmatprep.subr.bf16.mxu0 0
      %4017 = vmatpush2.bf16.msra.mxu0 %v3942
      %4018 = vmatprep.subr.bf16.mxu0 0
      %4019 = vmatpush2.bf16.msra.mxu0 %v3941
      %4020 = vmatprep.subr.bf16.mxu0 0
      %4021 = vmatpush2.bf16.msra.mxu0 %v3940
      %4022 = vmatprep.subr.bf16.mxu0 0
      %4023 = vmatpush2.bf16.msra.mxu0 %v3939
      %4024 = vmatprep.subr.bf16.mxu0 0
      %4025 = vmatpush2.bf16.msra.mxu0 %v3938
      %4026 = vmatprep.mubr.bf16.mxu0 %v3734
      %4027 = vmatmul.mubr.bf16.gmra.mxu0 %v3733
      %v4028 = vpop.f32.mrf.mxu0
      %v4029 = vadd.f32 %v3801, %v4028
      %v4030 = vpop.f32.mrf.mxu0
      %v4031 = vpop.f32.mrf.mxu0
      %v4032 = vpop.f32.mrf.mxu0
      %4033 = vdwg.mxu0
      %4034 = vmatprep.subr.bf16.mxu0 0
      %4035 = vmatpush1.bf16.msra.mxu0 %v3953
      %4036 = vmatprep.subr.bf16.mxu0 0
      %4037 = vmatpush1.bf16.msra.mxu0 %v3952
      %4038 = vmatprep.subr.bf16.mxu0 0
      %4039 = vmatpush1.bf16.msra.mxu0 %v3951
      %4040 = vmatprep.subr.bf16.mxu0 0
      %4041 = vmatpush1.bf16.msra.mxu0 %v3950
      %4042 = vmatprep.subr.bf16.mxu0 0
      %4043 = vmatpush1.bf16.msra.mxu0 %v3949
      %4044 = vmatprep.subr.bf16.mxu0 0
      %4045 = vmatpush1.bf16.msra.mxu0 %v3948
      %4046 = vmatprep.subr.bf16.mxu0 0
      %4047 = vmatpush1.bf16.msra.mxu0 %v3947
      %4048 = vmatprep.subr.bf16.mxu0 0
      %4049 = vmatpush1.bf16.msra.mxu0 %v3946
      %4050 = vmatprep.subr.bf16.mxu0 0
      %4051 = vmatpush2.bf16.msra.mxu0 %v3961
      %4052 = vmatprep.subr.bf16.mxu0 0
      %4053 = vmatpush2.bf16.msra.mxu0 %v3960
      %4054 = vmatprep.subr.bf16.mxu0 0
      %4055 = vmatpush2.bf16.msra.mxu0 %v3959
      %4056 = vmatprep.subr.bf16.mxu0 0
      %4057 = vmatpush2.bf16.msra.mxu0 %v3958
      %4058 = vmatprep.subr.bf16.mxu0 0
      %4059 = vmatpush2.bf16.msra.mxu0 %v3957
      %4060 = vmatprep.subr.bf16.mxu0 0
      %4061 = vmatpush2.bf16.msra.mxu0 %v3956
      %4062 = vmatprep.subr.bf16.mxu0 0
      %4063 = vmatpush2.bf16.msra.mxu0 %v3955
      %4064 = vmatprep.subr.bf16.mxu0 0
      %4065 = vmatpush2.bf16.msra.mxu0 %v3954
      %4066 = vmatprep.mubr.bf16.mxu0 %v3736
      %4067 = vmatmul.mubr.bf16.gmra.mxu0 %v3735
      %v4068 = vpop.f32.mrf.mxu0
      %v4069 = vadd.f32 %v4029, %v4068
      %v4070 = vpop.f32.mrf.mxu0
      %v4071 = vpop.f32.mrf.mxu0
      %v4072 = vpop.f32.mrf.mxu0
      %4073 = vdwg.mxu0
      %v4074 = vlaneseq
      %v4075 = vshrl.u32 %v4074, 7
      %v4076 = vsub.s32 0, %v4075
      %v4077 = vrot.slane %v4069, %v4076
      %4078 = vst [vmem:[%s546] sm:$0xff] %v4077
      %p4079 = scmp.lt.s32.totalorder %s28, 1
      %s4080 = scalar_select %p4079, %s28, 1
      %s4081 = smul.addr %s4080, 8
      %s4082 = scalar_lea.vmem %s17, %s4081
      // Predicated region
      $region89: #{vision_mamba3d_forward.1} parent=87 // pred_check
        %p4083 = pneg %p408
      $region90: #{vision_mamba3d_forward.1} parent=87 // pred_check_branch
        %4085 = sbr.rel (%p4083) target = $region92
      $region91: #{vision_mamba3d_forward.1} parent=87 // pred_region
        _
      $region92: #{vision_mamba3d_forward.1} parent=87 // pred_fallthru
        _
    $region88: #{vision_mamba3d_forward.1} parent=5 // pred_fallthru
      _
    %p4086 = scmp.le.s32.totalorder 2, %s23
    // Predicated region
    $region93: #{vision_mamba3d_forward.1} parent=5 // pred_check
      %p4087 = pneg %p4086
    $region94: #{vision_mamba3d_forward.1} parent=5 // pred_check_branch
      %4089 = sbr.rel (%p4087) target = $region96
    $region95: #{vision_mamba3d_forward.1} parent=5 // pred_region
      %s4090 = ssub.s32 %s23, 2
      // Predicated region
      $region97: #{vision_mamba3d_forward.1} parent=95 // pred_check
        %p4091 = pneg %p414
      $region98: #{vision_mamba3d_forward.1} parent=95 // pred_check_branch
        %4093 = sbr.rel (%p4091) target = $region100
      $region99: #{vision_mamba3d_forward.1} parent=95 // pred_region
        %p4094 = scmp.lt.s32.totalorder %s29, 1
        %s4095 = scalar_select %p4094, %s29, 1
        %s4096 = smul.addr %s4095, 8
        %s4097 = scalar_lea.vmem %s17, %s4096
      $region100: #{vision_mamba3d_forward.1} parent=95 // pred_fallthru
        _
    $region96: #{vision_mamba3d_forward.1} parent=5 // pred_fallthru
      _
  $region6: #{vision_mamba3d_forward.1} parent=0 // loop_footer
    %s27 = sadd.s32 1, %s23
  $region7: #{vision_mamba3d_forward.1} parent=0 // loop_footer_branch
    %22 = sbr.rel target = $region3
  $region8: #{vision_mamba3d_forward.1} parent=0 // loop_exit
    _

</llo_original>
